<compile_context>
chip_gen: v5e
topology: v5e:2x2
jax: 0.10.0
libtpu: 0.0.40
codegen_flags: <defaults>
</compile_context>

<pallas_src>
import functools
import math

import jax
import jax.numpy as jnp
from jax.experimental import pallas as pl
from jax.experimental.pallas import tpu as pltpu


def _self_attention_kernel(xq_ref, xkv_ref, wq_ref, bq_ref, wk_ref, bk_ref,
                           wv_ref, bv_ref, wo_ref, bo_ref, o_ref,
                           qh_scr, m_scr, l_scr, acc_scr,
                           *, n_heads, causal, compute_dtype):
    ki = pl.program_id(1)
    n_kv = pl.num_programs(1)
    blk_b, seq, d_embed = xq_ref.shape
    tk = xkv_ref.shape[1]
    d_heads = d_embed // n_heads
    blk_bh = blk_b * n_heads
    scale = 1.0 / math.sqrt(d_heads)

    def proj_silu(x2d, w_ref, b_ref):
        # bf16 operands on the MXU, f32 accumulation; bias add + SiLU in f32
        # (sigmoid lowers to the EUP slot).
        y = jnp.dot(x2d, w_ref[...], preferred_element_type=jnp.float32) + b_ref[...]
        return y * jax.nn.sigmoid(y)

    def split_heads(t, rows):
        # (blk_b*rows, d_embed) -> (blk_b*H, rows, d_heads); t is already bf16
        # so the relayout moves half the bytes of an f32 transpose.
        t = t.reshape(blk_b, rows, n_heads, d_heads).transpose(0, 2, 1, 3)
        return t.reshape(blk_bh, rows, d_heads)

    # ---- once per batch tile: project q (scale folded in), init softmax state.
    @pl.when(ki == 0)
    def _():
        xq = xq_ref[...].reshape(blk_b * seq, d_embed)
        q = (proj_silu(xq, wq_ref, bq_ref) * scale).astype(compute_dtype)
        qh_scr[...] = split_heads(q, seq)
        m_scr[...] = jnp.full_like(m_scr, -jnp.inf)
        l_scr[...] = jnp.zeros_like(l_scr)
        acc_scr[...] = jnp.zeros_like(acc_scr)

    # ---- per kv tile: project k/v for this tile only.
    xkv = xkv_ref[...].reshape(blk_b * tk, d_embed)
    kh = split_heads(proj_silu(xkv, wk_ref, bk_ref).astype(compute_dtype), tk)
    vh = split_heads(proj_silu(xkv, wv_ref, bv_ref).astype(compute_dtype), tk)

    # all (batch, head) score tiles in one batched MXU op: (blk_b*H, seq, tk), f32
    s = jnp.einsum('bqd,bkd->bqk', qh_scr[...], kh,
                   preferred_element_type=jnp.float32)

    if causal:
        # Large finite negative instead of -inf: only safe because scores stay
        # f32 (in bf16 -1e30 would overflow to -inf).  Keep score dtype f32.
        row = jax.lax.broadcasted_iota(jnp.int32, (seq, tk), 0)
        col = jax.lax.broadcasted_iota(jnp.int32, (seq, tk), 1) + ki * tk
        s = jnp.where((col > row)[None, :, :], -1e30, s)

    # ---- online softmax update (f32; one (blk_b*H, seq, tk) slab live).
    m_prev = m_scr[...]
    m_new = jnp.maximum(m_prev, jnp.max(s, axis=-1, keepdims=True))
    alpha = jnp.exp(m_prev - m_new)
    p = jnp.exp(s - m_new)
    l_scr[...] = alpha * l_scr[...] + jnp.sum(p, axis=-1, keepdims=True)
    acc_scr[...] = alpha * acc_scr[...] + jnp.einsum(
        'bqk,bkd->bqd', p.astype(compute_dtype), vh,
        preferred_element_type=jnp.float32)
    m_scr[...] = m_new

    # ---- last kv tile: normalize, merge heads, out_proj, store.
    @pl.when(ki == n_kv - 1)
    def _():
        # approx reciprocal (EUP): rows sum to 1 only to ~1e-3 relative, fine
        # for the relaxed tolerance used here.
        attn = acc_scr[...] * pl.reciprocal(l_scr[...], approx=True)
        attn = attn.astype(compute_dtype)          # bf16 before the merge relayout
        attn = attn.reshape(blk_b, n_heads, seq, d_heads).transpose(0, 2, 1, 3)
        attn = attn.reshape(blk_b * seq, d_embed)
        out = jnp.dot(attn, wo_ref[...],
                      preferred_element_type=jnp.float32) + bo_ref[...]
        o_ref[...] = out.reshape(blk_b, seq, d_embed).astype(o_ref.dtype)


def _estimate_vmem_bytes(block_b, seq, tk, d_embed, n_heads, out_bytes, w_bufs):
    """Rough per-step VMEM footprint for block_b sizing."""
    w = 4 * d_embed * d_embed * 2 * w_bufs            # bf16 weights
    bias = 4 * d_embed * 4 * w_bufs
    xq = 2 * block_b * seq * d_embed * 2              # double-buffered bf16
    xkv = 2 * block_b * tk * d_embed * 2
    out = 2 * block_b * seq * d_embed * out_bytes
    qh = block_b * seq * d_embed * 2                  # scratch: q heads (bf16)
    acc = block_b * seq * d_embed * 4                 # scratch: acc (f32)
    ml = 2 * block_b * n_heads * seq * 4              # scratch: m, l
    scores = 3 * block_b * n_heads * seq * tk * 4     # s / exp / p headroom
    proj = 3 * block_b * max(seq, tk) * d_embed * 4   # projection f32 temporaries
    return w + bias + xq + xkv + out + qh + acc + ml + scores + proj


def self_attention(x, wq, bq, wk, bk, wv, bv, wo, bo, *, n_heads,
                   causal_mask=False, block_b=None, block_kv=None,
                   compute_dtype=jnp.bfloat16):
    """x: (bs, seq, d_embed); w*: (d_embed, d_embed) PyTorch (out,in); b*: (d_embed,)."""
    bs, seq, d_embed = x.shape
    assert d_embed % n_heads == 0
    d_heads = d_embed // n_heads
    out_dtype = x.dtype
    out_bytes = jnp.dtype(out_dtype).itemsize

    # Per-generation VMEM budget (v5e/v6e: 128 MiB -> ~96 MiB; v7x: 64 -> 48 MiB).
    try:
        vmem_cap = int(getattr(pltpu.get_tpu_info(), "vmem_capacity_bytes",
                               128 * 1024 * 1024))
    except Exception:
        vmem_cap = 128 * 1024 * 1024
    vmem_limit = min(vmem_cap * 3 // 4, vmem_cap - 8 * 1024 * 1024)

    # KV tile: whole sequence for short seqs, else a <=512, 8-aligned divisor.
    if block_kv is None:
        tk = seq
        if seq > 512:
            for cand in range(512, 7, -8):
                if seq % cand == 0:
                    tk = cand
                    break
    else:
        tk = block_kv
    assert seq % tk == 0
    n_kv = seq // tk

    # Batch tile: largest divisor of bs fitting the VMEM budget, capped at
    # bs//2 so the "parallel" batch axis has >=2 steps (v7x has 2 TCs).
    # TODO(synk): for bs == 1 add a parallel query-tile axis so v7x's second
    # TensorCore is not idle.
    if block_b is None:
        cap = bs if bs < 2 else bs // 2
        block_b = 1
        for d in range(cap, 0, -1):
            if bs % d == 0 and _estimate_vmem_bytes(
                    d, seq, tk, d_embed, n_heads, out_bytes, 1) <= 0.8 * vmem_limit:
                block_b = d
                break
    assert bs % block_b == 0
    grid_b = bs // block_b

    # Wrapper-side prep: pre-transpose (out,in)->(in,out) and cast weights AND x
    # to the MXU dtype (no in-kernel transpose, half the weight/x DMA + VMEM);
    # biases stay f32.
    x_c = jnp.asarray(x).astype(compute_dtype)
    wq_t = jnp.asarray(wq).T.astype(compute_dtype)
    wk_t = jnp.asarray(wk).T.astype(compute_dtype)
    wv_t = jnp.asarray(wv).T.astype(compute_dtype)
    wo_t = jnp.asarray(wo).T.astype(compute_dtype)
    bq2 = jnp.asarray(bq).reshape(1, d_embed).astype(jnp.float32)
    bk2 = jnp.asarray(bk).reshape(1, d_embed).astype(jnp.float32)
    bv2 = jnp.asarray(bv).reshape(1, d_embed).astype(jnp.float32)
    bo2 = jnp.asarray(bo).reshape(1, d_embed).astype(jnp.float32)

    x_q_spec = pl.BlockSpec((block_b, seq, d_embed), lambda b, k: (b, 0, 0))
    x_kv_spec = pl.BlockSpec((block_b, tk, d_embed), lambda b, k: (b, k, 0))
    o_spec = pl.BlockSpec((block_b, seq, d_embed), lambda b, k: (b, 0, 0))

    scratch = [
        pltpu.VMEM((block_b * n_heads, seq, d_heads), compute_dtype),  # q heads
        pltpu.VMEM((block_b * n_heads, seq, 1), jnp.float32),          # m
        pltpu.VMEM((block_b * n_heads, seq, 1), jnp.float32),          # l
        pltpu.VMEM((block_b * n_heads, seq, d_heads), jnp.float32),    # acc
    ]

    kernel = functools.partial(_self_attention_kernel, n_heads=n_heads,
                               causal=causal_mask, compute_dtype=compute_dtype)

    def make_call(single_buffer_weights):
        if single_buffer_weights:
            # Weights/biases are grid-invariant -> one pipeline buffer is enough.
            w_spec = pl.BlockSpec((d_embed, d_embed), lambda b, k: (0, 0),
                                  pipeline_mode=pl.Buffered(1))
            b_spec = pl.BlockSpec((1, d_embed), lambda b, k: (0, 0),
                                  pipeline_mode=pl.Buffered(1))
        else:
            w_spec = pl.BlockSpec((d_embed, d_embed), lambda b, k: (0, 0))
            b_spec = pl.BlockSpec((1, d_embed), lambda b, k: (0, 0))
        return pl.pallas_call(
            kernel,
            out_shape=jax.ShapeDtypeStruct((bs, seq, d_embed), out_dtype),
            grid_spec=pltpu.PrefetchScalarGridSpec(
                num_scalar_prefetch=0,
                grid=(grid_b, n_kv),
                in_specs=[x_q_spec, x_kv_spec,
                          w_spec, b_spec,   # q
                          w_spec, b_spec,   # k
                          w_spec, b_spec,   # v
                          w_spec, b_spec],  # out_proj
                out_specs=o_spec,
                scratch_shapes=scratch),
            compiler_params=pltpu.CompilerParams(
                dimension_semantics=("parallel", "arbitrary"),
                vmem_limit_bytes=int(vmem_limit)))

    args = (x_c, x_c, wq_t, bq2, wk_t, bk2, wv_t, bv2, wo_t, bo2)
    try:
        return make_call(True)(*args)
    except Exception:
        # TODO(synk): drop this fallback once pl.Buffered(1) single-buffering is
        # confirmed on all deployed jax/Mosaic versions.
        return make_call(False)(*args)


def _silu(x):
    return x * jax.nn.sigmoid(x)


def _reference(x, wq, bq, wk, bk, wv, bv, wo, bo, *, n_heads, causal_mask=False):
    bs, seq, d_embed = x.shape
    d_heads = d_embed // n_heads
    q = _silu(x @ wq.T + bq)
    k = _silu(x @ wk.T + bk)
    v = _silu(x @ wv.T + bv)

    def split(t):  # (bs, seq, d) -> (bs, h, seq, dh)
        return t.reshape(bs, seq, n_heads, d_heads).transpose(0, 2, 1, 3)

    q, k, v = split(q), split(k), split(v)
    w = jnp.einsum("bhqd,bhkd->bhqk", q, k)
    if causal_mask:
        mask = jnp.triu(jnp.ones((seq, seq), bool), 1)
        w = jnp.where(mask, -jnp.inf, w)
    w = w / math.sqrt(d_heads)
    p = jax.nn.softmax(w, axis=-1)
    o = jnp.einsum("bhqk,bhkd->bhqd", p, v)
    o = o.transpose(0, 2, 1, 3).reshape(bs, seq, d_embed)
    return o @ wo.T + bo


if __name__ == "__main__":
    def run_case(bs, seq, d_embed, n_heads, causal, block_kv=None):
        key = jax.random.PRNGKey(0)
        ks = jax.random.split(key, 9)
        scale = 1.0 / math.sqrt(d_embed)
        x = jax.random.normal(ks[0], (bs, seq, d_embed), jnp.float32)

        def mk_w(k):
            return jax.random.uniform(k, (d_embed, d_embed), jnp.float32, -scale, scale)

        def mk_b(k):
            return jax.random.uniform(k, (d_embed,), jnp.float32, -scale, scale)

        wq, bq, wk, bk = mk_w(ks[1]), mk_b(ks[2]), mk_w(ks[3]), mk_b(ks[4])
        wv, bv, wo, bo = mk_w(ks[5]), mk_b(ks[6]), mk_w(ks[7]), mk_b(ks[8])

        out = jax.block_until_ready(self_attention(
            x, wq, bq, wk, bk, wv, bv, wo, bo, n_heads=n_heads,
            causal_mask=causal, block_kv=block_kv))
        ref = _reference(x, wq, bq, wk, bk, wv, bv, wo, bo,
                         n_heads=n_heads, causal_mask=causal)
        assert out.shape == (bs, seq, d_embed)
        # bf16 MXU inputs (f32 accumulation) -> compare against f32 reference
        # with correspondingly relaxed tolerance.
        assert jnp.allclose(out, ref, atol=2e-2, rtol=2e-2), (
            f"mismatch (bs={bs}, seq={seq}, causal={causal}, block_kv={block_kv})")

    # Small shapes consistent with the module: batch=2, seq=8, d_embed=32, heads=4.
    run_case(2, 8, 32, 4, causal=False)
    run_case(2, 8, 32, 4, causal=True)
    # Exercise the multi-KV-tile online-softmax path (2 kv tiles), still small.
    run_case(2, 16, 32, 4, causal=False, block_kv=8)
    run_case(2, 16, 32, 4, causal=True, block_kv=8)

    print("KERNEL_OK")
</pallas_src>

<mosaic_0001>
module attributes {stable_mosaic.version = 11 : i64} {
  func.func @_self_attention_kernel(%arg0: i32, %arg1: i32, %arg2: memref<1x8x32xbf16, #tpu.memory_space<vmem>>, %arg3: memref<1x8x32xbf16, #tpu.memory_space<vmem>>, %arg4: memref<32x32xbf16, #tpu.memory_space<vmem>>, %arg5: memref<1x32xf32, #tpu.memory_space<vmem>>, %arg6: memref<32x32xbf16, #tpu.memory_space<vmem>>, %arg7: memref<1x32xf32, #tpu.memory_space<vmem>>, %arg8: memref<32x32xbf16, #tpu.memory_space<vmem>>, %arg9: memref<1x32xf32, #tpu.memory_space<vmem>>, %arg10: memref<32x32xbf16, #tpu.memory_space<vmem>>, %arg11: memref<1x32xf32, #tpu.memory_space<vmem>>, %arg12: memref<1x8x32xf32, #tpu.memory_space<vmem>>, %arg13: memref<4x8x8xbf16, #tpu.memory_space<vmem>>, %arg14: memref<4x8x1xf32, #tpu.memory_space<vmem>>, %arg15: memref<4x8x1xf32, #tpu.memory_space<vmem>>, %arg16: memref<4x8x8xf32, #tpu.memory_space<vmem>>) attributes {dimension_semantics = [#tpu.dimension_semantics<parallel>, #tpu.dimension_semantics<arbitrary>], iteration_bounds = array<i64: 2, 1>, scalar_prefetch = 0 : i64, scratch_operands = 4 : i64, tpu.core_type = #tpu.core_type<tc>, window_params = [{transform_indices = @transform_0, window_bounds = array<i64: 1, 8, 32>}, {transform_indices = @transform_1, window_bounds = array<i64: 1, 8, 32>}, {pipeline_mode = #tpu.pipeline_mode<synchronous>, transform_indices = @transform_2, window_bounds = array<i64: 32, 32>}, {pipeline_mode = #tpu.pipeline_mode<synchronous>, transform_indices = @transform_3, window_bounds = array<i64: 1, 32>}, {pipeline_mode = #tpu.pipeline_mode<synchronous>, transform_indices = @transform_4, window_bounds = array<i64: 32, 32>}, {pipeline_mode = #tpu.pipeline_mode<synchronous>, transform_indices = @transform_5, window_bounds = array<i64: 1, 32>}, {pipeline_mode = #tpu.pipeline_mode<synchronous>, transform_indices = @transform_6, window_bounds = array<i64: 32, 32>}, {pipeline_mode = #tpu.pipeline_mode<synchronous>, transform_indices = @transform_7, window_bounds = array<i64: 1, 32>}, {pipeline_mode = #tpu.pipeline_mode<synchronous>, transform_indices = @transform_8, window_bounds = array<i64: 32, 32>}, {pipeline_mode = #tpu.pipeline_mode<synchronous>, transform_indices = @transform_9, window_bounds = array<i64: 1, 32>}, {transform_indices = @transform_10, window_bounds = array<i64: 1, 8, 32>}]} {
    %c0_i32 = arith.constant 0 : i32
    %0 = arith.cmpi eq, %arg1, %c0_i32 : i32
    %1 = arith.extui %0 : i1 to i32
    %c0_i32_0 = arith.constant 0 : i32
    %2 = arith.cmpi ne, %1, %c0_i32_0 : i32
    scf.if %2 {
      %c0_41 = arith.constant 0 : index
      %c0_42 = arith.constant 0 : index
      %c0_43 = arith.constant 0 : index
      %63 = vector.load %arg2[%c0_41, %c0_42, %c0_43] : memref<1x8x32xbf16, #tpu.memory_space<vmem>>, vector<1x8x32xbf16>
      %64 = vector.shape_cast %63 : vector<1x8x32xbf16> to vector<8x32xbf16>
      %c0_44 = arith.constant 0 : index
      %c0_45 = arith.constant 0 : index
      %65 = vector.load %arg4[%c0_44, %c0_45] : memref<32x32xbf16, #tpu.memory_space<vmem>>, vector<32x32xbf16>
      %cst_46 = arith.constant dense<0.000000e+00> : vector<8x32xf32>
      %66 = tpu.matmul %64, %65, %cst_46 {dimension_numbers = #tpu.dot_dimension_numbers<[1], [0], [0], [1], [0, 0, 1, 1], [], []>} : vector<8x32xbf16>, vector<32x32xbf16>, vector<8x32xf32> -> vector<8x32xf32>
      %c0_47 = arith.constant 0 : index
      %c0_48 = arith.constant 0 : index
      %67 = vector.load %arg5[%c0_47, %c0_48] : memref<1x32xf32, #tpu.memory_space<vmem>>, vector<1x32xf32>
      %68 = vector.broadcast %67 : vector<1x32xf32> to vector<8x32xf32>
      %69 = arith.addf %66, %68 : vector<8x32xf32>
      %70 = arith.negf %69 : vector<8x32xf32>
      %71 = math.exp %70 : vector<8x32xf32>
      %cst_49 = arith.constant 1.000000e+00 : f32
      %72 = vector.broadcast %cst_49 : f32 to vector<8x32xf32>
      %73 = arith.addf %72, %71 : vector<8x32xf32>
      %74 = arith.divf %72, %73 : vector<8x32xf32>
      %75 = arith.mulf %69, %74 : vector<8x32xf32>
      %cst_50 = arith.constant 0.353553385 : f32
      %76 = vector.broadcast %cst_50 : f32 to vector<8x32xf32>
      %77 = arith.mulf %75, %76 : vector<8x32xf32>
      %78 = arith.truncf %77 : vector<8x32xf32> to vector<8x32xbf16>
      %79 = vector.shape_cast %78 : vector<8x32xbf16> to vector<1x8x4x8xbf16>
      %80 = tpu.transpose %79, [0, 2, 1, 3] : vector<1x8x4x8xbf16> -> vector<1x4x8x8xbf16>
      %81 = vector.shape_cast %80 : vector<1x4x8x8xbf16> to vector<4x8x8xbf16>
      %c0_51 = arith.constant 0 : index
      %c0_52 = arith.constant 0 : index
      %c0_53 = arith.constant 0 : index
      %82 = vector.load %arg13[%c0_51, %c0_52, %c0_53] : memref<4x8x8xbf16, #tpu.memory_space<vmem>>, vector<4x8x8xbf16>
      tpu.vector_store %arg13[%c0_51, %c0_52, %c0_53], %81 {strides = array<i32>} : memref<4x8x8xbf16, #tpu.memory_space<vmem>>, vector<4x8x8xbf16>,
      %cst_54 = arith.constant 0xFF800000 : f32
      %83 = vector.broadcast %cst_54 : f32 to vector<4x8x1xf32>
      %c0_55 = arith.constant 0 : index
      %c0_56 = arith.constant 0 : index
      %c0_57 = arith.constant 0 : index
      %84 = vector.load %arg14[%c0_55, %c0_56, %c0_57] : memref<4x8x1xf32, #tpu.memory_space<vmem>>, vector<4x8x1xf32>
      tpu.vector_store %arg14[%c0_55, %c0_56, %c0_57], %83 {strides = array<i32>} : memref<4x8x1xf32, #tpu.memory_space<vmem>>, vector<4x8x1xf32>,
      %cst_58 = arith.constant 0.000000e+00 : f32
      %85 = vector.broadcast %cst_58 : f32 to vector<4x8x1xf32>
      %c0_59 = arith.constant 0 : index
      %c0_60 = arith.constant 0 : index
      %c0_61 = arith.constant 0 : index
      %86 = vector.load %arg15[%c0_59, %c0_60, %c0_61] : memref<4x8x1xf32, #tpu.memory_space<vmem>>, vector<4x8x1xf32>
      tpu.vector_store %arg15[%c0_59, %c0_60, %c0_61], %85 {strides = array<i32>} : memref<4x8x1xf32, #tpu.memory_space<vmem>>, vector<4x8x1xf32>,
      %cst_62 = arith.constant 0.000000e+00 : f32
      %87 = vector.broadcast %cst_62 : f32 to vector<4x8x8xf32>
      %c0_63 = arith.constant 0 : index
      %c0_64 = arith.constant 0 : index
      %c0_65 = arith.constant 0 : index
      %88 = vector.load %arg16[%c0_63, %c0_64, %c0_65] : memref<4x8x8xf32, #tpu.memory_space<vmem>>, vector<4x8x8xf32>
      tpu.vector_store %arg16[%c0_63, %c0_64, %c0_65], %87 {strides = array<i32>} : memref<4x8x8xf32, #tpu.memory_space<vmem>>, vector<4x8x8xf32>,
    } else {
    }
    %c0 = arith.constant 0 : index
    %c0_1 = arith.constant 0 : index
    %c0_2 = arith.constant 0 : index
    %3 = vector.load %arg3[%c0, %c0_1, %c0_2] : memref<1x8x32xbf16, #tpu.memory_space<vmem>>, vector<1x8x32xbf16>
    %4 = vector.shape_cast %3 : vector<1x8x32xbf16> to vector<8x32xbf16>
    %c0_3 = arith.constant 0 : index
    %c0_4 = arith.constant 0 : index
    %5 = vector.load %arg6[%c0_3, %c0_4] : memref<32x32xbf16, #tpu.memory_space<vmem>>, vector<32x32xbf16>
    %cst = arith.constant dense<0.000000e+00> : vector<8x32xf32>
    %6 = tpu.matmul %4, %5, %cst {dimension_numbers = #tpu.dot_dimension_numbers<[1], [0], [0], [1], [0, 0, 1, 1], [], []>} : vector<8x32xbf16>, vector<32x32xbf16>, vector<8x32xf32> -> vector<8x32xf32>
    %c0_5 = arith.constant 0 : index
    %c0_6 = arith.constant 0 : index
    %7 = vector.load %arg7[%c0_5, %c0_6] : memref<1x32xf32, #tpu.memory_space<vmem>>, vector<1x32xf32>
    %8 = vector.broadcast %7 : vector<1x32xf32> to vector<8x32xf32>
    %9 = arith.addf %6, %8 : vector<8x32xf32>
    %10 = arith.negf %9 : vector<8x32xf32>
    %11 = math.exp %10 : vector<8x32xf32>
    %cst_7 = arith.constant 1.000000e+00 : f32
    %12 = vector.broadcast %cst_7 : f32 to vector<8x32xf32>
    %13 = arith.addf %12, %11 : vector<8x32xf32>
    %14 = arith.divf %12, %13 : vector<8x32xf32>
    %15 = arith.mulf %9, %14 : vector<8x32xf32>
    %16 = arith.truncf %15 : vector<8x32xf32> to vector<8x32xbf16>
    %17 = vector.shape_cast %16 : vector<8x32xbf16> to vector<1x8x4x8xbf16>
    %18 = tpu.transpose %17, [0, 2, 1, 3] : vector<1x8x4x8xbf16> -> vector<1x4x8x8xbf16>
    %19 = vector.shape_cast %18 : vector<1x4x8x8xbf16> to vector<4x8x8xbf16>
    %c0_8 = arith.constant 0 : index
    %c0_9 = arith.constant 0 : index
    %20 = vector.load %arg8[%c0_8, %c0_9] : memref<32x32xbf16, #tpu.memory_space<vmem>>, vector<32x32xbf16>
    %cst_10 = arith.constant dense<0.000000e+00> : vector<8x32xf32>
    %21 = tpu.matmul %4, %20, %cst_10 {dimension_numbers = #tpu.dot_dimension_numbers<[1], [0], [0], [1], [0, 0, 1, 1], [], []>} : vector<8x32xbf16>, vector<32x32xbf16>, vector<8x32xf32> -> vector<8x32xf32>
    %c0_11 = arith.constant 0 : index
    %c0_12 = arith.constant 0 : index
    %22 = vector.load %arg9[%c0_11, %c0_12] : memref<1x32xf32, #tpu.memory_space<vmem>>, vector<1x32xf32>
    %23 = vector.broadcast %22 : vector<1x32xf32> to vector<8x32xf32>
    %24 = arith.addf %21, %23 : vector<8x32xf32>
    %25 = arith.negf %24 : vector<8x32xf32>
    %26 = math.exp %25 : vector<8x32xf32>
    %cst_13 = arith.constant 1.000000e+00 : f32
    %27 = vector.broadcast %cst_13 : f32 to vector<8x32xf32>
    %28 = arith.addf %27, %26 : vector<8x32xf32>
    %29 = arith.divf %27, %28 : vector<8x32xf32>
    %30 = arith.mulf %24, %29 : vector<8x32xf32>
    %31 = arith.truncf %30 : vector<8x32xf32> to vector<8x32xbf16>
    %32 = vector.shape_cast %31 : vector<8x32xbf16> to vector<1x8x4x8xbf16>
    %33 = tpu.transpose %32, [0, 2, 1, 3] : vector<1x8x4x8xbf16> -> vector<1x4x8x8xbf16>
    %34 = vector.shape_cast %33 : vector<1x4x8x8xbf16> to vector<4x8x8xbf16>
    %c0_14 = arith.constant 0 : index
    %c0_15 = arith.constant 0 : index
    %c0_16 = arith.constant 0 : index
    %35 = vector.load %arg13[%c0_14, %c0_15, %c0_16] : memref<4x8x8xbf16, #tpu.memory_space<vmem>>, vector<4x8x8xbf16>
    "tpu.trace_start"() <{level = 10 : i32, message = "bqd,bkd->bqk"}> : () -> ()
    %cst_17 = arith.constant dense<0.000000e+00> : vector<4x8x8xf32>
    %36 = tpu.matmul %35, %19, %cst_17 {dimension_numbers = #tpu.dot_dimension_numbers<[2], [2], [1], [1], [0, 0, 0, 1, 1, 1], [0], [0]>} : vector<4x8x8xbf16>, vector<4x8x8xbf16>, vector<4x8x8xf32> -> vector<4x8x8xf32>
    "tpu.trace_stop"() : () -> ()
    %c0_18 = arith.constant 0 : index
    %c0_19 = arith.constant 0 : index
    %c0_20 = arith.constant 0 : index
    %37 = vector.load %arg14[%c0_18, %c0_19, %c0_20] : memref<4x8x1xf32, #tpu.memory_space<vmem>>, vector<4x8x1xf32>
    %cst_21 = arith.constant dense<0xFF800000> : vector<4x8xf32>
    %38 = vector.multi_reduction <maximumf>, %36, %cst_21 [2] : vector<4x8x8xf32> to vector<4x8xf32>
    %39 = vector.shape_cast %38 : vector<4x8xf32> to vector<4x8x1xf32>
    %40 = arith.maximumf %37, %39 : vector<4x8x1xf32>
    %41 = arith.subf %37, %40 : vector<4x8x1xf32>
    %42 = math.exp %41 : vector<4x8x1xf32>
    %43 = vector.broadcast %40 : vector<4x8x1xf32> to vector<4x8x8xf32>
    %44 = arith.subf %36, %43 : vector<4x8x8xf32>
    %45 = math.exp %44 : vector<4x8x8xf32>
    %c0_22 = arith.constant 0 : index
    %c0_23 = arith.constant 0 : index
    %c0_24 = arith.constant 0 : index
    %46 = vector.load %arg15[%c0_22, %c0_23, %c0_24] : memref<4x8x1xf32, #tpu.memory_space<vmem>>, vector<4x8x1xf32>
    %47 = arith.mulf %42, %46 : vector<4x8x1xf32>
    %cst_25 = arith.constant dense<0.000000e+00> : vector<4x8xf32>
    %48 = vector.multi_reduction <add>, %45, %cst_25 [2] : vector<4x8x8xf32> to vector<4x8xf32>
    %49 = vector.shape_cast %48 : vector<4x8xf32> to vector<4x8x1xf32>
    %50 = arith.addf %47, %49 : vector<4x8x1xf32>
    %c0_26 = arith.constant 0 : index
    %c0_27 = arith.constant 0 : index
    %c0_28 = arith.constant 0 : index
    %51 = vector.load %arg15[%c0_26, %c0_27, %c0_28] : memref<4x8x1xf32, #tpu.memory_space<vmem>>, vector<4x8x1xf32>
    tpu.vector_store %arg15[%c0_26, %c0_27, %c0_28], %50 {strides = array<i32>} : memref<4x8x1xf32, #tpu.memory_space<vmem>>, vector<4x8x1xf32>,
    %c0_29 = arith.constant 0 : index
    %c0_30 = arith.constant 0 : index
    %c0_31 = arith.constant 0 : index
    %52 = vector.load %arg16[%c0_29, %c0_30, %c0_31] : memref<4x8x8xf32, #tpu.memory_space<vmem>>, vector<4x8x8xf32>
    %53 = vector.broadcast %42 : vector<4x8x1xf32> to vector<4x8x8xf32>
    %54 = arith.mulf %53, %52 : vector<4x8x8xf32>
    %55 = arith.truncf %45 : vector<4x8x8xf32> to vector<4x8x8xbf16>
    "tpu.trace_start"() <{level = 10 : i32, message = "bqk,bkd->bqd"}> : () -> ()
    %cst_32 = arith.constant dense<0.000000e+00> : vector<4x8x8xf32>
    %56 = tpu.matmul %55, %34, %cst_32 {dimension_numbers = #tpu.dot_dimension_numbers<[2], [1], [1], [2], [0, 0, 0, 1, 1, 2], [0], [0]>} : vector<4x8x8xbf16>, vector<4x8x8xbf16>, vector<4x8x8xf32> -> vector<4x8x8xf32>
    "tpu.trace_stop"() : () -> ()
    %57 = arith.addf %54, %56 : vector<4x8x8xf32>
    %c0_33 = arith.constant 0 : index
    %c0_34 = arith.constant 0 : index
    %c0_35 = arith.constant 0 : index
    %58 = vector.load %arg16[%c0_33, %c0_34, %c0_35] : memref<4x8x8xf32, #tpu.memory_space<vmem>>, vector<4x8x8xf32>
    tpu.vector_store %arg16[%c0_33, %c0_34, %c0_35], %57 {strides = array<i32>} : memref<4x8x8xf32, #tpu.memory_space<vmem>>, vector<4x8x8xf32>,
    %c0_36 = arith.constant 0 : index
    %c0_37 = arith.constant 0 : index
    %c0_38 = arith.constant 0 : index
    %59 = vector.load %arg14[%c0_36, %c0_37, %c0_38] : memref<4x8x1xf32, #tpu.memory_space<vmem>>, vector<4x8x1xf32>
    tpu.vector_store %arg14[%c0_36, %c0_37, %c0_38], %40 {strides = array<i32>} : memref<4x8x1xf32, #tpu.memory_space<vmem>>, vector<4x8x1xf32>,
    %c0_i32_39 = arith.constant 0 : i32
    %60 = arith.cmpi eq, %arg1, %c0_i32_39 : i32
    %61 = arith.extui %60 : i1 to i32
    %c0_i32_40 = arith.constant 0 : i32
    %62 = arith.cmpi ne, %61, %c0_i32_40 : i32
    scf.if %62 {
      %c0_41 = arith.constant 0 : index
      %c0_42 = arith.constant 0 : index
      %c0_43 = arith.constant 0 : index
      %63 = vector.load %arg16[%c0_41, %c0_42, %c0_43] : memref<4x8x8xf32, #tpu.memory_space<vmem>>, vector<4x8x8xf32>
      %c0_44 = arith.constant 0 : index
      %c0_45 = arith.constant 0 : index
      %c0_46 = arith.constant 0 : index
      %64 = vector.load %arg15[%c0_44, %c0_45, %c0_46] : memref<4x8x1xf32, #tpu.memory_space<vmem>>, vector<4x8x1xf32>
      %65 = tpu.reciprocal %64 {approx = true} : vector<4x8x1xf32> -> vector<4x8x1xf32>
      %66 = vector.broadcast %65 : vector<4x8x1xf32> to vector<4x8x8xf32>
      %67 = arith.mulf %63, %66 : vector<4x8x8xf32>
      %68 = arith.truncf %67 : vector<4x8x8xf32> to vector<4x8x8xbf16>
      %69 = vector.shape_cast %68 : vector<4x8x8xbf16> to vector<1x4x8x8xbf16>
      %70 = tpu.transpose %69, [0, 2, 1, 3] : vector<1x4x8x8xbf16> -> vector<1x8x4x8xbf16>
      %71 = vector.shape_cast %70 : vector<1x8x4x8xbf16> to vector<8x32xbf16>
      %c0_47 = arith.constant 0 : index
      %c0_48 = arith.constant 0 : index
      %72 = vector.load %arg10[%c0_47, %c0_48] : memref<32x32xbf16, #tpu.memory_space<vmem>>, vector<32x32xbf16>
      %cst_49 = arith.constant dense<0.000000e+00> : vector<8x32xf32>
      %73 = tpu.matmul %71, %72, %cst_49 {dimension_numbers = #tpu.dot_dimension_numbers<[1], [0], [0], [1], [0, 0, 1, 1], [], []>} : vector<8x32xbf16>, vector<32x32xbf16>, vector<8x32xf32> -> vector<8x32xf32>
      %c0_50 = arith.constant 0 : index
      %c0_51 = arith.constant 0 : index
      %74 = vector.load %arg11[%c0_50, %c0_51] : memref<1x32xf32, #tpu.memory_space<vmem>>, vector<1x32xf32>
      %75 = vector.broadcast %74 : vector<1x32xf32> to vector<8x32xf32>
      %76 = arith.addf %73, %75 : vector<8x32xf32>
      %77 = vector.shape_cast %76 : vector<8x32xf32> to vector<1x8x32xf32>
      %c0_52 = arith.constant 0 : index
      %c0_53 = arith.constant 0 : index
      %c0_54 = arith.constant 0 : index
      %78 = vector.load %arg12[%c0_52, %c0_53, %c0_54] : memref<1x8x32xf32, #tpu.memory_space<vmem>>, vector<1x8x32xf32>
      tpu.vector_store %arg12[%c0_52, %c0_53, %c0_54], %77 {strides = array<i32>} : memref<1x8x32xf32, #tpu.memory_space<vmem>>, vector<1x8x32xf32>,
    } else {
    }
    return
  }
  func.func @transform_0(%arg0: i32, %arg1: i32) -> (i32, i32, i32) {
    %c0_i32 = arith.constant 0 : i32
    %c0_i32_0 = arith.constant 0 : i32
    %c0_i32_1 = arith.constant 0 : i32
    return %arg0, %c0_i32, %c0_i32_0 : i32, i32, i32
  }
  func.func @transform_1(%arg0: i32, %arg1: i32) -> (i32, i32, i32) {
    %c0_i32 = arith.constant 0 : i32
    %c0_i32_0 = arith.constant 0 : i32
    return %arg0, %arg1, %c0_i32 : i32, i32, i32
  }
  func.func @transform_2(%arg0: i32, %arg1: i32) -> (i32, i32) {
    %c0_i32 = arith.constant 0 : i32
    %c0_i32_0 = arith.constant 0 : i32
    %c0_i32_1 = arith.constant 0 : i32
    return %c0_i32, %c0_i32_0 : i32, i32
  }
  func.func @transform_3(%arg0: i32, %arg1: i32) -> (i32, i32) {
    %c0_i32 = arith.constant 0 : i32
    %c0_i32_0 = arith.constant 0 : i32
    %c0_i32_1 = arith.constant 0 : i32
    return %c0_i32, %c0_i32_0 : i32, i32
  }
  func.func @transform_4(%arg0: i32, %arg1: i32) -> (i32, i32) {
    %c0_i32 = arith.constant 0 : i32
    %c0_i32_0 = arith.constant 0 : i32
    %c0_i32_1 = arith.constant 0 : i32
    return %c0_i32, %c0_i32_0 : i32, i32
  }
  func.func @transform_5(%arg0: i32, %arg1: i32) -> (i32, i32) {
    %c0_i32 = arith.constant 0 : i32
    %c0_i32_0 = arith.constant 0 : i32
    %c0_i32_1 = arith.constant 0 : i32
    return %c0_i32, %c0_i32_0 : i32, i32
  }
  func.func @transform_6(%arg0: i32, %arg1: i32) -> (i32, i32) {
    %c0_i32 = arith.constant 0 : i32
    %c0_i32_0 = arith.constant 0 : i32
    %c0_i32_1 = arith.constant 0 : i32
    return %c0_i32, %c0_i32_0 : i32, i32
  }
  func.func @transform_7(%arg0: i32, %arg1: i32) -> (i32, i32) {
    %c0_i32 = arith.constant 0 : i32
    %c0_i32_0 = arith.constant 0 : i32
    %c0_i32_1 = arith.constant 0 : i32
    return %c0_i32, %c0_i32_0 : i32, i32
  }
  func.func @transform_8(%arg0: i32, %arg1: i32) -> (i32, i32) {
    %c0_i32 = arith.constant 0 : i32
    %c0_i32_0 = arith.constant 0 : i32
    %c0_i32_1 = arith.constant 0 : i32
    return %c0_i32, %c0_i32_0 : i32, i32
  }
  func.func @transform_9(%arg0: i32, %arg1: i32) -> (i32, i32) {
    %c0_i32 = arith.constant 0 : i32
    %c0_i32_0 = arith.constant 0 : i32
    %c0_i32_1 = arith.constant 0 : i32
    return %c0_i32, %c0_i32_0 : i32, i32
  }
  func.func @transform_10(%arg0: i32, %arg1: i32) -> (i32, i32, i32) {
    %c0_i32 = arith.constant 0 : i32
    %c0_i32_0 = arith.constant 0 : i32
    %c0_i32_1 = arith.constant 0 : i32
    return %arg0, %c0_i32, %c0_i32_0 : i32, i32, i32
  }
}

module attributes {stable_mosaic.version = 11 : i64} {
  func.func @_self_attention_kernel(%arg0: i32, %arg1: i32, %arg2: memref<1x8x32xbf16, #tpu.memory_space<vmem>>, %arg3: memref<1x8x32xbf16, #tpu.memory_space<vmem>>, %arg4: memref<32x32xbf16, #tpu.memory_space<vmem>>, %arg5: memref<1x32xf32, #tpu.memory_space<vmem>>, %arg6: memref<32x32xbf16, #tpu.memory_space<vmem>>, %arg7: memref<1x32xf32, #tpu.memory_space<vmem>>, %arg8: memref<32x32xbf16, #tpu.memory_space<vmem>>, %arg9: memref<1x32xf32, #tpu.memory_space<vmem>>, %arg10: memref<32x32xbf16, #tpu.memory_space<vmem>>, %arg11: memref<1x32xf32, #tpu.memory_space<vmem>>, %arg12: memref<1x8x32xf32, #tpu.memory_space<vmem>>, %arg13: memref<4x8x8xbf16, #tpu.memory_space<vmem>>, %arg14: memref<4x8x1xf32, #tpu.memory_space<vmem>>, %arg15: memref<4x8x1xf32, #tpu.memory_space<vmem>>, %arg16: memref<4x8x8xf32, #tpu.memory_space<vmem>>) attributes {dimension_semantics = [#tpu.dimension_semantics<parallel>, #tpu.dimension_semantics<arbitrary>], iteration_bounds = array<i64: 2, 1>, scalar_prefetch = 0 : i64, scratch_operands = 4 : i64, tpu.core_type = #tpu.core_type<tc>, window_params = [{transform_indices = @transform_0, window_bounds = array<i64: 1, 8, 32>}, {transform_indices = @transform_1, window_bounds = array<i64: 1, 8, 32>}, {pipeline_mode = #tpu.pipeline_mode<synchronous>, transform_indices = @transform_2, window_bounds = array<i64: 32, 32>}, {pipeline_mode = #tpu.pipeline_mode<synchronous>, transform_indices = @transform_3, window_bounds = array<i64: 1, 32>}, {pipeline_mode = #tpu.pipeline_mode<synchronous>, transform_indices = @transform_4, window_bounds = array<i64: 32, 32>}, {pipeline_mode = #tpu.pipeline_mode<synchronous>, transform_indices = @transform_5, window_bounds = array<i64: 1, 32>}, {pipeline_mode = #tpu.pipeline_mode<synchronous>, transform_indices = @transform_6, window_bounds = array<i64: 32, 32>}, {pipeline_mode = #tpu.pipeline_mode<synchronous>, transform_indices = @transform_7, window_bounds = array<i64: 1, 32>}, {pipeline_mode = #tpu.pipeline_mode<synchronous>, transform_indices = @transform_8, window_bounds = array<i64: 32, 32>}, {pipeline_mode = #tpu.pipeline_mode<synchronous>, transform_indices = @transform_9, window_bounds = array<i64: 1, 32>}, {transform_indices = @transform_10, window_bounds = array<i64: 1, 8, 32>}]} {
    %c0_i32 = arith.constant 0 : i32
    %0 = arith.cmpi eq, %arg1, %c0_i32 : i32
    %1 = arith.extui %0 : i1 to i32
    %c0_i32_0 = arith.constant 0 : i32
    %2 = arith.cmpi ne, %1, %c0_i32_0 : i32
    scf.if %2 {
      %c0_41 = arith.constant 0 : index
      %c0_42 = arith.constant 0 : index
      %c0_43 = arith.constant 0 : index
      %63 = vector.load %arg2[%c0_41, %c0_42, %c0_43] : memref<1x8x32xbf16, #tpu.memory_space<vmem>>, vector<1x8x32xbf16>
      %64 = vector.shape_cast %63 : vector<1x8x32xbf16> to vector<8x32xbf16>
      %c0_44 = arith.constant 0 : index
      %c0_45 = arith.constant 0 : index
      %65 = vector.load %arg4[%c0_44, %c0_45] : memref<32x32xbf16, #tpu.memory_space<vmem>>, vector<32x32xbf16>
      %cst_46 = arith.constant dense<0.000000e+00> : vector<8x32xf32>
      %66 = tpu.matmul %64, %65, %cst_46 {dimension_numbers = #tpu.dot_dimension_numbers<[1], [0], [0], [1], [0, 0, 1, 1], [], []>} : vector<8x32xbf16>, vector<32x32xbf16>, vector<8x32xf32> -> vector<8x32xf32>
      %c0_47 = arith.constant 0 : index
      %c0_48 = arith.constant 0 : index
      %67 = vector.load %arg5[%c0_47, %c0_48] : memref<1x32xf32, #tpu.memory_space<vmem>>, vector<1x32xf32>
      %68 = vector.broadcast %67 : vector<1x32xf32> to vector<8x32xf32>
      %69 = arith.addf %66, %68 : vector<8x32xf32>
      %70 = arith.negf %69 : vector<8x32xf32>
      %71 = math.exp %70 : vector<8x32xf32>
      %cst_49 = arith.constant 1.000000e+00 : f32
      %72 = vector.broadcast %cst_49 : f32 to vector<8x32xf32>
      %73 = arith.addf %72, %71 : vector<8x32xf32>
      %74 = arith.divf %72, %73 : vector<8x32xf32>
      %75 = arith.mulf %69, %74 : vector<8x32xf32>
      %cst_50 = arith.constant 0.353553385 : f32
      %76 = vector.broadcast %cst_50 : f32 to vector<8x32xf32>
      %77 = arith.mulf %75, %76 : vector<8x32xf32>
      %78 = arith.truncf %77 : vector<8x32xf32> to vector<8x32xbf16>
      %79 = vector.shape_cast %78 : vector<8x32xbf16> to vector<1x8x4x8xbf16>
      %80 = tpu.transpose %79, [0, 2, 1, 3] : vector<1x8x4x8xbf16> -> vector<1x4x8x8xbf16>
      %81 = vector.shape_cast %80 : vector<1x4x8x8xbf16> to vector<4x8x8xbf16>
      %c0_51 = arith.constant 0 : index
      %c0_52 = arith.constant 0 : index
      %c0_53 = arith.constant 0 : index
      %82 = vector.load %arg13[%c0_51, %c0_52, %c0_53] : memref<4x8x8xbf16, #tpu.memory_space<vmem>>, vector<4x8x8xbf16>
      tpu.vector_store %arg13[%c0_51, %c0_52, %c0_53], %81 {strides = array<i32>} : memref<4x8x8xbf16, #tpu.memory_space<vmem>>, vector<4x8x8xbf16>,
      %cst_54 = arith.constant 0xFF800000 : f32
      %83 = vector.broadcast %cst_54 : f32 to vector<4x8x1xf32>
      %c0_55 = arith.constant 0 : index
      %c0_56 = arith.constant 0 : index
      %c0_57 = arith.constant 0 : index
      %84 = vector.load %arg14[%c0_55, %c0_56, %c0_57] : memref<4x8x1xf32, #tpu.memory_space<vmem>>, vector<4x8x1xf32>
      tpu.vector_store %arg14[%c0_55, %c0_56, %c0_57], %83 {strides = array<i32>} : memref<4x8x1xf32, #tpu.memory_space<vmem>>, vector<4x8x1xf32>,
      %cst_58 = arith.constant 0.000000e+00 : f32
      %85 = vector.broadcast %cst_58 : f32 to vector<4x8x1xf32>
      %c0_59 = arith.constant 0 : index
      %c0_60 = arith.constant 0 : index
      %c0_61 = arith.constant 0 : index
      %86 = vector.load %arg15[%c0_59, %c0_60, %c0_61] : memref<4x8x1xf32, #tpu.memory_space<vmem>>, vector<4x8x1xf32>
      tpu.vector_store %arg15[%c0_59, %c0_60, %c0_61], %85 {strides = array<i32>} : memref<4x8x1xf32, #tpu.memory_space<vmem>>, vector<4x8x1xf32>,
      %cst_62 = arith.constant 0.000000e+00 : f32
      %87 = vector.broadcast %cst_62 : f32 to vector<4x8x8xf32>
      %c0_63 = arith.constant 0 : index
      %c0_64 = arith.constant 0 : index
      %c0_65 = arith.constant 0 : index
      %88 = vector.load %arg16[%c0_63, %c0_64, %c0_65] : memref<4x8x8xf32, #tpu.memory_space<vmem>>, vector<4x8x8xf32>
      tpu.vector_store %arg16[%c0_63, %c0_64, %c0_65], %87 {strides = array<i32>} : memref<4x8x8xf32, #tpu.memory_space<vmem>>, vector<4x8x8xf32>,
    } else {
    }
    %c0 = arith.constant 0 : index
    %c0_1 = arith.constant 0 : index
    %c0_2 = arith.constant 0 : index
    %3 = vector.load %arg3[%c0, %c0_1, %c0_2] : memref<1x8x32xbf16, #tpu.memory_space<vmem>>, vector<1x8x32xbf16>
    %4 = vector.shape_cast %3 : vector<1x8x32xbf16> to vector<8x32xbf16>
    %c0_3 = arith.constant 0 : index
    %c0_4 = arith.constant 0 : index
    %5 = vector.load %arg6[%c0_3, %c0_4] : memref<32x32xbf16, #tpu.memory_space<vmem>>, vector<32x32xbf16>
    %cst = arith.constant dense<0.000000e+00> : vector<8x32xf32>
    %6 = tpu.matmul %4, %5, %cst {dimension_numbers = #tpu.dot_dimension_numbers<[1], [0], [0], [1], [0, 0, 1, 1], [], []>} : vector<8x32xbf16>, vector<32x32xbf16>, vector<8x32xf32> -> vector<8x32xf32>
    %c0_5 = arith.constant 0 : index
    %c0_6 = arith.constant 0 : index
    %7 = vector.load %arg7[%c0_5, %c0_6] : memref<1x32xf32, #tpu.memory_space<vmem>>, vector<1x32xf32>
    %8 = vector.broadcast %7 : vector<1x32xf32> to vector<8x32xf32>
    %9 = arith.addf %6, %8 : vector<8x32xf32>
    %10 = arith.negf %9 : vector<8x32xf32>
    %11 = math.exp %10 : vector<8x32xf32>
    %cst_7 = arith.constant 1.000000e+00 : f32
    %12 = vector.broadcast %cst_7 : f32 to vector<8x32xf32>
    %13 = arith.addf %12, %11 : vector<8x32xf32>
    %14 = arith.divf %12, %13 : vector<8x32xf32>
    %15 = arith.mulf %9, %14 : vector<8x32xf32>
    %16 = arith.truncf %15 : vector<8x32xf32> to vector<8x32xbf16>
    %17 = vector.shape_cast %16 : vector<8x32xbf16> to vector<1x8x4x8xbf16>
    %18 = tpu.transpose %17, [0, 2, 1, 3] : vector<1x8x4x8xbf16> -> vector<1x4x8x8xbf16>
    %19 = vector.shape_cast %18 : vector<1x4x8x8xbf16> to vector<4x8x8xbf16>
    %c0_8 = arith.constant 0 : index
    %c0_9 = arith.constant 0 : index
    %20 = vector.load %arg8[%c0_8, %c0_9] : memref<32x32xbf16, #tpu.memory_space<vmem>>, vector<32x32xbf16>
    %cst_10 = arith.constant dense<0.000000e+00> : vector<8x32xf32>
    %21 = tpu.matmul %4, %20, %cst_10 {dimension_numbers = #tpu.dot_dimension_numbers<[1], [0], [0], [1], [0, 0, 1, 1], [], []>} : vector<8x32xbf16>, vector<32x32xbf16>, vector<8x32xf32> -> vector<8x32xf32>
    %c0_11 = arith.constant 0 : index
    %c0_12 = arith.constant 0 : index
    %22 = vector.load %arg9[%c0_11, %c0_12] : memref<1x32xf32, #tpu.memory_space<vmem>>, vector<1x32xf32>
    %23 = vector.broadcast %22 : vector<1x32xf32> to vector<8x32xf32>
    %24 = arith.addf %21, %23 : vector<8x32xf32>
    %25 = arith.negf %24 : vector<8x32xf32>
    %26 = math.exp %25 : vector<8x32xf32>
    %cst_13 = arith.constant 1.000000e+00 : f32
    %27 = vector.broadcast %cst_13 : f32 to vector<8x32xf32>
    %28 = arith.addf %27, %26 : vector<8x32xf32>
    %29 = arith.divf %27, %28 : vector<8x32xf32>
    %30 = arith.mulf %24, %29 : vector<8x32xf32>
    %31 = arith.truncf %30 : vector<8x32xf32> to vector<8x32xbf16>
    %32 = vector.shape_cast %31 : vector<8x32xbf16> to vector<1x8x4x8xbf16>
    %33 = tpu.transpose %32, [0, 2, 1, 3] : vector<1x8x4x8xbf16> -> vector<1x4x8x8xbf16>
    %34 = vector.shape_cast %33 : vector<1x4x8x8xbf16> to vector<4x8x8xbf16>
    %c0_14 = arith.constant 0 : index
    %c0_15 = arith.constant 0 : index
    %c0_16 = arith.constant 0 : index
    %35 = vector.load %arg13[%c0_14, %c0_15, %c0_16] : memref<4x8x8xbf16, #tpu.memory_space<vmem>>, vector<4x8x8xbf16>
    "tpu.trace_start"() <{level = 10 : i32, message = "bqd,bkd->bqk"}> : () -> ()
    %cst_17 = arith.constant dense<0.000000e+00> : vector<4x8x8xf32>
    %36 = tpu.matmul %35, %19, %cst_17 {dimension_numbers = #tpu.dot_dimension_numbers<[2], [2], [1], [1], [0, 0, 0, 1, 1, 1], [0], [0]>} : vector<4x8x8xbf16>, vector<4x8x8xbf16>, vector<4x8x8xf32> -> vector<4x8x8xf32>
    "tpu.trace_stop"() : () -> ()
    %c0_18 = arith.constant 0 : index
    %c0_19 = arith.constant 0 : index
    %c0_20 = arith.constant 0 : index
    %37 = vector.load %arg14[%c0_18, %c0_19, %c0_20] : memref<4x8x1xf32, #tpu.memory_space<vmem>>, vector<4x8x1xf32>
    %cst_21 = arith.constant dense<0xFF800000> : vector<4x8xf32>
    %38 = vector.multi_reduction <maximumf>, %36, %cst_21 [2] : vector<4x8x8xf32> to vector<4x8xf32>
    %39 = vector.shape_cast %38 : vector<4x8xf32> to vector<4x8x1xf32>
    %40 = arith.maximumf %37, %39 : vector<4x8x1xf32>
    %41 = arith.subf %37, %40 : vector<4x8x1xf32>
    %42 = math.exp %41 : vector<4x8x1xf32>
    %43 = vector.broadcast %40 : vector<4x8x1xf32> to vector<4x8x8xf32>
    %44 = arith.subf %36, %43 : vector<4x8x8xf32>
    %45 = math.exp %44 : vector<4x8x8xf32>
    %c0_22 = arith.constant 0 : index
    %c0_23 = arith.constant 0 : index
    %c0_24 = arith.constant 0 : index
    %46 = vector.load %arg15[%c0_22, %c0_23, %c0_24] : memref<4x8x1xf32, #tpu.memory_space<vmem>>, vector<4x8x1xf32>
    %47 = arith.mulf %42, %46 : vector<4x8x1xf32>
    %cst_25 = arith.constant dense<0.000000e+00> : vector<4x8xf32>
    %48 = vector.multi_reduction <add>, %45, %cst_25 [2] : vector<4x8x8xf32> to vector<4x8xf32>
    %49 = vector.shape_cast %48 : vector<4x8xf32> to vector<4x8x1xf32>
    %50 = arith.addf %47, %49 : vector<4x8x1xf32>
    %c0_26 = arith.constant 0 : index
    %c0_27 = arith.constant 0 : index
    %c0_28 = arith.constant 0 : index
    %51 = vector.load %arg15[%c0_26, %c0_27, %c0_28] : memref<4x8x1xf32, #tpu.memory_space<vmem>>, vector<4x8x1xf32>
    tpu.vector_store %arg15[%c0_26, %c0_27, %c0_28], %50 {strides = array<i32>} : memref<4x8x1xf32, #tpu.memory_space<vmem>>, vector<4x8x1xf32>,
    %c0_29 = arith.constant 0 : index
    %c0_30 = arith.constant 0 : index
    %c0_31 = arith.constant 0 : index
    %52 = vector.load %arg16[%c0_29, %c0_30, %c0_31] : memref<4x8x8xf32, #tpu.memory_space<vmem>>, vector<4x8x8xf32>
    %53 = vector.broadcast %42 : vector<4x8x1xf32> to vector<4x8x8xf32>
    %54 = arith.mulf %53, %52 : vector<4x8x8xf32>
    %55 = arith.truncf %45 : vector<4x8x8xf32> to vector<4x8x8xbf16>
    "tpu.trace_start"() <{level = 10 : i32, message = "bqk,bkd->bqd"}> : () -> ()
    %cst_32 = arith.constant dense<0.000000e+00> : vector<4x8x8xf32>
    %56 = tpu.matmul %55, %34, %cst_32 {dimension_numbers = #tpu.dot_dimension_numbers<[2], [1], [1], [2], [0, 0, 0, 1, 1, 2], [0], [0]>} : vector<4x8x8xbf16>, vector<4x8x8xbf16>, vector<4x8x8xf32> -> vector<4x8x8xf32>
    "tpu.trace_stop"() : () -> ()
    %57 = arith.addf %54, %56 : vector<4x8x8xf32>
    %c0_33 = arith.constant 0 : index
    %c0_34 = arith.constant 0 : index
    %c0_35 = arith.constant 0 : index
    %58 = vector.load %arg16[%c0_33, %c0_34, %c0_35] : memref<4x8x8xf32, #tpu.memory_space<vmem>>, vector<4x8x8xf32>
    tpu.vector_store %arg16[%c0_33, %c0_34, %c0_35], %57 {strides = array<i32>} : memref<4x8x8xf32, #tpu.memory_space<vmem>>, vector<4x8x8xf32>,
    %c0_36 = arith.constant 0 : index
    %c0_37 = arith.constant 0 : index
    %c0_38 = arith.constant 0 : index
    %59 = vector.load %arg14[%c0_36, %c0_37, %c0_38] : memref<4x8x1xf32, #tpu.memory_space<vmem>>, vector<4x8x1xf32>
    tpu.vector_store %arg14[%c0_36, %c0_37, %c0_38], %40 {strides = array<i32>} : memref<4x8x1xf32, #tpu.memory_space<vmem>>, vector<4x8x1xf32>,
    %c0_i32_39 = arith.constant 0 : i32
    %60 = arith.cmpi eq, %arg1, %c0_i32_39 : i32
    %61 = arith.extui %60 : i1 to i32
    %c0_i32_40 = arith.constant 0 : i32
    %62 = arith.cmpi ne, %61, %c0_i32_40 : i32
    scf.if %62 {
      %c0_41 = arith.constant 0 : index
      %c0_42 = arith.constant 0 : index
      %c0_43 = arith.constant 0 : index
      %63 = vector.load %arg16[%c0_41, %c0_42, %c0_43] : memref<4x8x8xf32, #tpu.memory_space<vmem>>, vector<4x8x8xf32>
      %c0_44 = arith.constant 0 : index
      %c0_45 = arith.constant 0 : index
      %c0_46 = arith.constant 0 : index
      %64 = vector.load %arg15[%c0_44, %c0_45, %c0_46] : memref<4x8x1xf32, #tpu.memory_space<vmem>>, vector<4x8x1xf32>
      %65 = tpu.reciprocal %64 {approx = true} : vector<4x8x1xf32> -> vector<4x8x1xf32>
      %66 = vector.broadcast %65 : vector<4x8x1xf32> to vector<4x8x8xf32>
      %67 = arith.mulf %63, %66 : vector<4x8x8xf32>
      %68 = arith.truncf %67 : vector<4x8x8xf32> to vector<4x8x8xbf16>
      %69 = vector.shape_cast %68 : vector<4x8x8xbf16> to vector<1x4x8x8xbf16>
      %70 = tpu.transpose %69, [0, 2, 1, 3] : vector<1x4x8x8xbf16> -> vector<1x8x4x8xbf16>
      %71 = vector.shape_cast %70 : vector<1x8x4x8xbf16> to vector<8x32xbf16>
      %c0_47 = arith.constant 0 : index
      %c0_48 = arith.constant 0 : index
      %72 = vector.load %arg10[%c0_47, %c0_48] : memref<32x32xbf16, #tpu.memory_space<vmem>>, vector<32x32xbf16>
      %cst_49 = arith.constant dense<0.000000e+00> : vector<8x32xf32>
      %73 = tpu.matmul %71, %72, %cst_49 {dimension_numbers = #tpu.dot_dimension_numbers<[1], [0], [0], [1], [0, 0, 1, 1], [], []>} : vector<8x32xbf16>, vector<32x32xbf16>, vector<8x32xf32> -> vector<8x32xf32>
      %c0_50 = arith.constant 0 : index
      %c0_51 = arith.constant 0 : index
      %74 = vector.load %arg11[%c0_50, %c0_51] : memref<1x32xf32, #tpu.memory_space<vmem>>, vector<1x32xf32>
      %75 = vector.broadcast %74 : vector<1x32xf32> to vector<8x32xf32>
      %76 = arith.addf %73, %75 : vector<8x32xf32>
      %77 = vector.shape_cast %76 : vector<8x32xf32> to vector<1x8x32xf32>
      %c0_52 = arith.constant 0 : index
      %c0_53 = arith.constant 0 : index
      %c0_54 = arith.constant 0 : index
      %78 = vector.load %arg12[%c0_52, %c0_53, %c0_54] : memref<1x8x32xf32, #tpu.memory_space<vmem>>, vector<1x8x32xf32>
      tpu.vector_store %arg12[%c0_52, %c0_53, %c0_54], %77 {strides = array<i32>} : memref<1x8x32xf32, #tpu.memory_space<vmem>>, vector<1x8x32xf32>,
    } else {
    }
    return
  }
  func.func @transform_0(%arg0: i32, %arg1: i32) -> (i32, i32, i32) {
    %c0_i32 = arith.constant 0 : i32
    %c0_i32_0 = arith.constant 0 : i32
    %c0_i32_1 = arith.constant 0 : i32
    return %arg0, %c0_i32, %c0_i32_0 : i32, i32, i32
  }
  func.func @transform_1(%arg0: i32, %arg1: i32) -> (i32, i32, i32) {
    %c0_i32 = arith.constant 0 : i32
    %c0_i32_0 = arith.constant 0 : i32
    return %arg0, %arg1, %c0_i32 : i32, i32, i32
  }
  func.func @transform_2(%arg0: i32, %arg1: i32) -> (i32, i32) {
    %c0_i32 = arith.constant 0 : i32
    %c0_i32_0 = arith.constant 0 : i32
    %c0_i32_1 = arith.constant 0 : i32
    return %c0_i32, %c0_i32_0 : i32, i32
  }
  func.func @transform_3(%arg0: i32, %arg1: i32) -> (i32, i32) {
    %c0_i32 = arith.constant 0 : i32
    %c0_i32_0 = arith.constant 0 : i32
    %c0_i32_1 = arith.constant 0 : i32
    return %c0_i32, %c0_i32_0 : i32, i32
  }
  func.func @transform_4(%arg0: i32, %arg1: i32) -> (i32, i32) {
    %c0_i32 = arith.constant 0 : i32
    %c0_i32_0 = arith.constant 0 : i32
    %c0_i32_1 = arith.constant 0 : i32
    return %c0_i32, %c0_i32_0 : i32, i32
  }
  func.func @transform_5(%arg0: i32, %arg1: i32) -> (i32, i32) {
    %c0_i32 = arith.constant 0 : i32
    %c0_i32_0 = arith.constant 0 : i32
    %c0_i32_1 = arith.constant 0 : i32
    return %c0_i32, %c0_i32_0 : i32, i32
  }
  func.func @transform_6(%arg0: i32, %arg1: i32) -> (i32, i32) {
    %c0_i32 = arith.constant 0 : i32
    %c0_i32_0 = arith.constant 0 : i32
    %c0_i32_1 = arith.constant 0 : i32
    return %c0_i32, %c0_i32_0 : i32, i32
  }
  func.func @transform_7(%arg0: i32, %arg1: i32) -> (i32, i32) {
    %c0_i32 = arith.constant 0 : i32
    %c0_i32_0 = arith.constant 0 : i32
    %c0_i32_1 = arith.constant 0 : i32
    return %c0_i32, %c0_i32_0 : i32, i32
  }
  func.func @transform_8(%arg0: i32, %arg1: i32) -> (i32, i32) {
    %c0_i32 = arith.constant 0 : i32
    %c0_i32_0 = arith.constant 0 : i32
    %c0_i32_1 = arith.constant 0 : i32
    return %c0_i32, %c0_i32_0 : i32, i32
  }
  func.func @transform_9(%arg0: i32, %arg1: i32) -> (i32, i32) {
    %c0_i32 = arith.constant 0 : i32
    %c0_i32_0 = arith.constant 0 : i32
    %c0_i32_1 = arith.constant 0 : i32
    return %c0_i32, %c0_i32_0 : i32, i32
  }
  func.func @transform_10(%arg0: i32, %arg1: i32) -> (i32, i32, i32) {
    %c0_i32 = arith.constant 0 : i32
    %c0_i32_0 = arith.constant 0 : i32
    %c0_i32_1 = arith.constant 0 : i32
    return %arg0, %c0_i32, %c0_i32_0 : i32, i32, i32
  }
}

</mosaic_0001>

<llo_original>
// kernel: tpu_custom_call.1
$region0: #{tpu_custom_call.1}
  #allocation0 [shape = 'u32[]', space=smem, size = 0x4, offset = 0x4, fixed_abs, tag = 'smem constant byte address 0x4 - core index']
  #allocation1 [shape = 'u32[72,128]{1,0:T(1,128)}', space=vmem, size = 0x9000, scoped, tag = 'internal scratch']
  #allocation2 [shape = 'bf16[4,8,8]{2,1,0:T(8,128)(2,1)}', space=vmem, size = 0x2000, scoped, tag = 'scratch operand']
  #allocation3 [shape = 'f32[4,8,1]{2,1,0:T(8,128)}', space=vmem, size = 0x4000, scoped, tag = 'scratch operand']
  #allocation4 [shape = 'f32[4,8,1]{2,1,0:T(8,128)}', space=vmem, size = 0x4000, scoped, tag = 'scratch operand']
  #allocation5 [shape = 'f32[4,8,8]{2,1,0:T(8,128)}', space=vmem, size = 0x4000, scoped, tag = 'scratch operand']
  %s0 = inlined_call_operand.hbm [shape: bf16[2,8,32], index: 0, kind: input, shape index: {}]
  %s1 = inlined_call_operand.hbm [shape: bf16[2,8,32], index: 1, kind: input, shape index: {}]
  %s2 = inlined_call_operand.hbm [shape: bf16[32,32], index: 2, kind: input, shape index: {}]
  %s3 = inlined_call_operand.vmem [shape: f32[1,32], index: 3, kind: input, shape index: {}]
  %s4 = inlined_call_operand.hbm [shape: bf16[32,32], index: 4, kind: input, shape index: {}]
  %s5 = inlined_call_operand.vmem [shape: f32[1,32], index: 5, kind: input, shape index: {}]
  %s6 = inlined_call_operand.hbm [shape: bf16[32,32], index: 6, kind: input, shape index: {}]
  %s7 = inlined_call_operand.vmem [shape: f32[1,32], index: 7, kind: input, shape index: {}]
  %s8 = inlined_call_operand.hbm [shape: bf16[32,32], index: 8, kind: input, shape index: {}]
  %s9 = inlined_call_operand.vmem [shape: f32[1,32], index: 9, kind: input, shape index: {}]
  %s10 = inlined_call_operand.hbm [shape: f32[2,8,32], index: 10, kind: output, shape index: {}]
  %s11 = sld [smem:[#allocation0]]
  $region105: #{tpu_custom_call.1} parent=0
    _
  %s13 = ssub.s32 1, %s11
  %s14 = scalar_select 0, %s13, %s11
  $region1: #{tpu_custom_call.1} parent=0
    #allocation6 [shape = 'u8[4096]{0}', space=vmem, size = 0x1000, scoped, tag = 'input window, operand 0']
    #allocation7 [shape = 's32[2]{0}', space=sflag, size = 0x8, scoped, tag = 'scoped memory for tpu_custom_call.1']
    #allocation8 [shape = 's32[2]{0}', space=sflag, size = 0x8, scoped, tag = 'scoped memory for tpu_custom_call.1']
    #allocation9 [shape = 'u8[4096]{0}', space=vmem, size = 0x1000, scoped, tag = 'input window, operand 1']
    #allocation10 [shape = 's32[2]{0}', space=sflag, size = 0x8, scoped, tag = 'scoped memory for tpu_custom_call.1']
    #allocation11 [shape = 'u8[8192]{0}', space=vmem, size = 0x2000, scoped, tag = 'input window, operand 2, single buffered']
    #allocation12 [shape = 'u8[8192]{0}', space=vmem, size = 0x2000, scoped, tag = 'input window, operand 4, single buffered']
    #allocation13 [shape = 's32[1]{0}', space=sflag, size = 0x4, scoped, tag = 'scoped memory for tpu_custom_call.1']
    #allocation14 [shape = 'u8[8192]{0}', space=vmem, size = 0x2000, scoped, tag = 'input window, operand 6, single buffered']
    #allocation15 [shape = 'u8[8192]{0}', space=vmem, size = 0x2000, scoped, tag = 'input window, operand 8, single buffered']
    #allocation16 [shape = 's32[1]{0}', space=sflag, size = 0x4, scoped, tag = 'scoped memory for tpu_custom_call.1']
    #allocation17 [shape = 'u8[8192]{0}', space=vmem, size = 0x2000, scoped, tag = 'output window, operand 0']
    %15 = vsyncpa [#allocation7], 0
    %s16 = scalar_lea.sflag [#allocation7], 1
    %17 = vsyncpa %s16, 0
    %18 = vsyncpa [#allocation10], 0
    %s19 = scalar_lea.sflag [#allocation10], 1
    %20 = vsyncpa %s19, 0
    %21 = vsyncpa [#allocation13], 0
    %22 = vsyncpa [#allocation16], 0
    %23 = vsyncpa [#allocation8], 0
    %s24 = scalar_lea.sflag [#allocation8], 1
    %25 = vsyncpa %s24, 0
    loop: start=0, step=1, limit=4
    $region2: #{tpu_custom_call.1} parent=1 // loop_pre_header
      _
    $region3: #{tpu_custom_call.1} parent=1 // loop_header
      %s27 = sphi 0, %s31
      %p28 = scmp.ge.s32.totalorder %s27, 4
      %s34 = sphi 0, %s46
      %s35 = sphi 0, %s42
      %s36 = sphi 0, %s34
      %s37 = sphi 0, %s35
      %s38 = sphi 0, %s36
      %s39 = sphi 0, %s37
      %s49 = sphi 0, %s51
      %s52 = sphi 0, %s49
      %s53 = sphi 0, %s52
      %s69 = sphi 0, %s53
      %s77 = sphi 0, %s79
      %s80 = sphi 0, %s77
      %s81 = sphi 0, %s80
      %s97 = sphi 0, %s81
      %s101 = sphi 0, %s101
      %s103 = sphi 0, %s101
      %s104 = sphi 0, %s103
      %s118 = sphi 0, %s104
      %s122 = sphi 0, %s122
      %s124 = sphi 0, %s122
      %s125 = sphi 0, %s124
      %s139 = sphi 0, %s125
      %s143 = sphi 0, %s143
      %s145 = sphi 0, %s143
      %s146 = sphi 0, %s145
      %s160 = sphi 0, %s146
      %s164 = sphi 0, %s164
      %s166 = sphi 0, %s164
      %s167 = sphi 0, %s166
      %s181 = sphi 0, %s167
      %s185 = sphi 0, %s185
      %s187 = sphi 0, %s185
      %s188 = sphi 0, %s187
      %s202 = sphi 0, %s188
      %s206 = sphi 0, %s206
      %s208 = sphi 0, %s206
      %s209 = sphi 0, %s208
      %s223 = sphi 0, %s209
      %s227 = sphi 0, %s227
      %s229 = sphi 0, %s227
      %s230 = sphi 0, %s229
      %s244 = sphi 0, %s230
      %s248 = sphi 0, %s248
      %s250 = sphi 0, %s248
      %s251 = sphi 0, %s250
      %s265 = sphi 0, %s251
      %s271 = sphi 0, %s273
      %s274 = sphi 0, %s271
      %s275 = sphi 0, %s274
      %s291 = sphi 0, %s275
    $region4: #{tpu_custom_call.1} parent=1 // loop_header_branch
      %30 = sbr.rel (%p28) target = $region8
    $region5: #{tpu_custom_call.1} parent=1 // loop_body
      %s32 = ssub.s32 %s27, 1
      %s33 = ssub.s32 %s27, 2
      %s40 = sadd.s32 1, %s35
      %p41 = scmp.ge.s32.totalorder %s40, 1
      %s42 = scalar_select %p41, 0, %s40
      %s43 = sadd.s32 1, %s34
      %s44 = scalar_select %p41, %s43, %s34
      %p45 = scmp.ge.s32.totalorder %s44, 2
      %s46 = scalar_select %p45, 0, %s44
      %s47 = ssub.s32 %s34, %s46
      %p48 = scmp.eq.s32.totalorder %s47, 0
      %s50 = sadd.s32 %s49, 1
      %s51 = scalar_select %p48, %s49, %s50
      %p54 = pneg %p48
      %p55 = scmp.eq.s32.totalorder %s27, 1
      %p56 = por %p54, %p55
      %p57 = scmp.ne.s32.totalorder %s49, %s52
      %p58 = scmp.eq.s32.totalorder %s27, 0
      %p59 = por %p57, %p58
      %p60 = scmp.ne.s32.totalorder %s49, %s52
      %p61 = scmp.eq.s32.totalorder %s32, 1
      %p62 = por %p60, %p61
      %p63 = scmp.ne.s32.totalorder %s52, %s53
      %p64 = scmp.eq.s32.totalorder %s32, 0
      %p65 = por %p63, %p64
      %p66 = scmp.ne.s32.totalorder %s52, %s53
      %p67 = scmp.eq.s32.totalorder %s33, 1
      %p68 = por %p66, %p67
      %p70 = scmp.ne.s32.totalorder %s53, %s69
      %p71 = scmp.eq.s32.totalorder %s33, 0
      %p72 = por %p70, %p71
      %s73 = ssub.s32 %s34, %s46
      %s74 = ssub.s32 %s35, %s42
      %s75 = sor.u32 %s73, %s74
      %p76 = scmp.eq.s32.totalorder %s75, 0
      %s78 = sadd.s32 %s77, 1
      %s79 = scalar_select %p76, %s77, %s78
      %p82 = pneg %p76
      %p83 = scmp.eq.s32.totalorder %s27, 1
      %p84 = por %p82, %p83
      %p85 = scmp.ne.s32.totalorder %s77, %s80
      %p86 = scmp.eq.s32.totalorder %s27, 0
      %p87 = por %p85, %p86
      %p88 = scmp.ne.s32.totalorder %s77, %s80
      %p89 = scmp.eq.s32.totalorder %s32, 1
      %p90 = por %p88, %p89
      %p91 = scmp.ne.s32.totalorder %s80, %s81
      %p92 = scmp.eq.s32.totalorder %s32, 0
      %p93 = por %p91, %p92
      %p94 = scmp.ne.s32.totalorder %s80, %s81
      %p95 = scmp.eq.s32.totalorder %s33, 1
      %p96 = por %p94, %p95
      %p98 = scmp.ne.s32.totalorder %s81, %s97
      %p99 = scmp.eq.s32.totalorder %s33, 0
      %p100 = por %p98, %p99
      %s102 = sadd.s32 %s101, 1
      %p105 = scmp.eq.s32.totalorder %s27, 1
      %p106 = scmp.ne.s32.totalorder %s101, %s103
      %p107 = scmp.eq.s32.totalorder %s27, 0
      %p108 = por %p106, %p107
      %p109 = scmp.ne.s32.totalorder %s101, %s103
      %p110 = scmp.eq.s32.totalorder %s32, 1
      %p111 = por %p109, %p110
      %p112 = scmp.ne.s32.totalorder %s103, %s104
      %p113 = scmp.eq.s32.totalorder %s32, 0
      %p114 = por %p112, %p113
      %p115 = scmp.ne.s32.totalorder %s103, %s104
      %p116 = scmp.eq.s32.totalorder %s33, 1
      %p117 = por %p115, %p116
      %p119 = scmp.ne.s32.totalorder %s104, %s118
      %p120 = scmp.eq.s32.totalorder %s33, 0
      %p121 = por %p119, %p120
      %s123 = sadd.s32 %s122, 1
      %p126 = scmp.eq.s32.totalorder %s27, 1
      %p127 = scmp.ne.s32.totalorder %s122, %s124
      %p128 = scmp.eq.s32.totalorder %s27, 0
      %p129 = por %p127, %p128
      %p130 = scmp.ne.s32.totalorder %s122, %s124
      %p131 = scmp.eq.s32.totalorder %s32, 1
      %p132 = por %p130, %p131
      %p133 = scmp.ne.s32.totalorder %s124, %s125
      %p134 = scmp.eq.s32.totalorder %s32, 0
      %p135 = por %p133, %p134
      %p136 = scmp.ne.s32.totalorder %s124, %s125
      %p137 = scmp.eq.s32.totalorder %s33, 1
      %p138 = por %p136, %p137
      %p140 = scmp.ne.s32.totalorder %s125, %s139
      %p141 = scmp.eq.s32.totalorder %s33, 0
      %p142 = por %p140, %p141
      %s144 = sadd.s32 %s143, 1
      %p147 = scmp.eq.s32.totalorder %s27, 1
      %p148 = scmp.ne.s32.totalorder %s143, %s145
      %p149 = scmp.eq.s32.totalorder %s27, 0
      %p150 = por %p148, %p149
      %p151 = scmp.ne.s32.totalorder %s143, %s145
      %p152 = scmp.eq.s32.totalorder %s32, 1
      %p153 = por %p151, %p152
      %p154 = scmp.ne.s32.totalorder %s145, %s146
      %p155 = scmp.eq.s32.totalorder %s32, 0
      %p156 = por %p154, %p155
      %p157 = scmp.ne.s32.totalorder %s145, %s146
      %p158 = scmp.eq.s32.totalorder %s33, 1
      %p159 = por %p157, %p158
      %p161 = scmp.ne.s32.totalorder %s146, %s160
      %p162 = scmp.eq.s32.totalorder %s33, 0
      %p163 = por %p161, %p162
      %s165 = sadd.s32 %s164, 1
      %p168 = scmp.eq.s32.totalorder %s27, 1
      %p169 = scmp.ne.s32.totalorder %s164, %s166
      %p170 = scmp.eq.s32.totalorder %s27, 0
      %p171 = por %p169, %p170
      %p172 = scmp.ne.s32.totalorder %s164, %s166
      %p173 = scmp.eq.s32.totalorder %s32, 1
      %p174 = por %p172, %p173
      %p175 = scmp.ne.s32.totalorder %s166, %s167
      %p176 = scmp.eq.s32.totalorder %s32, 0
      %p177 = por %p175, %p176
      %p178 = scmp.ne.s32.totalorder %s166, %s167
      %p179 = scmp.eq.s32.totalorder %s33, 1
      %p180 = por %p178, %p179
      %p182 = scmp.ne.s32.totalorder %s167, %s181
      %p183 = scmp.eq.s32.totalorder %s33, 0
      %p184 = por %p182, %p183
      %s186 = sadd.s32 %s185, 1
      %p189 = scmp.eq.s32.totalorder %s27, 1
      %p190 = scmp.ne.s32.totalorder %s185, %s187
      %p191 = scmp.eq.s32.totalorder %s27, 0
      %p192 = por %p190, %p191
      %p193 = scmp.ne.s32.totalorder %s185, %s187
      %p194 = scmp.eq.s32.totalorder %s32, 1
      %p195 = por %p193, %p194
      %p196 = scmp.ne.s32.totalorder %s187, %s188
      %p197 = scmp.eq.s32.totalorder %s32, 0
      %p198 = por %p196, %p197
      %p199 = scmp.ne.s32.totalorder %s187, %s188
      %p200 = scmp.eq.s32.totalorder %s33, 1
      %p201 = por %p199, %p200
      %p203 = scmp.ne.s32.totalorder %s188, %s202
      %p204 = scmp.eq.s32.totalorder %s33, 0
      %p205 = por %p203, %p204
      %s207 = sadd.s32 %s206, 1
      %p210 = scmp.eq.s32.totalorder %s27, 1
      %p211 = scmp.ne.s32.totalorder %s206, %s208
      %p212 = scmp.eq.s32.totalorder %s27, 0
      %p213 = por %p211, %p212
      %p214 = scmp.ne.s32.totalorder %s206, %s208
      %p215 = scmp.eq.s32.totalorder %s32, 1
      %p216 = por %p214, %p215
      %p217 = scmp.ne.s32.totalorder %s208, %s209
      %p218 = scmp.eq.s32.totalorder %s32, 0
      %p219 = por %p217, %p218
      %p220 = scmp.ne.s32.totalorder %s208, %s209
      %p221 = scmp.eq.s32.totalorder %s33, 1
      %p222 = por %p220, %p221
      %p224 = scmp.ne.s32.totalorder %s209, %s223
      %p225 = scmp.eq.s32.totalorder %s33, 0
      %p226 = por %p224, %p225
      %s228 = sadd.s32 %s227, 1
      %p231 = scmp.eq.s32.totalorder %s27, 1
      %p232 = scmp.ne.s32.totalorder %s227, %s229
      %p233 = scmp.eq.s32.totalorder %s27, 0
      %p234 = por %p232, %p233
      %p235 = scmp.ne.s32.totalorder %s227, %s229
      %p236 = scmp.eq.s32.totalorder %s32, 1
      %p237 = por %p235, %p236
      %p238 = scmp.ne.s32.totalorder %s229, %s230
      %p239 = scmp.eq.s32.totalorder %s32, 0
      %p240 = por %p238, %p239
      %p241 = scmp.ne.s32.totalorder %s229, %s230
      %p242 = scmp.eq.s32.totalorder %s33, 1
      %p243 = por %p241, %p242
      %p245 = scmp.ne.s32.totalorder %s230, %s244
      %p246 = scmp.eq.s32.totalorder %s33, 0
      %p247 = por %p245, %p246
      %s249 = sadd.s32 %s248, 1
      %p252 = scmp.eq.s32.totalorder %s27, 1
      %p253 = scmp.ne.s32.totalorder %s248, %s250
      %p254 = scmp.eq.s32.totalorder %s27, 0
      %p255 = por %p253, %p254
      %p256 = scmp.ne.s32.totalorder %s248, %s250
      %p257 = scmp.eq.s32.totalorder %s32, 1
      %p258 = por %p256, %p257
      %p259 = scmp.ne.s32.totalorder %s250, %s251
      %p260 = scmp.eq.s32.totalorder %s32, 0
      %p261 = por %p259, %p260
      %p262 = scmp.ne.s32.totalorder %s250, %s251
      %p263 = scmp.eq.s32.totalorder %s33, 1
      %p264 = por %p262, %p263
      %p266 = scmp.ne.s32.totalorder %s251, %s265
      %p267 = scmp.eq.s32.totalorder %s33, 0
      %p268 = por %p266, %p267
      %s269 = ssub.s32 %s34, %s46
      %p270 = scmp.eq.s32.totalorder %s269, 0
      %s272 = sadd.s32 %s271, 1
      %s273 = scalar_select %p270, %s271, %s272
      %p276 = pneg %p270
      %p277 = scmp.eq.s32.totalorder %s27, 1
      %p278 = por %p276, %p277
      %p279 = scmp.ne.s32.totalorder %s271, %s274
      %p280 = scmp.eq.s32.totalorder %s27, 0
      %p281 = por %p279, %p280
      %p282 = scmp.ne.s32.totalorder %s271, %s274
      %p283 = scmp.eq.s32.totalorder %s32, 1
      %p284 = por %p282, %p283
      %p285 = scmp.ne.s32.totalorder %s274, %s275
      %p286 = scmp.eq.s32.totalorder %s32, 0
      %p287 = por %p285, %p286
      %p288 = scmp.ne.s32.totalorder %s274, %s275
      %p289 = scmp.eq.s32.totalorder %s33, 1
      %p290 = por %p288, %p289
      %p292 = scmp.ne.s32.totalorder %s275, %s291
      %p293 = scmp.eq.s32.totalorder %s33, 0
      %p294 = por %p292, %p293
      %p295 = scmp.le.s32.totalorder 1, %s27
      %p296 = scmp.lt.s32.totalorder %s27, 3
      %p297 = pnand %p295, %p296
      %p298 = pneg %p297
      // Predicated region
      $region9: #{tpu_custom_call.1} parent=5 // pred_check
        _
      $region10: #{tpu_custom_call.1} parent=5 // pred_check_branch
        %300 = sbr.rel (%p297) target = $region12
      $region11: #{tpu_custom_call.1} parent=5 // pred_region
        %s301 = ssub.s32 %s27, 1
        // Predicated region
        $region13: #{tpu_custom_call.1} parent=11 // pred_check
          %p302 = pneg %p114
        $region14: #{tpu_custom_call.1} parent=11 // pred_check_branch
          %304 = sbr.rel (%p302) target = $region16
        $region15: #{tpu_custom_call.1} parent=11 // pred_region
          %306 = vsyncadd [#allocation10], 0
          %s307 = sshll.u32 %s2, 4
          %s308 = int_to_ptr.hbm [resolvable:$true] %s307
          %s309 = sshll.u32 [#allocation11], 4
          %s310 = int_to_ptr.vmem [resolvable:$true] %s309
          %315 = dma.hbm_to_vmem [thread:$0]  %s308, 256, %s310, [#allocation10], 64, 64, 4
        $region16: #{tpu_custom_call.1} parent=11 // pred_fallthru
          _
        // Predicated region
        $region17: #{tpu_custom_call.1} parent=11 // pred_check
          %p316 = pneg %p135
        $region18: #{tpu_custom_call.1} parent=11 // pred_check_branch
          %318 = sbr.rel (%p316) target = $region20
        $region19: #{tpu_custom_call.1} parent=11 // pred_region
          _
        $region20: #{tpu_custom_call.1} parent=11 // pred_fallthru
          _
        // Predicated region
        $region21: #{tpu_custom_call.1} parent=11 // pred_check
          %p319 = pneg %p156
        $region22: #{tpu_custom_call.1} parent=11 // pred_check_branch
          %321 = sbr.rel (%p319) target = $region24
        $region23: #{tpu_custom_call.1} parent=11 // pred_region
          %323 = vsyncadd [#allocation13], 0
          %s324 = sshll.u32 %s4, 4
          %s325 = int_to_ptr.hbm [resolvable:$true] %s324
          %s326 = sshll.u32 [#allocation12], 4
          %s327 = int_to_ptr.vmem [resolvable:$true] %s326
          %332 = dma.hbm_to_vmem [thread:$0]  %s325, 256, %s327, [#allocation13], 64, 64, 4
        $region24: #{tpu_custom_call.1} parent=11 // pred_fallthru
          _
        // Predicated region
        $region25: #{tpu_custom_call.1} parent=11 // pred_check
          %p333 = pneg %p177
        $region26: #{tpu_custom_call.1} parent=11 // pred_check_branch
          %335 = sbr.rel (%p333) target = $region28
        $region27: #{tpu_custom_call.1} parent=11 // pred_region
          _
        $region28: #{tpu_custom_call.1} parent=11 // pred_fallthru
          _
        // Predicated region
        $region29: #{tpu_custom_call.1} parent=11 // pred_check
          %p336 = pneg %p198
        $region30: #{tpu_custom_call.1} parent=11 // pred_check_branch
          %338 = sbr.rel (%p336) target = $region32
        $region31: #{tpu_custom_call.1} parent=11 // pred_region
          %340 = vsyncadd [#allocation13], 0
          %s341 = sshll.u32 %s6, 4
          %s342 = int_to_ptr.hbm [resolvable:$true] %s341
          %s343 = sshll.u32 [#allocation14], 4
          %s344 = int_to_ptr.vmem [resolvable:$true] %s343
          %349 = dma.hbm_to_vmem [thread:$0]  %s342, 256, %s344, [#allocation13], 64, 64, 4
        $region32: #{tpu_custom_call.1} parent=11 // pred_fallthru
          _
        // Predicated region
        $region33: #{tpu_custom_call.1} parent=11 // pred_check
          %p350 = pneg %p219
        $region34: #{tpu_custom_call.1} parent=11 // pred_check_branch
          %352 = sbr.rel (%p350) target = $region36
        $region35: #{tpu_custom_call.1} parent=11 // pred_region
          _
        $region36: #{tpu_custom_call.1} parent=11 // pred_fallthru
          _
        // Predicated region
        $region37: #{tpu_custom_call.1} parent=11 // pred_check
          %p353 = pneg %p240
        $region38: #{tpu_custom_call.1} parent=11 // pred_check_branch
          %355 = sbr.rel (%p353) target = $region40
        $region39: #{tpu_custom_call.1} parent=11 // pred_region
          %357 = vsyncadd [#allocation16], 0
          %s358 = sshll.u32 %s8, 4
          %s359 = int_to_ptr.hbm [resolvable:$true] %s358
          %s360 = sshll.u32 [#allocation15], 4
          %s361 = int_to_ptr.vmem [resolvable:$true] %s360
          %366 = dma.hbm_to_vmem [thread:$0]  %s359, 256, %s361, [#allocation16], 64, 64, 4
        $region40: #{tpu_custom_call.1} parent=11 // pred_fallthru
          _
        // Predicated region
        $region41: #{tpu_custom_call.1} parent=11 // pred_check
          %p367 = pneg %p261
        $region42: #{tpu_custom_call.1} parent=11 // pred_check_branch
          %369 = sbr.rel (%p367) target = $region44
        $region43: #{tpu_custom_call.1} parent=11 // pred_region
          _
        $region44: #{tpu_custom_call.1} parent=11 // pred_fallthru
          _
      $region12: #{tpu_custom_call.1} parent=5 // pred_fallthru
        _
      %p370 = scmp.lt.s32.totalorder %s27, 2
      // Predicated region
      $region45: #{tpu_custom_call.1} parent=5 // pred_check
        %p371 = pneg %p370
      $region46: #{tpu_custom_call.1} parent=5 // pred_check_branch
        %373 = sbr.rel (%p371) target = $region48
      $region47: #{tpu_custom_call.1} parent=5 // pred_region
        // Predicated region
        $region49: #{tpu_custom_call.1} parent=47 // pred_check
          %p374 = pneg %p59
        $region50: #{tpu_custom_call.1} parent=47 // pred_check_branch
          %376 = sbr.rel (%p374) target = $region52
        $region51: #{tpu_custom_call.1} parent=47 // pred_region
          %s377 = sand.u32 %s49, 1
          %s378 = scalar_lea.sflag [#allocation7], %s377
          %s379 = sand.u32 %s49, 1
          %s380 = smul.addr %s379, 4
          %s381 = scalar_lea.vmem [#allocation6], %s380
          %383 = vsyncadd %s378, 0
          %s384 = smul.addr %s34, 4
          %s385 = scalar_lea.hbm %s0, %s384
          %s387 = sshll.u32 %s385, 4
          %s388 = int_to_ptr.hbm [resolvable:$true] %s387
          %s389 = sshll.u32 %s381, 4
          %s390 = int_to_ptr.vmem [resolvable:$true] %s389
          %392 = dma.hbm_to_vmem [thread:$0]  %s388, 64, %s390, %s378
        $region52: #{tpu_custom_call.1} parent=47 // pred_fallthru
          _
        // Predicated region
        $region53: #{tpu_custom_call.1} parent=47 // pred_check
          %p393 = pneg %p87
        $region54: #{tpu_custom_call.1} parent=47 // pred_check_branch
          %395 = sbr.rel (%p393) target = $region56
        $region55: #{tpu_custom_call.1} parent=47 // pred_region
          %s396 = sand.u32 %s27, 1
          %s397 = scalar_lea.sflag [#allocation10], %s396
          %s398 = sand.u32 %s77, 1
          %s399 = smul.addr %s398, 4
          %s400 = scalar_lea.vmem [#allocation9], %s399
          %402 = vsyncadd %s397, 0
          %s403 = sadd.s32 %s35, %s34
          %s404 = smul.addr %s403, 4
          %s405 = scalar_lea.hbm %s1, %s404
          %s407 = sshll.u32 %s405, 4
          %s408 = int_to_ptr.hbm [resolvable:$true] %s407
          %s409 = sshll.u32 %s400, 4
          %s410 = int_to_ptr.vmem [resolvable:$true] %s409
          %412 = dma.hbm_to_vmem [thread:$0]  %s408, 64, %s410, %s397
        $region56: #{tpu_custom_call.1} parent=47 // pred_fallthru
          _
      $region48: #{tpu_custom_call.1} parent=5 // pred_fallthru
        _
      %p413 = scmp.le.s32.totalorder 1, %s27
      %p414 = scmp.lt.s32.totalorder %s27, 3
      %p415 = pnand %p413, %p414
      %p416 = pneg %p415
      // Predicated region
      $region57: #{tpu_custom_call.1} parent=5 // pred_check
        _
      $region58: #{tpu_custom_call.1} parent=5 // pred_check_branch
        %418 = sbr.rel (%p415) target = $region60
      $region59: #{tpu_custom_call.1} parent=5 // pred_region
        %s419 = ssub.s32 %s27, 1
        %s420 = sand.u32 %s52, 1
        %s421 = scalar_lea.sflag [#allocation7], %s420
        %s422 = sand.u32 %s52, 1
        %s423 = smul.addr %s422, 4
        %s424 = scalar_lea.vmem [#allocation6], %s423
        // Predicated region
        $region61: #{tpu_custom_call.1} parent=59 // pred_check
          %p425 = pneg %p65
        $region62: #{tpu_custom_call.1} parent=59 // pred_check_branch
          %427 = sbr.rel (%p425) target = $region64
        $region63: #{tpu_custom_call.1} parent=59 // pred_region
          %429 = dma.done %s421, 64
        $region64: #{tpu_custom_call.1} parent=59 // pred_fallthru
          _
        %s430 = sand.u32 %s32, 1
        %s431 = scalar_lea.sflag [#allocation10], %s430
        %s432 = sand.u32 %s80, 1
        %s433 = smul.addr %s432, 4
        %s434 = scalar_lea.vmem [#allocation9], %s433
        // Predicated region
        $region65: #{tpu_custom_call.1} parent=59 // pred_check
          %p435 = pneg %p93
        $region66: #{tpu_custom_call.1} parent=59 // pred_check_branch
          %437 = sbr.rel (%p435) target = $region68
        $region67: #{tpu_custom_call.1} parent=59 // pred_region
          %439 = dma.done %s431, 64
        $region68: #{tpu_custom_call.1} parent=59 // pred_fallthru
          _
        // Predicated region
        $region69: #{tpu_custom_call.1} parent=59 // pred_check
          %p440 = pneg %p114
        $region70: #{tpu_custom_call.1} parent=59 // pred_check_branch
          %442 = sbr.rel (%p440) target = $region72
        $region71: #{tpu_custom_call.1} parent=59 // pred_region
          %444 = dma.done [#allocation10], 256
        $region72: #{tpu_custom_call.1} parent=59 // pred_fallthru
          _
        // Predicated region
        $region73: #{tpu_custom_call.1} parent=59 // pred_check
          %p445 = pneg %p156
        $region74: #{tpu_custom_call.1} parent=59 // pred_check_branch
          %447 = sbr.rel (%p445) target = $region76
        $region75: #{tpu_custom_call.1} parent=59 // pred_region
          %449 = dma.done [#allocation13], 256
        $region76: #{tpu_custom_call.1} parent=59 // pred_fallthru
          _
        // Predicated region
        $region77: #{tpu_custom_call.1} parent=59 // pred_check
          %p450 = pneg %p198
        $region78: #{tpu_custom_call.1} parent=59 // pred_check_branch
          %452 = sbr.rel (%p450) target = $region80
        $region79: #{tpu_custom_call.1} parent=59 // pred_region
          %454 = dma.done [#allocation13], 256
        $region80: #{tpu_custom_call.1} parent=59 // pred_fallthru
          _
        // Predicated region
        $region81: #{tpu_custom_call.1} parent=59 // pred_check
          %p455 = pneg %p240
        $region82: #{tpu_custom_call.1} parent=59 // pred_check_branch
          %457 = sbr.rel (%p455) target = $region84
        $region83: #{tpu_custom_call.1} parent=59 // pred_region
          %459 = dma.done [#allocation16], 256
        $region84: #{tpu_custom_call.1} parent=59 // pred_fallthru
          _
        %s460 = sand.u32 %s52, 1
        %s461 = scalar_lea.sflag [#allocation7], %s460
        %s462 = sand.u32 %s52, 1
        %s463 = smul.addr %s462, 4
        %s464 = scalar_lea.vmem [#allocation6], %s463
        %p465 = pneg %p65
        %p466 = pneg %p62
        %s467 = sand.u32 %s32, 1
        %s468 = scalar_lea.sflag [#allocation10], %s467
        %s469 = sand.u32 %s80, 1
        %s470 = smul.addr %s469, 4
        %s471 = scalar_lea.vmem [#allocation9], %s470
        %p472 = pneg %p93
        %p473 = pneg %p90
        %p474 = pneg %p114
        %p475 = pneg %p111
        %p476 = pneg %p135
        %p477 = pneg %p132
        %p478 = pneg %p156
        %p479 = pneg %p153
        %p480 = pneg %p177
        %p481 = pneg %p174
        %p482 = pneg %p198
        %p483 = pneg %p195
        %p484 = pneg %p219
        %p485 = pneg %p216
        %p486 = pneg %p240
        %p487 = pneg %p237
        %p488 = pneg %p261
        %p489 = pneg %p258
        %p490 = pneg %p287
        %p491 = pneg %p284
        %s492 = sand.u32 %s274, 1
        %s493 = scalar_lea.sflag [#allocation8], %s492
        %s494 = sand.u32 %s274, 1
        %s495 = smul.addr %s494, 8
        %s496 = scalar_lea.vmem [#allocation17], %s495
        %p498 = scmp.eq.s32.totalorder %s37, 0
        // Predicated region
        $region85: #{tpu_custom_call.1} parent=59 // pred_check
          %p499 = pneg %p498
        $region86: #{tpu_custom_call.1} parent=59 // pred_check_branch
          %501 = sbr.rel (%p499) target = $region88
        $region87: #{tpu_custom_call.1} parent=59 // pred_region
          %v502 = vld [vmem:[%s424] sm:$0xf]
          %v503 = vld [vmem:[#allocation11] sm:$0xf]
          %v504 = vld [vmem:[#allocation11 + $0x4] sm:$0xf]
          %v505 = vld [vmem:[#allocation11 + $0x8] sm:$0xf]
          %v506 = vld [vmem:[#allocation11 + $0xc] sm:$0xf]
          %v507 = vld [vmem:[%s3] sm:$0x1]
          %v509 = vperm.slane %v507, 0
          %v515 = vunpack.c.l.b16 %v503
          %v516 = vunpack.c.l.b16 %v504
          %v517 = vunpack.c.l.b16 %v505
          %v518 = vunpack.c.l.b16 %v506
          %v519 = vpack.c.b16 %v516, %v515
          %v520 = vpack.c.b16 %v518, %v517
          %vm523 = vcmask 261120
          %v525 = vsel %vm523, %v502, 0
          %527 = vmatpush.bf16.msra.mxu0 0
          %528 = vmatpush.bf16.msra.mxu0 0
          %529 = vmatpush.bf16.msra.mxu0 0
          %530 = vmatpush.bf16.msra.mxu0 0
          %531 = vmatpush.bf16.msra.mxu0 0
          %532 = vmatpush.bf16.msra.mxu0 0
          %533 = vmatpush.bf16.msra.mxu0 %v520
          %534 = vmatpush.bf16.msra.mxu0 %v519
          %535 = vmatmul.bf16.gmra.mxu0 %v525
          %v536 = vpop.f32.mrf.mxu0
          %v537 = vadd.f32 %v509, %v536
          %v538 = vpop.f32.mrf.mxu0
          %539 = vdwg.mxu0
          %v540 = vxor.u32 %v537, 2147483648
          %v541 = vmul.f32 %v540, 1.442695
          %v542 = vpow.pop %v541
          %v543 = vadd.f32 %v542, 1.0
          %v544 = vrcp.pop %v543
          %v545 = vmul.f32 %v543, %v544
          %v546 = vsub.f32 1.0, %v545
          %v547 = vmul.f32 %v544, %v546
          %v548 = vadd.f32 %v544, %v547
          %vm549 = vweird.f32 %v543
          %vm550 = vweird.f32 %v544
          %vm551 = vmor %vm549, %vm550
          %v552 = vsel %vm551, %v544, %v548
          %v553 = vand.u32 2147483647, %v543
          %vm554 = vcmp.eq.f32.partialorder %v553, 8.507059e+37
          %v555 = vand.u32 %v543, 2147483648
          %v556 = vor.u32 1.1754944e-38, %v555
          %v557 = vsel %vm554, %v556, %v552
          %v558 = vmul.f32 1.0, %v557
          %v559 = vmul.f32 %v537, %v558
          %v560 = vmul.f32 %v559, 0.35355338
          %v561 = vpack.c.bf16 %v560, %v560
          %563 = vrot.lane.b32.xlu0 %v561, 120
          %v564 = vpop.permute.xlu0 %563
          %565 = vrot.lane.b32.xlu0 %v561, 112
          %v566 = vpop.permute.xlu0 %565
          %567 = vrot.lane.b32.xlu0 %v561, 104
          %v568 = vpop.permute.xlu0 %567
          %v571 = vpack.i.b16 %v564, %v561
          %v572 = vshrl.u32 %v561, 16
          %v573 = vshrl.u32 %v564, 16
          %v574 = vpack.i.b16 %v573, %v572
          %v577 = vpack.i.b16 %v568, %v566
          %v578 = vshrl.u32 %v566, 16
          %v579 = vshrl.u32 %v568, 16
          %v580 = vpack.i.b16 %v579, %v578
          %v583 = vunpack.c.l.s4 1983009808
          %v584 = vunpack.c.0.s8 %v583
          %v585 = vperm.slane %v571, %v584
          %v588 = vunpack.c.l.s4 1983009808
          %v589 = vunpack.c.0.s8 %v588
          %v590 = vperm.slane %v577, %v589
          %v591 = vrot.slane %v590, 4
          %vm592 = vcmask 1047556
          %v593 = vsel %vm592, %v591, %v585
          %v594 = vrot.slane %v585, 4
          %v595 = vsel %vm592, %v590, %v594
          %v597 = vunpack.c.l.s4 1934713408
          %v598 = vunpack.c.0.s8 %v597
          %v599 = vperm.slane %v593, %v598
          %v601 = vunpack.c.l.s4 1934713408
          %v602 = vunpack.c.0.s8 %v601
          %v603 = vperm.slane %v595, %v602
          %v604 = vrot.slane %v599, 4
          %v605 = vsel %vm592, 0, %v604
          %v606 = vrot.slane %v603, 4
          %v607 = vsel %vm592, 0, %v606
          %v610 = vunpack.c.l.s4 1983009808
          %v611 = vunpack.c.0.s8 %v610
          %v612 = vperm.slane %v574, %v611
          %v615 = vunpack.c.l.s4 1983009808
          %v616 = vunpack.c.0.s8 %v615
          %v617 = vperm.slane %v580, %v616
          %v618 = vrot.slane %v617, 4
          %v619 = vsel %vm592, %v618, %v612
          %v620 = vrot.slane %v612, 4
          %v621 = vsel %vm592, %v617, %v620
          %v623 = vunpack.c.l.s4 1934713408
          %v624 = vunpack.c.0.s8 %v623
          %v625 = vperm.slane %v619, %v624
          %v627 = vunpack.c.l.s4 1934713408
          %v628 = vunpack.c.0.s8 %v627
          %v629 = vperm.slane %v621, %v628
          %v630 = vrot.slane %v625, 4
          %v631 = vsel %vm592, 0, %v630
          %v632 = vrot.slane %v629, 4
          %v633 = vsel %vm592, 0, %v632
          %v634 = vsel %vm592, %v606, %v599
          %v636 = vunpack.c.l.s4 1983009808
          %v637 = vunpack.c.0.s8 %v636
          %v638 = vperm.slane %v634, %v637
          %v639 = vrot.slane %v607, 4
          %v640 = vsel %vm592, %v639, %v605
          %v642 = vunpack.c.l.s4 1983009808
          %v643 = vunpack.c.0.s8 %v642
          %v644 = vperm.slane %v640, %v643
          %v645 = vrot.slane %v644, 4
          %v646 = vsel %vm592, %v645, %v638
          %v648 = vunpack.c.l.s4 1934713408
          %v649 = vunpack.c.0.s8 %v648
          %v650 = vperm.slane %v646, %v649
          %v651 = vrot.slane %v650, 4
          %v652 = vsel %vm592, 0, %v651
          %v653 = vsel %vm592, %v632, %v625
          %v655 = vunpack.c.l.s4 1983009808
          %v656 = vunpack.c.0.s8 %v655
          %v657 = vperm.slane %v653, %v656
          %v658 = vrot.slane %v633, 4
          %v659 = vsel %vm592, %v658, %v631
          %v661 = vunpack.c.l.s4 1983009808
          %v662 = vunpack.c.0.s8 %v661
          %v663 = vperm.slane %v659, %v662
          %v664 = vrot.slane %v663, 4
          %v665 = vsel %vm592, %v664, %v657
          %v667 = vunpack.c.l.s4 1934713408
          %v668 = vunpack.c.0.s8 %v667
          %v669 = vperm.slane %v665, %v668
          %v670 = vrot.slane %v669, 4
          %v671 = vsel %vm592, 0, %v670
          %v674 = vpack.i.b16 %v669, %v650
          %v676 = vshrl.u32 %v650, 16
          %v677 = vshrl.u32 %v669, 16
          %v678 = vpack.i.b16 %v677, %v676
          %v682 = vpack.i.b16 %v671, %v652
          %v684 = vshrl.u32 %v652, 16
          %v685 = vshrl.u32 %v671, 16
          %v686 = vpack.i.b16 %v685, %v684
          %vm688 = vcmask 60416
          %689 = vst.msk [vmem:[#allocation2] sm:$0xf] %vm688, %v674
          %690 = vst.msk [vmem:[#allocation2 + $0x4] sm:$0xf] %vm688, %v678
          %691 = vst.msk [vmem:[#allocation2 + $0x8] sm:$0xf] %vm688, %v682
          %692 = vst.msk [vmem:[#allocation2 + $0xc] sm:$0xf] %vm688, %v686
          %vm693 = vcmask 7168
          %694 = vst.msk [vmem:[#allocation3] sm:$0xff] %vm693, -inf
          %695 = vst.msk [vmem:[#allocation3 + $0x8] sm:$0xff] %vm693, -inf
          %696 = vst.msk [vmem:[#allocation3 + $0x10] sm:$0xff] %vm693, -inf
          %697 = vst.msk [vmem:[#allocation3 + $0x18] sm:$0xff] %vm693, -inf
          %698 = vst.msk [vmem:[#allocation4] sm:$0xff] %vm693, 0.0
          %699 = vst.msk [vmem:[#allocation4 + $0x8] sm:$0xff] %vm693, 0.0
          %700 = vst.msk [vmem:[#allocation4 + $0x10] sm:$0xff] %vm693, 0.0
          %701 = vst.msk [vmem:[#allocation4 + $0x18] sm:$0xff] %vm693, 0.0
          %vm702 = vcmask 64512
          %703 = vst.msk [vmem:[#allocation5] sm:$0xff] %vm702, 0.0
          %704 = vst.msk [vmem:[#allocation5 + $0x8] sm:$0xff] %vm702, 0.0
          %705 = vst.msk [vmem:[#allocation5 + $0x10] sm:$0xff] %vm702, 0.0
          %706 = vst.msk [vmem:[#allocation5 + $0x18] sm:$0xff] %vm702, 0.0
        $region88: #{tpu_custom_call.1} parent=59 // pred_fallthru
          _
        %v707 = vld [vmem:[%s434] sm:$0xf]
        %v708 = vld [vmem:[#allocation12] sm:$0xf]
        %v709 = vld [vmem:[#allocation12 + $0x4] sm:$0xf]
        %v710 = vld [vmem:[#allocation12 + $0x8] sm:$0xf]
        %v711 = vld [vmem:[#allocation12 + $0xc] sm:$0xf]
        %v712 = vld [vmem:[%s5] sm:$0x1]
        %v714 = vperm.slane %v712, 0
        %v720 = vunpack.c.l.b16 %v708
        %v721 = vunpack.c.l.b16 %v709
        %v722 = vunpack.c.l.b16 %v710
        %v723 = vunpack.c.l.b16 %v711
        %v724 = vpack.c.b16 %v721, %v720
        %v725 = vpack.c.b16 %v723, %v722
        %vm728 = vcmask 261120
        %v730 = vsel %vm728, %v707, 0
        %732 = vmatpush.bf16.msra.mxu0 0
        %733 = vmatpush.bf16.msra.mxu0 0
        %734 = vmatpush.bf16.msra.mxu0 0
        %735 = vmatpush.bf16.msra.mxu0 0
        %736 = vmatpush.bf16.msra.mxu0 0
        %737 = vmatpush.bf16.msra.mxu0 0
        %738 = vmatpush.bf16.msra.mxu0 %v725
        %739 = vmatpush.bf16.msra.mxu0 %v724
        %740 = vmatmul.bf16.gmra.mxu0 %v730
        %v741 = vpop.f32.mrf.mxu0
        %v742 = vadd.f32 %v714, %v741
        %v743 = vpop.f32.mrf.mxu0
        %744 = vdwg.mxu0
        %v745 = vxor.u32 %v742, 2147483648
        %v746 = vmul.f32 %v745, 1.442695
        %v747 = vpow.pop %v746
        %v748 = vadd.f32 %v747, 1.0
        %v749 = vrcp.pop %v748
        %v750 = vmul.f32 %v748, %v749
        %v751 = vsub.f32 1.0, %v750
        %v752 = vmul.f32 %v749, %v751
        %v753 = vadd.f32 %v749, %v752
        %vm754 = vweird.f32 %v748
        %vm755 = vweird.f32 %v749
        %vm756 = vmor %vm754, %vm755
        %v757 = vsel %vm756, %v749, %v753
        %v758 = vand.u32 2147483647, %v748
        %vm759 = vcmp.eq.f32.partialorder %v758, 8.507059e+37
        %v760 = vand.u32 %v748, 2147483648
        %v761 = vor.u32 1.1754944e-38, %v760
        %v762 = vsel %vm759, %v761, %v757
        %v763 = vmul.f32 1.0, %v762
        %v764 = vmul.f32 %v742, %v763
        %v765 = vpack.c.bf16 %v764, %v764
        %767 = vrot.lane.b32.xlu0 %v765, 120
        %v768 = vpop.permute.xlu0 %767
        %769 = vrot.lane.b32.xlu0 %v765, 112
        %v770 = vpop.permute.xlu0 %769
        %771 = vrot.lane.b32.xlu0 %v765, 104
        %v772 = vpop.permute.xlu0 %771
        %v775 = vpack.i.b16 %v768, %v765
        %v776 = vshrl.u32 %v765, 16
        %v777 = vshrl.u32 %v768, 16
        %v778 = vpack.i.b16 %v777, %v776
        %v781 = vpack.i.b16 %v772, %v770
        %v782 = vshrl.u32 %v770, 16
        %v783 = vshrl.u32 %v772, 16
        %v784 = vpack.i.b16 %v783, %v782
        %v787 = vunpack.c.l.s4 1983009808
        %v788 = vunpack.c.0.s8 %v787
        %v789 = vperm.slane %v775, %v788
        %v792 = vunpack.c.l.s4 1983009808
        %v793 = vunpack.c.0.s8 %v792
        %v794 = vperm.slane %v781, %v793
        %v795 = vrot.slane %v794, 4
        %vm796 = vcmask 1047556
        %v797 = vsel %vm796, %v795, %v789
        %v798 = vrot.slane %v789, 4
        %v799 = vsel %vm796, %v794, %v798
        %v801 = vunpack.c.l.s4 1934713408
        %v802 = vunpack.c.0.s8 %v801
        %v803 = vperm.slane %v797, %v802
        %v805 = vunpack.c.l.s4 1934713408
        %v806 = vunpack.c.0.s8 %v805
        %v807 = vperm.slane %v799, %v806
        %v808 = vrot.slane %v803, 4
        %v809 = vsel %vm796, 0, %v808
        %v810 = vrot.slane %v807, 4
        %v811 = vsel %vm796, 0, %v810
        %v814 = vunpack.c.l.s4 1983009808
        %v815 = vunpack.c.0.s8 %v814
        %v816 = vperm.slane %v778, %v815
        %v819 = vunpack.c.l.s4 1983009808
        %v820 = vunpack.c.0.s8 %v819
        %v821 = vperm.slane %v784, %v820
        %v822 = vrot.slane %v821, 4
        %v823 = vsel %vm796, %v822, %v816
        %v824 = vrot.slane %v816, 4
        %v825 = vsel %vm796, %v821, %v824
        %v827 = vunpack.c.l.s4 1934713408
        %v828 = vunpack.c.0.s8 %v827
        %v829 = vperm.slane %v823, %v828
        %v831 = vunpack.c.l.s4 1934713408
        %v832 = vunpack.c.0.s8 %v831
        %v833 = vperm.slane %v825, %v832
        %v834 = vrot.slane %v829, 4
        %v835 = vsel %vm796, 0, %v834
        %v836 = vrot.slane %v833, 4
        %v837 = vsel %vm796, 0, %v836
        %v838 = vsel %vm796, %v810, %v803
        %v840 = vunpack.c.l.s4 1983009808
        %v841 = vunpack.c.0.s8 %v840
        %v842 = vperm.slane %v838, %v841
        %v843 = vrot.slane %v811, 4
        %v844 = vsel %vm796, %v843, %v809
        %v846 = vunpack.c.l.s4 1983009808
        %v847 = vunpack.c.0.s8 %v846
        %v848 = vperm.slane %v844, %v847
        %v849 = vrot.slane %v848, 4
        %v850 = vsel %vm796, %v849, %v842
        %v852 = vunpack.c.l.s4 1934713408
        %v853 = vunpack.c.0.s8 %v852
        %v854 = vperm.slane %v850, %v853
        %v855 = vrot.slane %v854, 4
        %v856 = vsel %vm796, 0, %v855
        %v857 = vsel %vm796, %v836, %v829
        %v859 = vunpack.c.l.s4 1983009808
        %v860 = vunpack.c.0.s8 %v859
        %v861 = vperm.slane %v857, %v860
        %v862 = vrot.slane %v837, 4
        %v863 = vsel %vm796, %v862, %v835
        %v865 = vunpack.c.l.s4 1983009808
        %v866 = vunpack.c.0.s8 %v865
        %v867 = vperm.slane %v863, %v866
        %v868 = vrot.slane %v867, 4
        %v869 = vsel %vm796, %v868, %v861
        %v871 = vunpack.c.l.s4 1934713408
        %v872 = vunpack.c.0.s8 %v871
        %v873 = vperm.slane %v869, %v872
        %v874 = vrot.slane %v873, 4
        %v875 = vsel %vm796, 0, %v874
        %v878 = vpack.i.b16 %v873, %v854
        %v879 = vshrl.u32 %v854, 16
        %v880 = vshrl.u32 %v873, 16
        %v881 = vpack.i.b16 %v880, %v879
        %v884 = vpack.i.b16 %v875, %v856
        %v885 = vshrl.u32 %v856, 16
        %v886 = vshrl.u32 %v875, 16
        %v887 = vpack.i.b16 %v886, %v885
        %v888 = vld [vmem:[#allocation14] sm:$0xf]
        %v889 = vld [vmem:[#allocation14 + $0x4] sm:$0xf]
        %v890 = vld [vmem:[#allocation14 + $0x8] sm:$0xf]
        %v891 = vld [vmem:[#allocation14 + $0xc] sm:$0xf]
        %v892 = vld [vmem:[%s7] sm:$0x1]
        %v894 = vperm.slane %v892, 0
        %v900 = vunpack.c.l.b16 %v888
        %v901 = vunpack.c.l.b16 %v889
        %v902 = vunpack.c.l.b16 %v890
        %v903 = vunpack.c.l.b16 %v891
        %v904 = vpack.c.b16 %v901, %v900
        %v905 = vpack.c.b16 %v903, %v902
        %908 = vmatpush.bf16.msra.mxu0 0
        %909 = vmatpush.bf16.msra.mxu0 0
        %910 = vmatpush.bf16.msra.mxu0 0
        %911 = vmatpush.bf16.msra.mxu0 0
        %912 = vmatpush.bf16.msra.mxu0 0
        %913 = vmatpush.bf16.msra.mxu0 0
        %914 = vmatpush.bf16.msra.mxu0 %v905
        %915 = vmatpush.bf16.msra.mxu0 %v904
        %916 = vmatmul.bf16.gmra.mxu0 %v730
        %v917 = vpop.f32.mrf.mxu0
        %v918 = vadd.f32 %v894, %v917
        %v919 = vpop.f32.mrf.mxu0
        %920 = vdwg.mxu0
        %v921 = vxor.u32 %v918, 2147483648
        %v922 = vmul.f32 %v921, 1.442695
        %v923 = vpow.pop %v922
        %v924 = vadd.f32 %v923, 1.0
        %v925 = vrcp.pop %v924
        %v926 = vmul.f32 %v924, %v925
        %v927 = vsub.f32 1.0, %v926
        %v928 = vmul.f32 %v925, %v927
        %v929 = vadd.f32 %v925, %v928
        %vm930 = vweird.f32 %v924
        %vm931 = vweird.f32 %v925
        %vm932 = vmor %vm930, %vm931
        %v933 = vsel %vm932, %v925, %v929
        %v934 = vand.u32 2147483647, %v924
        %vm935 = vcmp.eq.f32.partialorder %v934, 8.507059e+37
        %v936 = vand.u32 %v924, 2147483648
        %v937 = vor.u32 1.1754944e-38, %v936
        %v938 = vsel %vm935, %v937, %v933
        %v939 = vmul.f32 1.0, %v938
        %v940 = vmul.f32 %v918, %v939
        %v941 = vpack.c.bf16 %v940, %v940
        %943 = vrot.lane.b32.xlu0 %v941, 120
        %v944 = vpop.permute.xlu0 %943
        %945 = vrot.lane.b32.xlu0 %v941, 112
        %v946 = vpop.permute.xlu0 %945
        %947 = vrot.lane.b32.xlu0 %v941, 104
        %v948 = vpop.permute.xlu0 %947
        %v951 = vpack.i.b16 %v944, %v941
        %v952 = vshrl.u32 %v941, 16
        %v953 = vshrl.u32 %v944, 16
        %v954 = vpack.i.b16 %v953, %v952
        %v957 = vpack.i.b16 %v948, %v946
        %v958 = vshrl.u32 %v946, 16
        %v959 = vshrl.u32 %v948, 16
        %v960 = vpack.i.b16 %v959, %v958
        %v963 = vunpack.c.l.s4 1983009808
        %v964 = vunpack.c.0.s8 %v963
        %v965 = vperm.slane %v951, %v964
        %v968 = vunpack.c.l.s4 1983009808
        %v969 = vunpack.c.0.s8 %v968
        %v970 = vperm.slane %v957, %v969
        %v971 = vrot.slane %v970, 4
        %v972 = vsel %vm796, %v971, %v965
        %v973 = vrot.slane %v965, 4
        %v974 = vsel %vm796, %v970, %v973
        %v976 = vunpack.c.l.s4 1934713408
        %v977 = vunpack.c.0.s8 %v976
        %v978 = vperm.slane %v972, %v977
        %v980 = vunpack.c.l.s4 1934713408
        %v981 = vunpack.c.0.s8 %v980
        %v982 = vperm.slane %v974, %v981
        %v983 = vrot.slane %v978, 4
        %v984 = vsel %vm796, 0, %v983
        %v985 = vrot.slane %v982, 4
        %v986 = vsel %vm796, 0, %v985
        %v989 = vunpack.c.l.s4 1983009808
        %v990 = vunpack.c.0.s8 %v989
        %v991 = vperm.slane %v954, %v990
        %v994 = vunpack.c.l.s4 1983009808
        %v995 = vunpack.c.0.s8 %v994
        %v996 = vperm.slane %v960, %v995
        %v997 = vrot.slane %v996, 4
        %v998 = vsel %vm796, %v997, %v991
        %v999 = vrot.slane %v991, 4
        %v1000 = vsel %vm796, %v996, %v999
        %v1002 = vunpack.c.l.s4 1934713408
        %v1003 = vunpack.c.0.s8 %v1002
        %v1004 = vperm.slane %v998, %v1003
        %v1006 = vunpack.c.l.s4 1934713408
        %v1007 = vunpack.c.0.s8 %v1006
        %v1008 = vperm.slane %v1000, %v1007
        %v1009 = vrot.slane %v1004, 4
        %v1010 = vsel %vm796, 0, %v1009
        %v1011 = vrot.slane %v1008, 4
        %v1012 = vsel %vm796, 0, %v1011
        %v1013 = vsel %vm796, %v985, %v978
        %v1015 = vunpack.c.l.s4 1983009808
        %v1016 = vunpack.c.0.s8 %v1015
        %v1017 = vperm.slane %v1013, %v1016
        %v1018 = vrot.slane %v986, 4
        %v1019 = vsel %vm796, %v1018, %v984
        %v1021 = vunpack.c.l.s4 1983009808
        %v1022 = vunpack.c.0.s8 %v1021
        %v1023 = vperm.slane %v1019, %v1022
        %v1024 = vrot.slane %v1023, 4
        %v1025 = vsel %vm796, %v1024, %v1017
        %v1027 = vunpack.c.l.s4 1934713408
        %v1028 = vunpack.c.0.s8 %v1027
        %v1029 = vperm.slane %v1025, %v1028
        %v1030 = vrot.slane %v1029, 4
        %v1031 = vsel %vm796, 0, %v1030
        %v1032 = vsel %vm796, %v1011, %v1004
        %v1034 = vunpack.c.l.s4 1983009808
        %v1035 = vunpack.c.0.s8 %v1034
        %v1036 = vperm.slane %v1032, %v1035
        %v1037 = vrot.slane %v1012, 4
        %v1038 = vsel %vm796, %v1037, %v1010
        %v1040 = vunpack.c.l.s4 1983009808
        %v1041 = vunpack.c.0.s8 %v1040
        %v1042 = vperm.slane %v1038, %v1041
        %v1043 = vrot.slane %v1042, 4
        %v1044 = vsel %vm796, %v1043, %v1036
        %v1046 = vunpack.c.l.s4 1934713408
        %v1047 = vunpack.c.0.s8 %v1046
        %v1048 = vperm.slane %v1044, %v1047
        %v1049 = vrot.slane %v1048, 4
        %v1050 = vsel %vm796, 0, %v1049
        %v1053 = vpack.i.b16 %v1048, %v1029
        %v1054 = vshrl.u32 %v1029, 16
        %v1055 = vshrl.u32 %v1048, 16
        %v1056 = vpack.i.b16 %v1055, %v1054
        %v1059 = vpack.i.b16 %v1050, %v1031
        %v1060 = vshrl.u32 %v1031, 16
        %v1061 = vshrl.u32 %v1050, 16
        %v1062 = vpack.i.b16 %v1061, %v1060
        %v1063 = vld [vmem:[#allocation2] sm:$0xf]
        %v1064 = vld [vmem:[#allocation2 + $0x4] sm:$0xf]
        %v1065 = vld [vmem:[#allocation2 + $0x8] sm:$0xf]
        %v1066 = vld [vmem:[#allocation2 + $0xc] sm:$0xf]
        %vm1067 = vcmask 64512
        %v1069 = vsel %vm1067, %v1063, 0
        %v1072 = vsel %vm1067, %v878, 0
        %1074 = vmatpush.bf16.xpose.msra.mxu0 0
        %1075 = vmatpush.bf16.xpose.msra.mxu0 0
        %1076 = vmatpush.bf16.xpose.msra.mxu0 0
        %1077 = vmatpush.bf16.xpose.msra.mxu0 0
        %1078 = vmatpush.bf16.xpose.msra.mxu0 0
        %1079 = vmatpush.bf16.xpose.msra.mxu0 0
        %1080 = vmatpush.bf16.xpose.msra.mxu0 0
        %1081 = vmatpush.bf16.xpose.msra.mxu0 %v1072
        %1082 = vmatmul.bf16.gmra.mxu0 %v1069
        %v1083 = vpop.f32.mrf.mxu0
        %v1084 = vadd.f32 0.0, %v1083
        %v1085 = vpop.f32.mrf.mxu0
        %1086 = vdwg.mxu0
        %v1088 = vsel %vm1067, %v1064, 0
        %v1091 = vsel %vm1067, %v881, 0
        %1093 = vmatpush.bf16.xpose.msra.mxu0 0
        %1094 = vmatpush.bf16.xpose.msra.mxu0 0
        %1095 = vmatpush.bf16.xpose.msra.mxu0 0
        %1096 = vmatpush.bf16.xpose.msra.mxu0 0
        %1097 = vmatpush.bf16.xpose.msra.mxu0 0
        %1098 = vmatpush.bf16.xpose.msra.mxu0 0
        %1099 = vmatpush.bf16.xpose.msra.mxu0 0
        %1100 = vmatpush.bf16.xpose.msra.mxu0 %v1091
        %1101 = vmatmul.bf16.gmra.mxu0 %v1088
        %v1102 = vpop.f32.mrf.mxu0
        %v1103 = vadd.f32 0.0, %v1102
        %v1104 = vpop.f32.mrf.mxu0
        %1105 = vdwg.mxu0
        %v1107 = vsel %vm1067, %v1065, 0
        %v1110 = vsel %vm1067, %v884, 0
        %1112 = vmatpush.bf16.xpose.msra.mxu0 0
        %1113 = vmatpush.bf16.xpose.msra.mxu0 0
        %1114 = vmatpush.bf16.xpose.msra.mxu0 0
        %1115 = vmatpush.bf16.xpose.msra.mxu0 0
        %1116 = vmatpush.bf16.xpose.msra.mxu0 0
        %1117 = vmatpush.bf16.xpose.msra.mxu0 0
        %1118 = vmatpush.bf16.xpose.msra.mxu0 0
        %1119 = vmatpush.bf16.xpose.msra.mxu0 %v1110
        %1120 = vmatmul.bf16.gmra.mxu0 %v1107
        %v1121 = vpop.f32.mrf.mxu0
        %v1122 = vadd.f32 0.0, %v1121
        %v1123 = vpop.f32.mrf.mxu0
        %1124 = vdwg.mxu0
        %v1126 = vsel %vm1067, %v1066, 0
        %v1129 = vsel %vm1067, %v887, 0
        %1131 = vmatpush.bf16.xpose.msra.mxu0 0
        %1132 = vmatpush.bf16.xpose.msra.mxu0 0
        %1133 = vmatpush.bf16.xpose.msra.mxu0 0
        %1134 = vmatpush.bf16.xpose.msra.mxu0 0
        %1135 = vmatpush.bf16.xpose.msra.mxu0 0
        %1136 = vmatpush.bf16.xpose.msra.mxu0 0
        %1137 = vmatpush.bf16.xpose.msra.mxu0 0
        %1138 = vmatpush.bf16.xpose.msra.mxu0 %v1129
        %1139 = vmatmul.bf16.gmra.mxu0 %v1126
        %v1140 = vpop.f32.mrf.mxu0
        %v1141 = vadd.f32 0.0, %v1140
        %v1142 = vpop.f32.mrf.mxu0
        %1143 = vdwg.mxu0
        %v1144 = vld [vmem:[#allocation3] sm:$0xff]
        %v1145 = vld [vmem:[#allocation3 + $0x8] sm:$0xff]
        %v1146 = vld [vmem:[#allocation3 + $0x10] sm:$0xff]
        %v1147 = vld [vmem:[#allocation3 + $0x18] sm:$0xff]
        %v1148 = vsel %vm1067, %v1084, -inf
        %1149 = vmax.xlane.f32.xlu0 %v1148
        %v1150 = vpop.xlane.xlu0 %1149
        %v1151 = vsel %vm1067, %v1103, -inf
        %1152 = vmax.xlane.f32.xlu0 %v1151
        %v1153 = vpop.xlane.xlu0 %1152
        %v1154 = vsel %vm1067, %v1122, -inf
        %1155 = vmax.xlane.f32.xlu0 %v1154
        %v1156 = vpop.xlane.xlu0 %1155
        %v1157 = vsel %vm1067, %v1141, -inf
        %1158 = vmax.xlane.f32.xlu0 %v1157
        %v1159 = vpop.xlane.xlu0 %1158
        %v1160 = vmax.f32 %v1144, %v1150
        %v1161 = vmax.f32 %v1145, %v1153
        %v1162 = vmax.f32 %v1146, %v1156
        %v1163 = vmax.f32 %v1147, %v1159
        %v1164 = vsub.f32 %v1144, %v1160
        %v1165 = vsub.f32 %v1145, %v1161
        %v1166 = vsub.f32 %v1146, %v1162
        %v1167 = vsub.f32 %v1147, %v1163
        %v1168 = vmul.f32 %v1164, 1.442695
        %v1169 = vpow.pop %v1168
        %v1170 = vmul.f32 %v1165, 1.442695
        %v1171 = vpow.pop %v1170
        %v1172 = vmul.f32 %v1166, 1.442695
        %v1173 = vpow.pop %v1172
        %v1174 = vmul.f32 %v1167, 1.442695
        %v1175 = vpow.pop %v1174
        %1177 = vset.pattern.permute.xlu0 0
        %1178 = vperm.xlu0 %1177, %v1160
        %v1179 = vpop.permute.xlu0 %1178
        %1182 = vset.pattern.permute.xlu0 0
        %1183 = vperm.xlu0 %1182, %v1161
        %v1184 = vpop.permute.xlu0 %1183
        %1187 = vset.pattern.permute.xlu0 0
        %1188 = vperm.xlu0 %1187, %v1162
        %v1189 = vpop.permute.xlu0 %1188
        %1192 = vset.pattern.permute.xlu0 0
        %1193 = vperm.xlu0 %1192, %v1163
        %v1194 = vpop.permute.xlu0 %1193
        %v1196 = vsub.f32 %v1084, %v1179
        %v1197 = vsub.f32 %v1103, %v1184
        %v1198 = vsub.f32 %v1122, %v1189
        %v1199 = vsub.f32 %v1141, %v1194
        %v1200 = vmul.f32 %v1196, 1.442695
        %v1201 = vpow.pop %v1200
        %v1202 = vmul.f32 %v1197, 1.442695
        %v1203 = vpow.pop %v1202
        %v1204 = vmul.f32 %v1198, 1.442695
        %v1205 = vpow.pop %v1204
        %v1206 = vmul.f32 %v1199, 1.442695
        %v1207 = vpow.pop %v1206
        %v1208 = vld [vmem:[#allocation4] sm:$0xff]
        %v1209 = vld [vmem:[#allocation4 + $0x8] sm:$0xff]
        %v1210 = vld [vmem:[#allocation4 + $0x10] sm:$0xff]
        %v1211 = vld [vmem:[#allocation4 + $0x18] sm:$0xff]
        %v1212 = vmul.f32 %v1169, %v1208
        %v1213 = vmul.f32 %v1171, %v1209
        %v1214 = vmul.f32 %v1173, %v1210
        %v1215 = vmul.f32 %v1175, %v1211
        %v1216 = vsel %vm1067, %v1201, 0.0
        %1217 = vadd.xlane.f32.xlu0 %v1216
        %v1218 = vpop.xlane.xlu0 %1217
        %v1219 = vsel %vm1067, %v1203, 0.0
        %1220 = vadd.xlane.f32.xlu0 %v1219
        %v1221 = vpop.xlane.xlu0 %1220
        %v1222 = vsel %vm1067, %v1205, 0.0
        %1223 = vadd.xlane.f32.xlu0 %v1222
        %v1224 = vpop.xlane.xlu0 %1223
        %v1225 = vsel %vm1067, %v1207, 0.0
        %1226 = vadd.xlane.f32.xlu0 %v1225
        %v1227 = vpop.xlane.xlu0 %1226
        %v1228 = vadd.f32 %v1212, %v1218
        %v1229 = vadd.f32 %v1213, %v1221
        %v1230 = vadd.f32 %v1214, %v1224
        %v1231 = vadd.f32 %v1215, %v1227
        %vm1232 = vcmask 7168
        %1233 = vst.msk [vmem:[#allocation4] sm:$0xff] %vm1232, %v1228
        %1234 = vst.msk [vmem:[#allocation4 + $0x8] sm:$0xff] %vm1232, %v1229
        %1235 = vst.msk [vmem:[#allocation4 + $0x10] sm:$0xff] %vm1232, %v1230
        %1236 = vst.msk [vmem:[#allocation4 + $0x18] sm:$0xff] %vm1232, %v1231
        %v1237 = vld [vmem:[#allocation5] sm:$0xff]
        %v1238 = vld [vmem:[#allocation5 + $0x8] sm:$0xff]
        %v1239 = vld [vmem:[#allocation5 + $0x10] sm:$0xff]
        %v1240 = vld [vmem:[#allocation5 + $0x18] sm:$0xff]
        %1242 = vset.pattern.permute.xlu0 0
        %1243 = vperm.xlu0 %1242, %v1169
        %v1244 = vpop.permute.xlu0 %1243
        %1247 = vset.pattern.permute.xlu0 0
        %1248 = vperm.xlu0 %1247, %v1171
        %v1249 = vpop.permute.xlu0 %1248
        %1252 = vset.pattern.permute.xlu0 0
        %1253 = vperm.xlu0 %1252, %v1173
        %v1254 = vpop.permute.xlu0 %1253
        %1257 = vset.pattern.permute.xlu0 0
        %1258 = vperm.xlu0 %1257, %v1175
        %v1259 = vpop.permute.xlu0 %1258
        %v1261 = vmul.f32 %v1244, %v1237
        %v1262 = vmul.f32 %v1249, %v1238
        %v1263 = vmul.f32 %v1254, %v1239
        %v1264 = vmul.f32 %v1259, %v1240
        %v1265 = vpack.c.bf16 %v1201, %v1201
        %v1266 = vpack.c.bf16 %v1203, %v1203
        %v1267 = vpack.c.bf16 %v1205, %v1205
        %v1268 = vpack.c.bf16 %v1207, %v1207
        %v1270 = vsel %vm1067, %v1265, 0
        %vm1272 = vcmask 1043456
        %v1274 = vsel %vm1272, %v1053, 0
        %1276 = vmatpush.bf16.msra.mxu0 0
        %1277 = vmatpush.bf16.msra.mxu0 0
        %1278 = vmatpush.bf16.msra.mxu0 0
        %1279 = vmatpush.bf16.msra.mxu0 0
        %1280 = vmatpush.bf16.msra.mxu0 0
        %1281 = vmatpush.bf16.msra.mxu0 0
        %1282 = vmatpush.bf16.msra.mxu0 0
        %1283 = vmatpush.bf16.msra.mxu0 %v1274
        %1284 = vmatmul.bf16.gmra.mxu0 %v1270
        %v1285 = vpop.f32.mrf.mxu0
        %v1286 = vadd.f32 0.0, %v1285
        %v1287 = vpop.f32.mrf.mxu0
        %1288 = vdwg.mxu0
        %v1290 = vsel %vm1067, %v1266, 0
        %v1293 = vsel %vm1272, %v1056, 0
        %1295 = vmatpush.bf16.msra.mxu0 0
        %1296 = vmatpush.bf16.msra.mxu0 0
        %1297 = vmatpush.bf16.msra.mxu0 0
        %1298 = vmatpush.bf16.msra.mxu0 0
        %1299 = vmatpush.bf16.msra.mxu0 0
        %1300 = vmatpush.bf16.msra.mxu0 0
        %1301 = vmatpush.bf16.msra.mxu0 0
        %1302 = vmatpush.bf16.msra.mxu0 %v1293
        %1303 = vmatmul.bf16.gmra.mxu0 %v1290
        %v1304 = vpop.f32.mrf.mxu0
        %v1305 = vadd.f32 0.0, %v1304
        %v1306 = vpop.f32.mrf.mxu0
        %1307 = vdwg.mxu0
        %v1309 = vsel %vm1067, %v1267, 0
        %v1312 = vsel %vm1272, %v1059, 0
        %1314 = vmatpush.bf16.msra.mxu0 0
        %1315 = vmatpush.bf16.msra.mxu0 0
        %1316 = vmatpush.bf16.msra.mxu0 0
        %1317 = vmatpush.bf16.msra.mxu0 0
        %1318 = vmatpush.bf16.msra.mxu0 0
        %1319 = vmatpush.bf16.msra.mxu0 0
        %1320 = vmatpush.bf16.msra.mxu0 0
        %1321 = vmatpush.bf16.msra.mxu0 %v1312
        %1322 = vmatmul.bf16.gmra.mxu0 %v1309
        %v1323 = vpop.f32.mrf.mxu0
        %v1324 = vadd.f32 0.0, %v1323
        %v1325 = vpop.f32.mrf.mxu0
        %1326 = vdwg.mxu0
        %v1328 = vsel %vm1067, %v1268, 0
        %v1331 = vsel %vm1272, %v1062, 0
        %1333 = vmatpush.bf16.msra.mxu0 0
        %1334 = vmatpush.bf16.msra.mxu0 0
        %1335 = vmatpush.bf16.msra.mxu0 0
        %1336 = vmatpush.bf16.msra.mxu0 0
        %1337 = vmatpush.bf16.msra.mxu0 0
        %1338 = vmatpush.bf16.msra.mxu0 0
        %1339 = vmatpush.bf16.msra.mxu0 0
        %1340 = vmatpush.bf16.msra.mxu0 %v1331
        %1341 = vmatmul.bf16.gmra.mxu0 %v1328
        %v1342 = vpop.f32.mrf.mxu0
        %v1343 = vadd.f32 0.0, %v1342
        %v1344 = vpop.f32.mrf.mxu0
        %1345 = vdwg.mxu0
        %v1346 = vadd.f32 %v1261, %v1286
        %v1347 = vadd.f32 %v1262, %v1305
        %v1348 = vadd.f32 %v1263, %v1324
        %v1349 = vadd.f32 %v1264, %v1343
        %1350 = vst.msk [vmem:[#allocation5] sm:$0xff] %vm1067, %v1346
        %1351 = vst.msk [vmem:[#allocation5 + $0x8] sm:$0xff] %vm1067, %v1347
        %1352 = vst.msk [vmem:[#allocation5 + $0x10] sm:$0xff] %vm1067, %v1348
        %1353 = vst.msk [vmem:[#allocation5 + $0x18] sm:$0xff] %vm1067, %v1349
        %1354 = vst.msk [vmem:[#allocation3] sm:$0xff] %vm1232, %v1160
        %1355 = vst.msk [vmem:[#allocation3 + $0x8] sm:$0xff] %vm1232, %v1161
        %1356 = vst.msk [vmem:[#allocation3 + $0x10] sm:$0xff] %vm1232, %v1162
        %1357 = vst.msk [vmem:[#allocation3 + $0x18] sm:$0xff] %vm1232, %v1163
        // Predicated region
        $region89: #{tpu_custom_call.1} parent=59 // pred_check
          %p1358 = pneg %p498
        $region90: #{tpu_custom_call.1} parent=59 // pred_check_branch
          %1360 = sbr.rel (%p1358) target = $region92
        $region91: #{tpu_custom_call.1} parent=59 // pred_region
          %v1361 = vld [vmem:[#allocation5] sm:$0xff]
          %v1362 = vld [vmem:[#allocation5 + $0x8] sm:$0xff]
          %v1363 = vld [vmem:[#allocation5 + $0x10] sm:$0xff]
          %v1364 = vld [vmem:[#allocation5 + $0x18] sm:$0xff]
          %v1365 = vld [vmem:[#allocation4] sm:$0xff]
          %v1366 = vld [vmem:[#allocation4 + $0x8] sm:$0xff]
          %v1367 = vld [vmem:[#allocation4 + $0x10] sm:$0xff]
          %v1368 = vld [vmem:[#allocation4 + $0x18] sm:$0xff]
          %v1369 = vrcp.pop %v1365
          %v1370 = vrcp.pop %v1366
          %v1371 = vrcp.pop %v1367
          %v1372 = vrcp.pop %v1368
          %1374 = vset.pattern.permute.xlu0 0
          %1375 = vperm.xlu0 %1374, %v1369
          %v1376 = vpop.permute.xlu0 %1375
          %1379 = vset.pattern.permute.xlu0 0
          %1380 = vperm.xlu0 %1379, %v1370
          %v1381 = vpop.permute.xlu0 %1380
          %1384 = vset.pattern.permute.xlu0 0
          %1385 = vperm.xlu0 %1384, %v1371
          %v1386 = vpop.permute.xlu0 %1385
          %1389 = vset.pattern.permute.xlu0 0
          %1390 = vperm.xlu0 %1389, %v1372
          %v1391 = vpop.permute.xlu0 %1390
          %v1393 = vmul.f32 %v1361, %v1376
          %v1394 = vmul.f32 %v1362, %v1381
          %v1395 = vmul.f32 %v1363, %v1386
          %v1396 = vmul.f32 %v1364, %v1391
          %v1397 = vpack.c.bf16 %v1393, %v1393
          %v1398 = vpack.c.bf16 %v1394, %v1394
          %v1399 = vpack.c.bf16 %v1395, %v1395
          %v1400 = vpack.c.bf16 %v1396, %v1396
          %v1403 = vpack.i.b16 %v1398, %v1397
          %v1404 = vshrl.u32 %v1397, 16
          %v1405 = vshrl.u32 %v1398, 16
          %v1406 = vpack.i.b16 %v1405, %v1404
          %v1409 = vpack.i.b16 %v1400, %v1399
          %v1410 = vshrl.u32 %v1399, 16
          %v1411 = vshrl.u32 %v1400, 16
          %v1412 = vpack.i.b16 %v1411, %v1410
          %v1415 = vunpack.c.l.s4 1983009808
          %v1416 = vunpack.c.0.s8 %v1415
          %v1417 = vperm.slane %v1403, %v1416
          %v1420 = vunpack.c.l.s4 1983009808
          %v1421 = vunpack.c.0.s8 %v1420
          %v1422 = vperm.slane %v1409, %v1421
          %v1423 = vrot.slane %v1422, 4
          %v1424 = vsel %vm796, %v1423, %v1417
          %v1425 = vrot.slane %v1417, 4
          %v1426 = vsel %vm796, %v1422, %v1425
          %v1428 = vunpack.c.l.s4 1934713408
          %v1429 = vunpack.c.0.s8 %v1428
          %v1430 = vperm.slane %v1424, %v1429
          %v1432 = vunpack.c.l.s4 1934713408
          %v1433 = vunpack.c.0.s8 %v1432
          %v1434 = vperm.slane %v1426, %v1433
          %v1435 = vrot.slane %v1430, 4
          %v1436 = vsel %vm796, 0, %v1435
          %v1437 = vrot.slane %v1434, 4
          %v1438 = vsel %vm796, 0, %v1437
          %v1441 = vunpack.c.l.s4 1983009808
          %v1442 = vunpack.c.0.s8 %v1441
          %v1443 = vperm.slane %v1406, %v1442
          %v1446 = vunpack.c.l.s4 1983009808
          %v1447 = vunpack.c.0.s8 %v1446
          %v1448 = vperm.slane %v1412, %v1447
          %v1449 = vrot.slane %v1448, 4
          %v1450 = vsel %vm796, %v1449, %v1443
          %v1451 = vrot.slane %v1443, 4
          %v1452 = vsel %vm796, %v1448, %v1451
          %v1454 = vunpack.c.l.s4 1934713408
          %v1455 = vunpack.c.0.s8 %v1454
          %v1456 = vperm.slane %v1450, %v1455
          %v1458 = vunpack.c.l.s4 1934713408
          %v1459 = vunpack.c.0.s8 %v1458
          %v1460 = vperm.slane %v1452, %v1459
          %v1461 = vrot.slane %v1456, 4
          %v1462 = vsel %vm796, 0, %v1461
          %v1463 = vrot.slane %v1460, 4
          %v1464 = vsel %vm796, 0, %v1463
          %v1465 = vsel %vm796, %v1437, %v1430
          %v1467 = vunpack.c.l.s4 1983009808
          %v1468 = vunpack.c.0.s8 %v1467
          %v1469 = vperm.slane %v1465, %v1468
          %v1470 = vrot.slane %v1438, 4
          %v1471 = vsel %vm796, %v1470, %v1436
          %v1473 = vunpack.c.l.s4 1983009808
          %v1474 = vunpack.c.0.s8 %v1473
          %v1475 = vperm.slane %v1471, %v1474
          %v1476 = vrot.slane %v1475, 4
          %v1477 = vsel %vm796, %v1476, %v1469
          %v1479 = vunpack.c.l.s4 1934713408
          %v1480 = vunpack.c.0.s8 %v1479
          %v1481 = vperm.slane %v1477, %v1480
          %v1482 = vrot.slane %v1481, 4
          %v1483 = vsel %vm796, 0, %v1482
          %v1484 = vsel %vm796, %v1463, %v1456
          %v1486 = vunpack.c.l.s4 1983009808
          %v1487 = vunpack.c.0.s8 %v1486
          %v1488 = vperm.slane %v1484, %v1487
          %v1489 = vrot.slane %v1464, 4
          %v1490 = vsel %vm796, %v1489, %v1462
          %v1492 = vunpack.c.l.s4 1983009808
          %v1493 = vunpack.c.0.s8 %v1492
          %v1494 = vperm.slane %v1490, %v1493
          %v1495 = vrot.slane %v1494, 4
          %v1496 = vsel %vm796, %v1495, %v1488
          %v1498 = vunpack.c.l.s4 1934713408
          %v1499 = vunpack.c.0.s8 %v1498
          %v1500 = vperm.slane %v1496, %v1499
          %v1501 = vrot.slane %v1500, 4
          %v1502 = vsel %vm796, 0, %v1501
          %v1505 = vpack.i.b16 %v1500, %v1481
          %v1506 = vshrl.u32 %v1481, 16
          %v1507 = vshrl.u32 %v1500, 16
          %v1508 = vpack.i.b16 %v1507, %v1506
          %v1511 = vpack.i.b16 %v1502, %v1483
          %v1512 = vshrl.u32 %v1483, 16
          %v1513 = vshrl.u32 %v1502, 16
          %v1514 = vpack.i.b16 %v1513, %v1512
          %v1515 = vunpack.c.l.b16 %v1508
          %v1516 = vpack.c.b16 %v1515, %v1515
          %1517 = vrot.lane.b32.xlu0 %v1516, 8
          %v1518 = vpop.permute.xlu0 %1517
          %v1519 = vunpack.c.l.b16 %v1511
          %v1520 = vpack.c.b16 %v1519, %v1519
          %1521 = vrot.lane.b32.xlu0 %v1520, 16
          %v1522 = vpop.permute.xlu0 %1521
          %v1523 = vunpack.c.l.b16 %v1514
          %v1524 = vpack.c.b16 %v1523, %v1523
          %1525 = vrot.lane.b32.xlu0 %v1524, 24
          %v1526 = vpop.permute.xlu0 %1525
          %v1529 = vsel %vm1067, %v1505, %v1518
          %vm1530 = vcmask 130048
          %v1532 = vsel %vm1530, %v1529, %v1522
          %vm1533 = vcmask 195584
          %v1535 = vsel %vm1533, %v1532, %v1526
          %v1536 = vld [vmem:[#allocation15] sm:$0xf]
          %v1537 = vld [vmem:[#allocation15 + $0x4] sm:$0xf]
          %v1538 = vld [vmem:[#allocation15 + $0x8] sm:$0xf]
          %v1539 = vld [vmem:[#allocation15 + $0xc] sm:$0xf]
          %v1540 = vld [vmem:[%s9] sm:$0x1]
          %v1542 = vperm.slane %v1540, 0
          %v1548 = vunpack.c.l.b16 %v1536
          %v1549 = vunpack.c.l.b16 %v1537
          %v1550 = vunpack.c.l.b16 %v1538
          %v1551 = vunpack.c.l.b16 %v1539
          %v1552 = vpack.c.b16 %v1549, %v1548
          %v1553 = vpack.c.b16 %v1551, %v1550
          %v1556 = vsel %vm728, %v1535, 0
          %1558 = vmatpush.bf16.msra.mxu0 0
          %1559 = vmatpush.bf16.msra.mxu0 0
          %1560 = vmatpush.bf16.msra.mxu0 0
          %1561 = vmatpush.bf16.msra.mxu0 0
          %1562 = vmatpush.bf16.msra.mxu0 0
          %1563 = vmatpush.bf16.msra.mxu0 0
          %1564 = vmatpush.bf16.msra.mxu0 %v1553
          %1565 = vmatpush.bf16.msra.mxu0 %v1552
          %1566 = vmatmul.bf16.gmra.mxu0 %v1556
          %v1567 = vpop.f32.mrf.mxu0
          %v1568 = vadd.f32 %v1542, %v1567
          %v1569 = vpop.f32.mrf.mxu0
          %1570 = vdwg.mxu0
          %1571 = vst.msk [vmem:[%s496] sm:$0xff] %vm728, %v1568
        $region92: #{tpu_custom_call.1} parent=59 // pred_fallthru
          _
        %s1572 = sand.u32 %s274, 1
        %s1573 = scalar_lea.sflag [#allocation8], %s1572
        %s1574 = sand.u32 %s274, 1
        %s1575 = smul.addr %s1574, 8
        %s1576 = scalar_lea.vmem [#allocation17], %s1575
        // Predicated region
        $region93: #{tpu_custom_call.1} parent=59 // pred_check
          %p1577 = pneg %p284
        $region94: #{tpu_custom_call.1} parent=59 // pred_check_branch
          %1579 = sbr.rel (%p1577) target = $region96
        $region95: #{tpu_custom_call.1} parent=59 // pred_region
          %1581 = vsyncadd %s1573, 0
          %s1582 = smul.addr %s36, 8
          %s1583 = scalar_lea.hbm %s10, %s1582
          %s1585 = sshll.u32 %s1576, 4
          %s1586 = int_to_ptr.vmem [resolvable:$true] %s1585
          %s1587 = sshll.u32 %s1583, 4
          %s1588 = int_to_ptr.hbm [resolvable:$true] %s1587
          %1590 = dma.vmem_to_hbm [thread:$0]  %s1586, 128, %s1588, %s1573
        $region96: #{tpu_custom_call.1} parent=59 // pred_fallthru
          _
      $region60: #{tpu_custom_call.1} parent=5 // pred_fallthru
        _
      %p1591 = scmp.le.s32.totalorder 2, %s27
      // Predicated region
      $region97: #{tpu_custom_call.1} parent=5 // pred_check
        %p1592 = pneg %p1591
      $region98: #{tpu_custom_call.1} parent=5 // pred_check_branch
        %1594 = sbr.rel (%p1592) target = $region100
      $region99: #{tpu_custom_call.1} parent=5 // pred_region
        %s1595 = ssub.s32 %s27, 2
        // Predicated region
        $region101: #{tpu_custom_call.1} parent=99 // pred_check
          %p1596 = pneg %p290
        $region102: #{tpu_custom_call.1} parent=99 // pred_check_branch
          %1598 = sbr.rel (%p1596) target = $region104
        $region103: #{tpu_custom_call.1} parent=99 // pred_region
          %s1599 = sand.u32 %s275, 1
          %s1600 = scalar_lea.sflag [#allocation8], %s1599
          %s1601 = sand.u32 %s275, 1
          %s1602 = smul.addr %s1601, 8
          %s1603 = scalar_lea.vmem [#allocation17], %s1602
          %1605 = dma.done %s1600, 128
        $region104: #{tpu_custom_call.1} parent=99 // pred_fallthru
          _
      $region100: #{tpu_custom_call.1} parent=5 // pred_fallthru
        _
    $region6: #{tpu_custom_call.1} parent=1 // loop_footer
      %s31 = sadd.s32 1, %s27
    $region7: #{tpu_custom_call.1} parent=1 // loop_footer_branch
      %26 = sbr.rel target = $region3
    $region8: #{tpu_custom_call.1} parent=1 // loop_exit
      _
    %1606 = vsyncpa [#allocation7], 1
    %s1607 = scalar_lea.sflag [#allocation7], 1
    %1608 = vsyncpa %s1607, 1
    %1609 = vsyncpa [#allocation10], 1
    %s1610 = scalar_lea.sflag [#allocation10], 1
    %1611 = vsyncpa %s1610, 1
    %1612 = vsyncpa [#allocation13], 1
    %1613 = vsyncpa [#allocation16], 1
    %1614 = vsyncpa [#allocation8], 1
    %s1615 = scalar_lea.sflag [#allocation8], 1
    %1616 = vsyncpa %s1615, 1

// kernel: tpu_custom_call.1
$region0: #{tpu_custom_call.1}
  #allocation0 [shape = 'u32[]', space=smem, size = 0x4, offset = 0x4, fixed_abs, tag = 'smem constant byte address 0x4 - core index']
  #allocation1 [shape = 'u32[72,128]{1,0:T(1,128)}', space=vmem, size = 0x9000, scoped, tag = 'internal scratch']
  #allocation2 [shape = 'bf16[4,8,8]{2,1,0:T(8,128)(2,1)}', space=vmem, size = 0x2000, scoped, tag = 'scratch operand']
  #allocation3 [shape = 'f32[4,8,1]{2,1,0:T(8,128)}', space=vmem, size = 0x4000, scoped, tag = 'scratch operand']
  #allocation4 [shape = 'f32[4,8,1]{2,1,0:T(8,128)}', space=vmem, size = 0x4000, scoped, tag = 'scratch operand']
  #allocation5 [shape = 'f32[4,8,8]{2,1,0:T(8,128)}', space=vmem, size = 0x4000, scoped, tag = 'scratch operand']
  %s0 = inlined_call_operand.hbm [shape: bf16[2,8,32], index: 0, kind: input, shape index: {}]
  %s1 = inlined_call_operand.hbm [shape: bf16[2,8,32], index: 1, kind: input, shape index: {}]
  %s2 = inlined_call_operand.hbm [shape: bf16[32,32], index: 2, kind: input, shape index: {}]
  %s3 = inlined_call_operand.vmem [shape: f32[1,32], index: 3, kind: input, shape index: {}]
  %s4 = inlined_call_operand.hbm [shape: bf16[32,32], index: 4, kind: input, shape index: {}]
  %s5 = inlined_call_operand.vmem [shape: f32[1,32], index: 5, kind: input, shape index: {}]
  %s6 = inlined_call_operand.hbm [shape: bf16[32,32], index: 6, kind: input, shape index: {}]
  %s7 = inlined_call_operand.vmem [shape: f32[1,32], index: 7, kind: input, shape index: {}]
  %s8 = inlined_call_operand.hbm [shape: bf16[32,32], index: 8, kind: input, shape index: {}]
  %s9 = inlined_call_operand.vmem [shape: f32[1,32], index: 9, kind: input, shape index: {}]
  %s10 = inlined_call_operand.hbm [shape: f32[2,8,32], index: 10, kind: output, shape index: {}]
  %s11 = sld [smem:[#allocation0]]
  $region105: #{tpu_custom_call.1} parent=0
    _
  %s13 = ssub.s32 1, %s11
  %s14 = scalar_select 0, %s13, %s11
  $region1: #{tpu_custom_call.1} parent=0
    #allocation6 [shape = 'u8[4096]{0}', space=vmem, size = 0x1000, scoped, tag = 'input window, operand 0']
    #allocation7 [shape = 's32[2]{0}', space=sflag, size = 0x8, scoped, tag = 'scoped memory for tpu_custom_call.1']
    #allocation8 [shape = 's32[2]{0}', space=sflag, size = 0x8, scoped, tag = 'scoped memory for tpu_custom_call.1']
    #allocation9 [shape = 'u8[4096]{0}', space=vmem, size = 0x1000, scoped, tag = 'input window, operand 1']
    #allocation10 [shape = 's32[2]{0}', space=sflag, size = 0x8, scoped, tag = 'scoped memory for tpu_custom_call.1']
    #allocation11 [shape = 'u8[8192]{0}', space=vmem, size = 0x2000, scoped, tag = 'input window, operand 2, single buffered']
    #allocation12 [shape = 'u8[8192]{0}', space=vmem, size = 0x2000, scoped, tag = 'input window, operand 4, single buffered']
    #allocation13 [shape = 's32[1]{0}', space=sflag, size = 0x4, scoped, tag = 'scoped memory for tpu_custom_call.1']
    #allocation14 [shape = 'u8[8192]{0}', space=vmem, size = 0x2000, scoped, tag = 'input window, operand 6, single buffered']
    #allocation15 [shape = 'u8[8192]{0}', space=vmem, size = 0x2000, scoped, tag = 'input window, operand 8, single buffered']
    #allocation16 [shape = 's32[1]{0}', space=sflag, size = 0x4, scoped, tag = 'scoped memory for tpu_custom_call.1']
    #allocation17 [shape = 'u8[8192]{0}', space=vmem, size = 0x2000, scoped, tag = 'output window, operand 0']
    %15 = vsyncpa [#allocation7], 0
    %s16 = scalar_lea.sflag [#allocation7], 1
    %17 = vsyncpa %s16, 0
    %18 = vsyncpa [#allocation10], 0
    %s19 = scalar_lea.sflag [#allocation10], 1
    %20 = vsyncpa %s19, 0
    %21 = vsyncpa [#allocation13], 0
    %22 = vsyncpa [#allocation16], 0
    %23 = vsyncpa [#allocation8], 0
    %s24 = scalar_lea.sflag [#allocation8], 1
    %25 = vsyncpa %s24, 0
    loop: start=0, step=1, limit=4
    $region2: #{tpu_custom_call.1} parent=1 // loop_pre_header
      _
    $region3: #{tpu_custom_call.1} parent=1 // loop_header
      %s27 = sphi 0, %s31
      %p28 = scmp.ge.s32.totalorder %s27, 4
      %s34 = sphi 0, %s46
      %s35 = sphi 0, %s42
      %s36 = sphi 0, %s34
      %s37 = sphi 0, %s35
      %s38 = sphi 0, %s36
      %s39 = sphi 0, %s37
      %s49 = sphi 0, %s51
      %s52 = sphi 0, %s49
      %s53 = sphi 0, %s52
      %s69 = sphi 0, %s53
      %s77 = sphi 0, %s79
      %s80 = sphi 0, %s77
      %s81 = sphi 0, %s80
      %s97 = sphi 0, %s81
      %s101 = sphi 0, %s101
      %s103 = sphi 0, %s101
      %s104 = sphi 0, %s103
      %s118 = sphi 0, %s104
      %s122 = sphi 0, %s122
      %s124 = sphi 0, %s122
      %s125 = sphi 0, %s124
      %s139 = sphi 0, %s125
      %s143 = sphi 0, %s143
      %s145 = sphi 0, %s143
      %s146 = sphi 0, %s145
      %s160 = sphi 0, %s146
      %s164 = sphi 0, %s164
      %s166 = sphi 0, %s164
      %s167 = sphi 0, %s166
      %s181 = sphi 0, %s167
      %s185 = sphi 0, %s185
      %s187 = sphi 0, %s185
      %s188 = sphi 0, %s187
      %s202 = sphi 0, %s188
      %s206 = sphi 0, %s206
      %s208 = sphi 0, %s206
      %s209 = sphi 0, %s208
      %s223 = sphi 0, %s209
      %s227 = sphi 0, %s227
      %s229 = sphi 0, %s227
      %s230 = sphi 0, %s229
      %s244 = sphi 0, %s230
      %s248 = sphi 0, %s248
      %s250 = sphi 0, %s248
      %s251 = sphi 0, %s250
      %s265 = sphi 0, %s251
      %s271 = sphi 0, %s273
      %s274 = sphi 0, %s271
      %s275 = sphi 0, %s274
      %s291 = sphi 0, %s275
    $region4: #{tpu_custom_call.1} parent=1 // loop_header_branch
      %30 = sbr.rel (%p28) target = $region8
    $region5: #{tpu_custom_call.1} parent=1 // loop_body
      %s32 = ssub.s32 %s27, 1
      %s33 = ssub.s32 %s27, 2
      %s40 = sadd.s32 1, %s35
      %p41 = scmp.ge.s32.totalorder %s40, 1
      %s42 = scalar_select %p41, 0, %s40
      %s43 = sadd.s32 1, %s34
      %s44 = scalar_select %p41, %s43, %s34
      %p45 = scmp.ge.s32.totalorder %s44, 2
      %s46 = scalar_select %p45, 0, %s44
      %s47 = ssub.s32 %s34, %s46
      %p48 = scmp.eq.s32.totalorder %s47, 0
      %s50 = sadd.s32 %s49, 1
      %s51 = scalar_select %p48, %s49, %s50
      %p54 = pneg %p48
      %p55 = scmp.eq.s32.totalorder %s27, 1
      %p56 = por %p54, %p55
      %p57 = scmp.ne.s32.totalorder %s49, %s52
      %p58 = scmp.eq.s32.totalorder %s27, 0
      %p59 = por %p57, %p58
      %p60 = scmp.ne.s32.totalorder %s49, %s52
      %p61 = scmp.eq.s32.totalorder %s32, 1
      %p62 = por %p60, %p61
      %p63 = scmp.ne.s32.totalorder %s52, %s53
      %p64 = scmp.eq.s32.totalorder %s32, 0
      %p65 = por %p63, %p64
      %p66 = scmp.ne.s32.totalorder %s52, %s53
      %p67 = scmp.eq.s32.totalorder %s33, 1
      %p68 = por %p66, %p67
      %p70 = scmp.ne.s32.totalorder %s53, %s69
      %p71 = scmp.eq.s32.totalorder %s33, 0
      %p72 = por %p70, %p71
      %s73 = ssub.s32 %s34, %s46
      %s74 = ssub.s32 %s35, %s42
      %s75 = sor.u32 %s73, %s74
      %p76 = scmp.eq.s32.totalorder %s75, 0
      %s78 = sadd.s32 %s77, 1
      %s79 = scalar_select %p76, %s77, %s78
      %p82 = pneg %p76
      %p83 = scmp.eq.s32.totalorder %s27, 1
      %p84 = por %p82, %p83
      %p85 = scmp.ne.s32.totalorder %s77, %s80
      %p86 = scmp.eq.s32.totalorder %s27, 0
      %p87 = por %p85, %p86
      %p88 = scmp.ne.s32.totalorder %s77, %s80
      %p89 = scmp.eq.s32.totalorder %s32, 1
      %p90 = por %p88, %p89
      %p91 = scmp.ne.s32.totalorder %s80, %s81
      %p92 = scmp.eq.s32.totalorder %s32, 0
      %p93 = por %p91, %p92
      %p94 = scmp.ne.s32.totalorder %s80, %s81
      %p95 = scmp.eq.s32.totalorder %s33, 1
      %p96 = por %p94, %p95
      %p98 = scmp.ne.s32.totalorder %s81, %s97
      %p99 = scmp.eq.s32.totalorder %s33, 0
      %p100 = por %p98, %p99
      %s102 = sadd.s32 %s101, 1
      %p105 = scmp.eq.s32.totalorder %s27, 1
      %p106 = scmp.ne.s32.totalorder %s101, %s103
      %p107 = scmp.eq.s32.totalorder %s27, 0
      %p108 = por %p106, %p107
      %p109 = scmp.ne.s32.totalorder %s101, %s103
      %p110 = scmp.eq.s32.totalorder %s32, 1
      %p111 = por %p109, %p110
      %p112 = scmp.ne.s32.totalorder %s103, %s104
      %p113 = scmp.eq.s32.totalorder %s32, 0
      %p114 = por %p112, %p113
      %p115 = scmp.ne.s32.totalorder %s103, %s104
      %p116 = scmp.eq.s32.totalorder %s33, 1
      %p117 = por %p115, %p116
      %p119 = scmp.ne.s32.totalorder %s104, %s118
      %p120 = scmp.eq.s32.totalorder %s33, 0
      %p121 = por %p119, %p120
      %s123 = sadd.s32 %s122, 1
      %p126 = scmp.eq.s32.totalorder %s27, 1
      %p127 = scmp.ne.s32.totalorder %s122, %s124
      %p128 = scmp.eq.s32.totalorder %s27, 0
      %p129 = por %p127, %p128
      %p130 = scmp.ne.s32.totalorder %s122, %s124
      %p131 = scmp.eq.s32.totalorder %s32, 1
      %p132 = por %p130, %p131
      %p133 = scmp.ne.s32.totalorder %s124, %s125
      %p134 = scmp.eq.s32.totalorder %s32, 0
      %p135 = por %p133, %p134
      %p136 = scmp.ne.s32.totalorder %s124, %s125
      %p137 = scmp.eq.s32.totalorder %s33, 1
      %p138 = por %p136, %p137
      %p140 = scmp.ne.s32.totalorder %s125, %s139
      %p141 = scmp.eq.s32.totalorder %s33, 0
      %p142 = por %p140, %p141
      %s144 = sadd.s32 %s143, 1
      %p147 = scmp.eq.s32.totalorder %s27, 1
      %p148 = scmp.ne.s32.totalorder %s143, %s145
      %p149 = scmp.eq.s32.totalorder %s27, 0
      %p150 = por %p148, %p149
      %p151 = scmp.ne.s32.totalorder %s143, %s145
      %p152 = scmp.eq.s32.totalorder %s32, 1
      %p153 = por %p151, %p152
      %p154 = scmp.ne.s32.totalorder %s145, %s146
      %p155 = scmp.eq.s32.totalorder %s32, 0
      %p156 = por %p154, %p155
      %p157 = scmp.ne.s32.totalorder %s145, %s146
      %p158 = scmp.eq.s32.totalorder %s33, 1
      %p159 = por %p157, %p158
      %p161 = scmp.ne.s32.totalorder %s146, %s160
      %p162 = scmp.eq.s32.totalorder %s33, 0
      %p163 = por %p161, %p162
      %s165 = sadd.s32 %s164, 1
      %p168 = scmp.eq.s32.totalorder %s27, 1
      %p169 = scmp.ne.s32.totalorder %s164, %s166
      %p170 = scmp.eq.s32.totalorder %s27, 0
      %p171 = por %p169, %p170
      %p172 = scmp.ne.s32.totalorder %s164, %s166
      %p173 = scmp.eq.s32.totalorder %s32, 1
      %p174 = por %p172, %p173
      %p175 = scmp.ne.s32.totalorder %s166, %s167
      %p176 = scmp.eq.s32.totalorder %s32, 0
      %p177 = por %p175, %p176
      %p178 = scmp.ne.s32.totalorder %s166, %s167
      %p179 = scmp.eq.s32.totalorder %s33, 1
      %p180 = por %p178, %p179
      %p182 = scmp.ne.s32.totalorder %s167, %s181
      %p183 = scmp.eq.s32.totalorder %s33, 0
      %p184 = por %p182, %p183
      %s186 = sadd.s32 %s185, 1
      %p189 = scmp.eq.s32.totalorder %s27, 1
      %p190 = scmp.ne.s32.totalorder %s185, %s187
      %p191 = scmp.eq.s32.totalorder %s27, 0
      %p192 = por %p190, %p191
      %p193 = scmp.ne.s32.totalorder %s185, %s187
      %p194 = scmp.eq.s32.totalorder %s32, 1
      %p195 = por %p193, %p194
      %p196 = scmp.ne.s32.totalorder %s187, %s188
      %p197 = scmp.eq.s32.totalorder %s32, 0
      %p198 = por %p196, %p197
      %p199 = scmp.ne.s32.totalorder %s187, %s188
      %p200 = scmp.eq.s32.totalorder %s33, 1
      %p201 = por %p199, %p200
      %p203 = scmp.ne.s32.totalorder %s188, %s202
      %p204 = scmp.eq.s32.totalorder %s33, 0
      %p205 = por %p203, %p204
      %s207 = sadd.s32 %s206, 1
      %p210 = scmp.eq.s32.totalorder %s27, 1
      %p211 = scmp.ne.s32.totalorder %s206, %s208
      %p212 = scmp.eq.s32.totalorder %s27, 0
      %p213 = por %p211, %p212
      %p214 = scmp.ne.s32.totalorder %s206, %s208
      %p215 = scmp.eq.s32.totalorder %s32, 1
      %p216 = por %p214, %p215
      %p217 = scmp.ne.s32.totalorder %s208, %s209
      %p218 = scmp.eq.s32.totalorder %s32, 0
      %p219 = por %p217, %p218
      %p220 = scmp.ne.s32.totalorder %s208, %s209
      %p221 = scmp.eq.s32.totalorder %s33, 1
      %p222 = por %p220, %p221
      %p224 = scmp.ne.s32.totalorder %s209, %s223
      %p225 = scmp.eq.s32.totalorder %s33, 0
      %p226 = por %p224, %p225
      %s228 = sadd.s32 %s227, 1
      %p231 = scmp.eq.s32.totalorder %s27, 1
      %p232 = scmp.ne.s32.totalorder %s227, %s229
      %p233 = scmp.eq.s32.totalorder %s27, 0
      %p234 = por %p232, %p233
      %p235 = scmp.ne.s32.totalorder %s227, %s229
      %p236 = scmp.eq.s32.totalorder %s32, 1
      %p237 = por %p235, %p236
      %p238 = scmp.ne.s32.totalorder %s229, %s230
      %p239 = scmp.eq.s32.totalorder %s32, 0
      %p240 = por %p238, %p239
      %p241 = scmp.ne.s32.totalorder %s229, %s230
      %p242 = scmp.eq.s32.totalorder %s33, 1
      %p243 = por %p241, %p242
      %p245 = scmp.ne.s32.totalorder %s230, %s244
      %p246 = scmp.eq.s32.totalorder %s33, 0
      %p247 = por %p245, %p246
      %s249 = sadd.s32 %s248, 1
      %p252 = scmp.eq.s32.totalorder %s27, 1
      %p253 = scmp.ne.s32.totalorder %s248, %s250
      %p254 = scmp.eq.s32.totalorder %s27, 0
      %p255 = por %p253, %p254
      %p256 = scmp.ne.s32.totalorder %s248, %s250
      %p257 = scmp.eq.s32.totalorder %s32, 1
      %p258 = por %p256, %p257
      %p259 = scmp.ne.s32.totalorder %s250, %s251
      %p260 = scmp.eq.s32.totalorder %s32, 0
      %p261 = por %p259, %p260
      %p262 = scmp.ne.s32.totalorder %s250, %s251
      %p263 = scmp.eq.s32.totalorder %s33, 1
      %p264 = por %p262, %p263
      %p266 = scmp.ne.s32.totalorder %s251, %s265
      %p267 = scmp.eq.s32.totalorder %s33, 0
      %p268 = por %p266, %p267
      %s269 = ssub.s32 %s34, %s46
      %p270 = scmp.eq.s32.totalorder %s269, 0
      %s272 = sadd.s32 %s271, 1
      %s273 = scalar_select %p270, %s271, %s272
      %p276 = pneg %p270
      %p277 = scmp.eq.s32.totalorder %s27, 1
      %p278 = por %p276, %p277
      %p279 = scmp.ne.s32.totalorder %s271, %s274
      %p280 = scmp.eq.s32.totalorder %s27, 0
      %p281 = por %p279, %p280
      %p282 = scmp.ne.s32.totalorder %s271, %s274
      %p283 = scmp.eq.s32.totalorder %s32, 1
      %p284 = por %p282, %p283
      %p285 = scmp.ne.s32.totalorder %s274, %s275
      %p286 = scmp.eq.s32.totalorder %s32, 0
      %p287 = por %p285, %p286
      %p288 = scmp.ne.s32.totalorder %s274, %s275
      %p289 = scmp.eq.s32.totalorder %s33, 1
      %p290 = por %p288, %p289
      %p292 = scmp.ne.s32.totalorder %s275, %s291
      %p293 = scmp.eq.s32.totalorder %s33, 0
      %p294 = por %p292, %p293
      %p295 = scmp.le.s32.totalorder 1, %s27
      %p296 = scmp.lt.s32.totalorder %s27, 3
      %p297 = pnand %p295, %p296
      %p298 = pneg %p297
      // Predicated region
      $region9: #{tpu_custom_call.1} parent=5 // pred_check
        _
      $region10: #{tpu_custom_call.1} parent=5 // pred_check_branch
        %300 = sbr.rel (%p297) target = $region12
      $region11: #{tpu_custom_call.1} parent=5 // pred_region
        %s301 = ssub.s32 %s27, 1
        // Predicated region
        $region13: #{tpu_custom_call.1} parent=11 // pred_check
          %p302 = pneg %p114
        $region14: #{tpu_custom_call.1} parent=11 // pred_check_branch
          %304 = sbr.rel (%p302) target = $region16
        $region15: #{tpu_custom_call.1} parent=11 // pred_region
          %306 = vsyncadd [#allocation10], 0
          %s307 = sshll.u32 %s2, 4
          %s308 = int_to_ptr.hbm [resolvable:$true] %s307
          %s309 = sshll.u32 [#allocation11], 4
          %s310 = int_to_ptr.vmem [resolvable:$true] %s309
          %315 = dma.hbm_to_vmem [thread:$0]  %s308, 256, %s310, [#allocation10], 64, 64, 4
        $region16: #{tpu_custom_call.1} parent=11 // pred_fallthru
          _
        // Predicated region
        $region17: #{tpu_custom_call.1} parent=11 // pred_check
          %p316 = pneg %p135
        $region18: #{tpu_custom_call.1} parent=11 // pred_check_branch
          %318 = sbr.rel (%p316) target = $region20
        $region19: #{tpu_custom_call.1} parent=11 // pred_region
          _
        $region20: #{tpu_custom_call.1} parent=11 // pred_fallthru
          _
        // Predicated region
        $region21: #{tpu_custom_call.1} parent=11 // pred_check
          %p319 = pneg %p156
        $region22: #{tpu_custom_call.1} parent=11 // pred_check_branch
          %321 = sbr.rel (%p319) target = $region24
        $region23: #{tpu_custom_call.1} parent=11 // pred_region
          %323 = vsyncadd [#allocation13], 0
          %s324 = sshll.u32 %s4, 4
          %s325 = int_to_ptr.hbm [resolvable:$true] %s324
          %s326 = sshll.u32 [#allocation12], 4
          %s327 = int_to_ptr.vmem [resolvable:$true] %s326
          %332 = dma.hbm_to_vmem [thread:$0]  %s325, 256, %s327, [#allocation13], 64, 64, 4
        $region24: #{tpu_custom_call.1} parent=11 // pred_fallthru
          _
        // Predicated region
        $region25: #{tpu_custom_call.1} parent=11 // pred_check
          %p333 = pneg %p177
        $region26: #{tpu_custom_call.1} parent=11 // pred_check_branch
          %335 = sbr.rel (%p333) target = $region28
        $region27: #{tpu_custom_call.1} parent=11 // pred_region
          _
        $region28: #{tpu_custom_call.1} parent=11 // pred_fallthru
          _
        // Predicated region
        $region29: #{tpu_custom_call.1} parent=11 // pred_check
          %p336 = pneg %p198
        $region30: #{tpu_custom_call.1} parent=11 // pred_check_branch
          %338 = sbr.rel (%p336) target = $region32
        $region31: #{tpu_custom_call.1} parent=11 // pred_region
          %340 = vsyncadd [#allocation13], 0
          %s341 = sshll.u32 %s6, 4
          %s342 = int_to_ptr.hbm [resolvable:$true] %s341
          %s343 = sshll.u32 [#allocation14], 4
          %s344 = int_to_ptr.vmem [resolvable:$true] %s343
          %349 = dma.hbm_to_vmem [thread:$0]  %s342, 256, %s344, [#allocation13], 64, 64, 4
        $region32: #{tpu_custom_call.1} parent=11 // pred_fallthru
          _
        // Predicated region
        $region33: #{tpu_custom_call.1} parent=11 // pred_check
          %p350 = pneg %p219
        $region34: #{tpu_custom_call.1} parent=11 // pred_check_branch
          %352 = sbr.rel (%p350) target = $region36
        $region35: #{tpu_custom_call.1} parent=11 // pred_region
          _
        $region36: #{tpu_custom_call.1} parent=11 // pred_fallthru
          _
        // Predicated region
        $region37: #{tpu_custom_call.1} parent=11 // pred_check
          %p353 = pneg %p240
        $region38: #{tpu_custom_call.1} parent=11 // pred_check_branch
          %355 = sbr.rel (%p353) target = $region40
        $region39: #{tpu_custom_call.1} parent=11 // pred_region
          %357 = vsyncadd [#allocation16], 0
          %s358 = sshll.u32 %s8, 4
          %s359 = int_to_ptr.hbm [resolvable:$true] %s358
          %s360 = sshll.u32 [#allocation15], 4
          %s361 = int_to_ptr.vmem [resolvable:$true] %s360
          %366 = dma.hbm_to_vmem [thread:$0]  %s359, 256, %s361, [#allocation16], 64, 64, 4
        $region40: #{tpu_custom_call.1} parent=11 // pred_fallthru
          _
        // Predicated region
        $region41: #{tpu_custom_call.1} parent=11 // pred_check
          %p367 = pneg %p261
        $region42: #{tpu_custom_call.1} parent=11 // pred_check_branch
          %369 = sbr.rel (%p367) target = $region44
        $region43: #{tpu_custom_call.1} parent=11 // pred_region
          _
        $region44: #{tpu_custom_call.1} parent=11 // pred_fallthru
          _
      $region12: #{tpu_custom_call.1} parent=5 // pred_fallthru
        _
      %p370 = scmp.lt.s32.totalorder %s27, 2
      // Predicated region
      $region45: #{tpu_custom_call.1} parent=5 // pred_check
        %p371 = pneg %p370
      $region46: #{tpu_custom_call.1} parent=5 // pred_check_branch
        %373 = sbr.rel (%p371) target = $region48
      $region47: #{tpu_custom_call.1} parent=5 // pred_region
        // Predicated region
        $region49: #{tpu_custom_call.1} parent=47 // pred_check
          %p374 = pneg %p59
        $region50: #{tpu_custom_call.1} parent=47 // pred_check_branch
          %376 = sbr.rel (%p374) target = $region52
        $region51: #{tpu_custom_call.1} parent=47 // pred_region
          %s377 = sand.u32 %s49, 1
          %s378 = scalar_lea.sflag [#allocation7], %s377
          %s379 = sand.u32 %s49, 1
          %s380 = smul.addr %s379, 4
          %s381 = scalar_lea.vmem [#allocation6], %s380
          %383 = vsyncadd %s378, 0
          %s384 = smul.addr %s34, 4
          %s385 = scalar_lea.hbm %s0, %s384
          %s387 = sshll.u32 %s385, 4
          %s388 = int_to_ptr.hbm [resolvable:$true] %s387
          %s389 = sshll.u32 %s381, 4
          %s390 = int_to_ptr.vmem [resolvable:$true] %s389
          %392 = dma.hbm_to_vmem [thread:$0]  %s388, 64, %s390, %s378
        $region52: #{tpu_custom_call.1} parent=47 // pred_fallthru
          _
        // Predicated region
        $region53: #{tpu_custom_call.1} parent=47 // pred_check
          %p393 = pneg %p87
        $region54: #{tpu_custom_call.1} parent=47 // pred_check_branch
          %395 = sbr.rel (%p393) target = $region56
        $region55: #{tpu_custom_call.1} parent=47 // pred_region
          %s396 = sand.u32 %s27, 1
          %s397 = scalar_lea.sflag [#allocation10], %s396
          %s398 = sand.u32 %s77, 1
          %s399 = smul.addr %s398, 4
          %s400 = scalar_lea.vmem [#allocation9], %s399
          %402 = vsyncadd %s397, 0
          %s403 = sadd.s32 %s35, %s34
          %s404 = smul.addr %s403, 4
          %s405 = scalar_lea.hbm %s1, %s404
          %s407 = sshll.u32 %s405, 4
          %s408 = int_to_ptr.hbm [resolvable:$true] %s407
          %s409 = sshll.u32 %s400, 4
          %s410 = int_to_ptr.vmem [resolvable:$true] %s409
          %412 = dma.hbm_to_vmem [thread:$0]  %s408, 64, %s410, %s397
        $region56: #{tpu_custom_call.1} parent=47 // pred_fallthru
          _
      $region48: #{tpu_custom_call.1} parent=5 // pred_fallthru
        _
      %p413 = scmp.le.s32.totalorder 1, %s27
      %p414 = scmp.lt.s32.totalorder %s27, 3
      %p415 = pnand %p413, %p414
      %p416 = pneg %p415
      // Predicated region
      $region57: #{tpu_custom_call.1} parent=5 // pred_check
        _
      $region58: #{tpu_custom_call.1} parent=5 // pred_check_branch
        %418 = sbr.rel (%p415) target = $region60
      $region59: #{tpu_custom_call.1} parent=5 // pred_region
        %s419 = ssub.s32 %s27, 1
        %s420 = sand.u32 %s52, 1
        %s421 = scalar_lea.sflag [#allocation7], %s420
        %s422 = sand.u32 %s52, 1
        %s423 = smul.addr %s422, 4
        %s424 = scalar_lea.vmem [#allocation6], %s423
        // Predicated region
        $region61: #{tpu_custom_call.1} parent=59 // pred_check
          %p425 = pneg %p65
        $region62: #{tpu_custom_call.1} parent=59 // pred_check_branch
          %427 = sbr.rel (%p425) target = $region64
        $region63: #{tpu_custom_call.1} parent=59 // pred_region
          %429 = dma.done %s421, 64
        $region64: #{tpu_custom_call.1} parent=59 // pred_fallthru
          _
        %s430 = sand.u32 %s32, 1
        %s431 = scalar_lea.sflag [#allocation10], %s430
        %s432 = sand.u32 %s80, 1
        %s433 = smul.addr %s432, 4
        %s434 = scalar_lea.vmem [#allocation9], %s433
        // Predicated region
        $region65: #{tpu_custom_call.1} parent=59 // pred_check
          %p435 = pneg %p93
        $region66: #{tpu_custom_call.1} parent=59 // pred_check_branch
          %437 = sbr.rel (%p435) target = $region68
        $region67: #{tpu_custom_call.1} parent=59 // pred_region
          %439 = dma.done %s431, 64
        $region68: #{tpu_custom_call.1} parent=59 // pred_fallthru
          _
        // Predicated region
        $region69: #{tpu_custom_call.1} parent=59 // pred_check
          %p440 = pneg %p114
        $region70: #{tpu_custom_call.1} parent=59 // pred_check_branch
          %442 = sbr.rel (%p440) target = $region72
        $region71: #{tpu_custom_call.1} parent=59 // pred_region
          %444 = dma.done [#allocation10], 256
        $region72: #{tpu_custom_call.1} parent=59 // pred_fallthru
          _
        // Predicated region
        $region73: #{tpu_custom_call.1} parent=59 // pred_check
          %p445 = pneg %p156
        $region74: #{tpu_custom_call.1} parent=59 // pred_check_branch
          %447 = sbr.rel (%p445) target = $region76
        $region75: #{tpu_custom_call.1} parent=59 // pred_region
          %449 = dma.done [#allocation13], 256
        $region76: #{tpu_custom_call.1} parent=59 // pred_fallthru
          _
        // Predicated region
        $region77: #{tpu_custom_call.1} parent=59 // pred_check
          %p450 = pneg %p198
        $region78: #{tpu_custom_call.1} parent=59 // pred_check_branch
          %452 = sbr.rel (%p450) target = $region80
        $region79: #{tpu_custom_call.1} parent=59 // pred_region
          %454 = dma.done [#allocation13], 256
        $region80: #{tpu_custom_call.1} parent=59 // pred_fallthru
          _
        // Predicated region
        $region81: #{tpu_custom_call.1} parent=59 // pred_check
          %p455 = pneg %p240
        $region82: #{tpu_custom_call.1} parent=59 // pred_check_branch
          %457 = sbr.rel (%p455) target = $region84
        $region83: #{tpu_custom_call.1} parent=59 // pred_region
          %459 = dma.done [#allocation16], 256
        $region84: #{tpu_custom_call.1} parent=59 // pred_fallthru
          _
        %s460 = sand.u32 %s52, 1
        %s461 = scalar_lea.sflag [#allocation7], %s460
        %s462 = sand.u32 %s52, 1
        %s463 = smul.addr %s462, 4
        %s464 = scalar_lea.vmem [#allocation6], %s463
        %p465 = pneg %p65
        %p466 = pneg %p62
        %s467 = sand.u32 %s32, 1
        %s468 = scalar_lea.sflag [#allocation10], %s467
        %s469 = sand.u32 %s80, 1
        %s470 = smul.addr %s469, 4
        %s471 = scalar_lea.vmem [#allocation9], %s470
        %p472 = pneg %p93
        %p473 = pneg %p90
        %p474 = pneg %p114
        %p475 = pneg %p111
        %p476 = pneg %p135
        %p477 = pneg %p132
        %p478 = pneg %p156
        %p479 = pneg %p153
        %p480 = pneg %p177
        %p481 = pneg %p174
        %p482 = pneg %p198
        %p483 = pneg %p195
        %p484 = pneg %p219
        %p485 = pneg %p216
        %p486 = pneg %p240
        %p487 = pneg %p237
        %p488 = pneg %p261
        %p489 = pneg %p258
        %p490 = pneg %p287
        %p491 = pneg %p284
        %s492 = sand.u32 %s274, 1
        %s493 = scalar_lea.sflag [#allocation8], %s492
        %s494 = sand.u32 %s274, 1
        %s495 = smul.addr %s494, 8
        %s496 = scalar_lea.vmem [#allocation17], %s495
        %p498 = scmp.eq.s32.totalorder %s37, 0
        // Predicated region
        $region85: #{tpu_custom_call.1} parent=59 // pred_check
          %p499 = pneg %p498
        $region86: #{tpu_custom_call.1} parent=59 // pred_check_branch
          %501 = sbr.rel (%p499) target = $region88
        $region87: #{tpu_custom_call.1} parent=59 // pred_region
          %v502 = vld [vmem:[%s424] sm:$0xf]
          %v503 = vld [vmem:[#allocation11] sm:$0xf]
          %v504 = vld [vmem:[#allocation11 + $0x4] sm:$0xf]
          %v505 = vld [vmem:[#allocation11 + $0x8] sm:$0xf]
          %v506 = vld [vmem:[#allocation11 + $0xc] sm:$0xf]
          %v507 = vld [vmem:[%s3] sm:$0x1]
          %v509 = vperm.slane %v507, 0
          %v515 = vunpack.c.l.b16 %v503
          %v516 = vunpack.c.l.b16 %v504
          %v517 = vunpack.c.l.b16 %v505
          %v518 = vunpack.c.l.b16 %v506
          %v519 = vpack.c.b16 %v516, %v515
          %v520 = vpack.c.b16 %v518, %v517
          %vm523 = vcmask 261120
          %v525 = vsel %vm523, %v502, 0
          %527 = vmatpush.bf16.msra.mxu0 0
          %528 = vmatpush.bf16.msra.mxu0 0
          %529 = vmatpush.bf16.msra.mxu0 0
          %530 = vmatpush.bf16.msra.mxu0 0
          %531 = vmatpush.bf16.msra.mxu0 0
          %532 = vmatpush.bf16.msra.mxu0 0
          %533 = vmatpush.bf16.msra.mxu0 %v520
          %534 = vmatpush.bf16.msra.mxu0 %v519
          %535 = vmatmul.bf16.gmra.mxu0 %v525
          %v536 = vpop.f32.mrf.mxu0
          %v537 = vadd.f32 %v509, %v536
          %v538 = vpop.f32.mrf.mxu0
          %539 = vdwg.mxu0
          %v540 = vxor.u32 %v537, 2147483648
          %v541 = vmul.f32 %v540, 1.442695
          %v542 = vpow.pop %v541
          %v543 = vadd.f32 %v542, 1.0
          %v544 = vrcp.pop %v543
          %v545 = vmul.f32 %v543, %v544
          %v546 = vsub.f32 1.0, %v545
          %v547 = vmul.f32 %v544, %v546
          %v548 = vadd.f32 %v544, %v547
          %vm549 = vweird.f32 %v543
          %vm550 = vweird.f32 %v544
          %vm551 = vmor %vm549, %vm550
          %v552 = vsel %vm551, %v544, %v548
          %v553 = vand.u32 2147483647, %v543
          %vm554 = vcmp.eq.f32.partialorder %v553, 8.507059e+37
          %v555 = vand.u32 %v543, 2147483648
          %v556 = vor.u32 1.1754944e-38, %v555
          %v557 = vsel %vm554, %v556, %v552
          %v558 = vmul.f32 1.0, %v557
          %v559 = vmul.f32 %v537, %v558
          %v560 = vmul.f32 %v559, 0.35355338
          %v561 = vpack.c.bf16 %v560, %v560
          %563 = vrot.lane.b32.xlu0 %v561, 120
          %v564 = vpop.permute.xlu0 %563
          %565 = vrot.lane.b32.xlu0 %v561, 112
          %v566 = vpop.permute.xlu0 %565
          %567 = vrot.lane.b32.xlu0 %v561, 104
          %v568 = vpop.permute.xlu0 %567
          %v571 = vpack.i.b16 %v564, %v561
          %v572 = vshrl.u32 %v561, 16
          %v573 = vshrl.u32 %v564, 16
          %v574 = vpack.i.b16 %v573, %v572
          %v577 = vpack.i.b16 %v568, %v566
          %v578 = vshrl.u32 %v566, 16
          %v579 = vshrl.u32 %v568, 16
          %v580 = vpack.i.b16 %v579, %v578
          %v583 = vunpack.c.l.s4 1983009808
          %v584 = vunpack.c.0.s8 %v583
          %v585 = vperm.slane %v571, %v584
          %v588 = vunpack.c.l.s4 1983009808
          %v589 = vunpack.c.0.s8 %v588
          %v590 = vperm.slane %v577, %v589
          %v591 = vrot.slane %v590, 4
          %vm592 = vcmask 1047556
          %v593 = vsel %vm592, %v591, %v585
          %v594 = vrot.slane %v585, 4
          %v595 = vsel %vm592, %v590, %v594
          %v597 = vunpack.c.l.s4 1934713408
          %v598 = vunpack.c.0.s8 %v597
          %v599 = vperm.slane %v593, %v598
          %v601 = vunpack.c.l.s4 1934713408
          %v602 = vunpack.c.0.s8 %v601
          %v603 = vperm.slane %v595, %v602
          %v604 = vrot.slane %v599, 4
          %v605 = vsel %vm592, 0, %v604
          %v606 = vrot.slane %v603, 4
          %v607 = vsel %vm592, 0, %v606
          %v610 = vunpack.c.l.s4 1983009808
          %v611 = vunpack.c.0.s8 %v610
          %v612 = vperm.slane %v574, %v611
          %v615 = vunpack.c.l.s4 1983009808
          %v616 = vunpack.c.0.s8 %v615
          %v617 = vperm.slane %v580, %v616
          %v618 = vrot.slane %v617, 4
          %v619 = vsel %vm592, %v618, %v612
          %v620 = vrot.slane %v612, 4
          %v621 = vsel %vm592, %v617, %v620
          %v623 = vunpack.c.l.s4 1934713408
          %v624 = vunpack.c.0.s8 %v623
          %v625 = vperm.slane %v619, %v624
          %v627 = vunpack.c.l.s4 1934713408
          %v628 = vunpack.c.0.s8 %v627
          %v629 = vperm.slane %v621, %v628
          %v630 = vrot.slane %v625, 4
          %v631 = vsel %vm592, 0, %v630
          %v632 = vrot.slane %v629, 4
          %v633 = vsel %vm592, 0, %v632
          %v634 = vsel %vm592, %v606, %v599
          %v636 = vunpack.c.l.s4 1983009808
          %v637 = vunpack.c.0.s8 %v636
          %v638 = vperm.slane %v634, %v637
          %v639 = vrot.slane %v607, 4
          %v640 = vsel %vm592, %v639, %v605
          %v642 = vunpack.c.l.s4 1983009808
          %v643 = vunpack.c.0.s8 %v642
          %v644 = vperm.slane %v640, %v643
          %v645 = vrot.slane %v644, 4
          %v646 = vsel %vm592, %v645, %v638
          %v648 = vunpack.c.l.s4 1934713408
          %v649 = vunpack.c.0.s8 %v648
          %v650 = vperm.slane %v646, %v649
          %v651 = vrot.slane %v650, 4
          %v652 = vsel %vm592, 0, %v651
          %v653 = vsel %vm592, %v632, %v625
          %v655 = vunpack.c.l.s4 1983009808
          %v656 = vunpack.c.0.s8 %v655
          %v657 = vperm.slane %v653, %v656
          %v658 = vrot.slane %v633, 4
          %v659 = vsel %vm592, %v658, %v631
          %v661 = vunpack.c.l.s4 1983009808
          %v662 = vunpack.c.0.s8 %v661
          %v663 = vperm.slane %v659, %v662
          %v664 = vrot.slane %v663, 4
          %v665 = vsel %vm592, %v664, %v657
          %v667 = vunpack.c.l.s4 1934713408
          %v668 = vunpack.c.0.s8 %v667
          %v669 = vperm.slane %v665, %v668
          %v670 = vrot.slane %v669, 4
          %v671 = vsel %vm592, 0, %v670
          %v674 = vpack.i.b16 %v669, %v650
          %v676 = vshrl.u32 %v650, 16
          %v677 = vshrl.u32 %v669, 16
          %v678 = vpack.i.b16 %v677, %v676
          %v682 = vpack.i.b16 %v671, %v652
          %v684 = vshrl.u32 %v652, 16
          %v685 = vshrl.u32 %v671, 16
          %v686 = vpack.i.b16 %v685, %v684
          %vm688 = vcmask 60416
          %689 = vst.msk [vmem:[#allocation2] sm:$0xf] %vm688, %v674
          %690 = vst.msk [vmem:[#allocation2 + $0x4] sm:$0xf] %vm688, %v678
          %691 = vst.msk [vmem:[#allocation2 + $0x8] sm:$0xf] %vm688, %v682
          %692 = vst.msk [vmem:[#allocation2 + $0xc] sm:$0xf] %vm688, %v686
          %vm693 = vcmask 7168
          %694 = vst.msk [vmem:[#allocation3] sm:$0xff] %vm693, -inf
          %695 = vst.msk [vmem:[#allocation3 + $0x8] sm:$0xff] %vm693, -inf
          %696 = vst.msk [vmem:[#allocation3 + $0x10] sm:$0xff] %vm693, -inf
          %697 = vst.msk [vmem:[#allocation3 + $0x18] sm:$0xff] %vm693, -inf
          %698 = vst.msk [vmem:[#allocation4] sm:$0xff] %vm693, 0.0
          %699 = vst.msk [vmem:[#allocation4 + $0x8] sm:$0xff] %vm693, 0.0
          %700 = vst.msk [vmem:[#allocation4 + $0x10] sm:$0xff] %vm693, 0.0
          %701 = vst.msk [vmem:[#allocation4 + $0x18] sm:$0xff] %vm693, 0.0
          %vm702 = vcmask 64512
          %703 = vst.msk [vmem:[#allocation5] sm:$0xff] %vm702, 0.0
          %704 = vst.msk [vmem:[#allocation5 + $0x8] sm:$0xff] %vm702, 0.0
          %705 = vst.msk [vmem:[#allocation5 + $0x10] sm:$0xff] %vm702, 0.0
          %706 = vst.msk [vmem:[#allocation5 + $0x18] sm:$0xff] %vm702, 0.0
        $region88: #{tpu_custom_call.1} parent=59 // pred_fallthru
          _
        %v707 = vld [vmem:[%s434] sm:$0xf]
        %v708 = vld [vmem:[#allocation12] sm:$0xf]
        %v709 = vld [vmem:[#allocation12 + $0x4] sm:$0xf]
        %v710 = vld [vmem:[#allocation12 + $0x8] sm:$0xf]
        %v711 = vld [vmem:[#allocation12 + $0xc] sm:$0xf]
        %v712 = vld [vmem:[%s5] sm:$0x1]
        %v714 = vperm.slane %v712, 0
        %v720 = vunpack.c.l.b16 %v708
        %v721 = vunpack.c.l.b16 %v709
        %v722 = vunpack.c.l.b16 %v710
        %v723 = vunpack.c.l.b16 %v711
        %v724 = vpack.c.b16 %v721, %v720
        %v725 = vpack.c.b16 %v723, %v722
        %vm728 = vcmask 261120
        %v730 = vsel %vm728, %v707, 0
        %732 = vmatpush.bf16.msra.mxu0 0
        %733 = vmatpush.bf16.msra.mxu0 0
        %734 = vmatpush.bf16.msra.mxu0 0
        %735 = vmatpush.bf16.msra.mxu0 0
        %736 = vmatpush.bf16.msra.mxu0 0
        %737 = vmatpush.bf16.msra.mxu0 0
        %738 = vmatpush.bf16.msra.mxu0 %v725
        %739 = vmatpush.bf16.msra.mxu0 %v724
        %740 = vmatmul.bf16.gmra.mxu0 %v730
        %v741 = vpop.f32.mrf.mxu0
        %v742 = vadd.f32 %v714, %v741
        %v743 = vpop.f32.mrf.mxu0
        %744 = vdwg.mxu0
        %v745 = vxor.u32 %v742, 2147483648
        %v746 = vmul.f32 %v745, 1.442695
        %v747 = vpow.pop %v746
        %v748 = vadd.f32 %v747, 1.0
        %v749 = vrcp.pop %v748
        %v750 = vmul.f32 %v748, %v749
        %v751 = vsub.f32 1.0, %v750
        %v752 = vmul.f32 %v749, %v751
        %v753 = vadd.f32 %v749, %v752
        %vm754 = vweird.f32 %v748
        %vm755 = vweird.f32 %v749
        %vm756 = vmor %vm754, %vm755
        %v757 = vsel %vm756, %v749, %v753
        %v758 = vand.u32 2147483647, %v748
        %vm759 = vcmp.eq.f32.partialorder %v758, 8.507059e+37
        %v760 = vand.u32 %v748, 2147483648
        %v761 = vor.u32 1.1754944e-38, %v760
        %v762 = vsel %vm759, %v761, %v757
        %v763 = vmul.f32 1.0, %v762
        %v764 = vmul.f32 %v742, %v763
        %v765 = vpack.c.bf16 %v764, %v764
        %767 = vrot.lane.b32.xlu0 %v765, 120
        %v768 = vpop.permute.xlu0 %767
        %769 = vrot.lane.b32.xlu0 %v765, 112
        %v770 = vpop.permute.xlu0 %769
        %771 = vrot.lane.b32.xlu0 %v765, 104
        %v772 = vpop.permute.xlu0 %771
        %v775 = vpack.i.b16 %v768, %v765
        %v776 = vshrl.u32 %v765, 16
        %v777 = vshrl.u32 %v768, 16
        %v778 = vpack.i.b16 %v777, %v776
        %v781 = vpack.i.b16 %v772, %v770
        %v782 = vshrl.u32 %v770, 16
        %v783 = vshrl.u32 %v772, 16
        %v784 = vpack.i.b16 %v783, %v782
        %v787 = vunpack.c.l.s4 1983009808
        %v788 = vunpack.c.0.s8 %v787
        %v789 = vperm.slane %v775, %v788
        %v792 = vunpack.c.l.s4 1983009808
        %v793 = vunpack.c.0.s8 %v792
        %v794 = vperm.slane %v781, %v793
        %v795 = vrot.slane %v794, 4
        %vm796 = vcmask 1047556
        %v797 = vsel %vm796, %v795, %v789
        %v798 = vrot.slane %v789, 4
        %v799 = vsel %vm796, %v794, %v798
        %v801 = vunpack.c.l.s4 1934713408
        %v802 = vunpack.c.0.s8 %v801
        %v803 = vperm.slane %v797, %v802
        %v805 = vunpack.c.l.s4 1934713408
        %v806 = vunpack.c.0.s8 %v805
        %v807 = vperm.slane %v799, %v806
        %v808 = vrot.slane %v803, 4
        %v809 = vsel %vm796, 0, %v808
        %v810 = vrot.slane %v807, 4
        %v811 = vsel %vm796, 0, %v810
        %v814 = vunpack.c.l.s4 1983009808
        %v815 = vunpack.c.0.s8 %v814
        %v816 = vperm.slane %v778, %v815
        %v819 = vunpack.c.l.s4 1983009808
        %v820 = vunpack.c.0.s8 %v819
        %v821 = vperm.slane %v784, %v820
        %v822 = vrot.slane %v821, 4
        %v823 = vsel %vm796, %v822, %v816
        %v824 = vrot.slane %v816, 4
        %v825 = vsel %vm796, %v821, %v824
        %v827 = vunpack.c.l.s4 1934713408
        %v828 = vunpack.c.0.s8 %v827
        %v829 = vperm.slane %v823, %v828
        %v831 = vunpack.c.l.s4 1934713408
        %v832 = vunpack.c.0.s8 %v831
        %v833 = vperm.slane %v825, %v832
        %v834 = vrot.slane %v829, 4
        %v835 = vsel %vm796, 0, %v834
        %v836 = vrot.slane %v833, 4
        %v837 = vsel %vm796, 0, %v836
        %v838 = vsel %vm796, %v810, %v803
        %v840 = vunpack.c.l.s4 1983009808
        %v841 = vunpack.c.0.s8 %v840
        %v842 = vperm.slane %v838, %v841
        %v843 = vrot.slane %v811, 4
        %v844 = vsel %vm796, %v843, %v809
        %v846 = vunpack.c.l.s4 1983009808
        %v847 = vunpack.c.0.s8 %v846
        %v848 = vperm.slane %v844, %v847
        %v849 = vrot.slane %v848, 4
        %v850 = vsel %vm796, %v849, %v842
        %v852 = vunpack.c.l.s4 1934713408
        %v853 = vunpack.c.0.s8 %v852
        %v854 = vperm.slane %v850, %v853
        %v855 = vrot.slane %v854, 4
        %v856 = vsel %vm796, 0, %v855
        %v857 = vsel %vm796, %v836, %v829
        %v859 = vunpack.c.l.s4 1983009808
        %v860 = vunpack.c.0.s8 %v859
        %v861 = vperm.slane %v857, %v860
        %v862 = vrot.slane %v837, 4
        %v863 = vsel %vm796, %v862, %v835
        %v865 = vunpack.c.l.s4 1983009808
        %v866 = vunpack.c.0.s8 %v865
        %v867 = vperm.slane %v863, %v866
        %v868 = vrot.slane %v867, 4
        %v869 = vsel %vm796, %v868, %v861
        %v871 = vunpack.c.l.s4 1934713408
        %v872 = vunpack.c.0.s8 %v871
        %v873 = vperm.slane %v869, %v872
        %v874 = vrot.slane %v873, 4
        %v875 = vsel %vm796, 0, %v874
        %v878 = vpack.i.b16 %v873, %v854
        %v879 = vshrl.u32 %v854, 16
        %v880 = vshrl.u32 %v873, 16
        %v881 = vpack.i.b16 %v880, %v879
        %v884 = vpack.i.b16 %v875, %v856
        %v885 = vshrl.u32 %v856, 16
        %v886 = vshrl.u32 %v875, 16
        %v887 = vpack.i.b16 %v886, %v885
        %v888 = vld [vmem:[#allocation14] sm:$0xf]
        %v889 = vld [vmem:[#allocation14 + $0x4] sm:$0xf]
        %v890 = vld [vmem:[#allocation14 + $0x8] sm:$0xf]
        %v891 = vld [vmem:[#allocation14 + $0xc] sm:$0xf]
        %v892 = vld [vmem:[%s7] sm:$0x1]
        %v894 = vperm.slane %v892, 0
        %v900 = vunpack.c.l.b16 %v888
        %v901 = vunpack.c.l.b16 %v889
        %v902 = vunpack.c.l.b16 %v890
        %v903 = vunpack.c.l.b16 %v891
        %v904 = vpack.c.b16 %v901, %v900
        %v905 = vpack.c.b16 %v903, %v902
        %908 = vmatpush.bf16.msra.mxu0 0
        %909 = vmatpush.bf16.msra.mxu0 0
        %910 = vmatpush.bf16.msra.mxu0 0
        %911 = vmatpush.bf16.msra.mxu0 0
        %912 = vmatpush.bf16.msra.mxu0 0
        %913 = vmatpush.bf16.msra.mxu0 0
        %914 = vmatpush.bf16.msra.mxu0 %v905
        %915 = vmatpush.bf16.msra.mxu0 %v904
        %916 = vmatmul.bf16.gmra.mxu0 %v730
        %v917 = vpop.f32.mrf.mxu0
        %v918 = vadd.f32 %v894, %v917
        %v919 = vpop.f32.mrf.mxu0
        %920 = vdwg.mxu0
        %v921 = vxor.u32 %v918, 2147483648
        %v922 = vmul.f32 %v921, 1.442695
        %v923 = vpow.pop %v922
        %v924 = vadd.f32 %v923, 1.0
        %v925 = vrcp.pop %v924
        %v926 = vmul.f32 %v924, %v925
        %v927 = vsub.f32 1.0, %v926
        %v928 = vmul.f32 %v925, %v927
        %v929 = vadd.f32 %v925, %v928
        %vm930 = vweird.f32 %v924
        %vm931 = vweird.f32 %v925
        %vm932 = vmor %vm930, %vm931
        %v933 = vsel %vm932, %v925, %v929
        %v934 = vand.u32 2147483647, %v924
        %vm935 = vcmp.eq.f32.partialorder %v934, 8.507059e+37
        %v936 = vand.u32 %v924, 2147483648
        %v937 = vor.u32 1.1754944e-38, %v936
        %v938 = vsel %vm935, %v937, %v933
        %v939 = vmul.f32 1.0, %v938
        %v940 = vmul.f32 %v918, %v939
        %v941 = vpack.c.bf16 %v940, %v940
        %943 = vrot.lane.b32.xlu0 %v941, 120
        %v944 = vpop.permute.xlu0 %943
        %945 = vrot.lane.b32.xlu0 %v941, 112
        %v946 = vpop.permute.xlu0 %945
        %947 = vrot.lane.b32.xlu0 %v941, 104
        %v948 = vpop.permute.xlu0 %947
        %v951 = vpack.i.b16 %v944, %v941
        %v952 = vshrl.u32 %v941, 16
        %v953 = vshrl.u32 %v944, 16
        %v954 = vpack.i.b16 %v953, %v952
        %v957 = vpack.i.b16 %v948, %v946
        %v958 = vshrl.u32 %v946, 16
        %v959 = vshrl.u32 %v948, 16
        %v960 = vpack.i.b16 %v959, %v958
        %v963 = vunpack.c.l.s4 1983009808
        %v964 = vunpack.c.0.s8 %v963
        %v965 = vperm.slane %v951, %v964
        %v968 = vunpack.c.l.s4 1983009808
        %v969 = vunpack.c.0.s8 %v968
        %v970 = vperm.slane %v957, %v969
        %v971 = vrot.slane %v970, 4
        %v972 = vsel %vm796, %v971, %v965
        %v973 = vrot.slane %v965, 4
        %v974 = vsel %vm796, %v970, %v973
        %v976 = vunpack.c.l.s4 1934713408
        %v977 = vunpack.c.0.s8 %v976
        %v978 = vperm.slane %v972, %v977
        %v980 = vunpack.c.l.s4 1934713408
        %v981 = vunpack.c.0.s8 %v980
        %v982 = vperm.slane %v974, %v981
        %v983 = vrot.slane %v978, 4
        %v984 = vsel %vm796, 0, %v983
        %v985 = vrot.slane %v982, 4
        %v986 = vsel %vm796, 0, %v985
        %v989 = vunpack.c.l.s4 1983009808
        %v990 = vunpack.c.0.s8 %v989
        %v991 = vperm.slane %v954, %v990
        %v994 = vunpack.c.l.s4 1983009808
        %v995 = vunpack.c.0.s8 %v994
        %v996 = vperm.slane %v960, %v995
        %v997 = vrot.slane %v996, 4
        %v998 = vsel %vm796, %v997, %v991
        %v999 = vrot.slane %v991, 4
        %v1000 = vsel %vm796, %v996, %v999
        %v1002 = vunpack.c.l.s4 1934713408
        %v1003 = vunpack.c.0.s8 %v1002
        %v1004 = vperm.slane %v998, %v1003
        %v1006 = vunpack.c.l.s4 1934713408
        %v1007 = vunpack.c.0.s8 %v1006
        %v1008 = vperm.slane %v1000, %v1007
        %v1009 = vrot.slane %v1004, 4
        %v1010 = vsel %vm796, 0, %v1009
        %v1011 = vrot.slane %v1008, 4
        %v1012 = vsel %vm796, 0, %v1011
        %v1013 = vsel %vm796, %v985, %v978
        %v1015 = vunpack.c.l.s4 1983009808
        %v1016 = vunpack.c.0.s8 %v1015
        %v1017 = vperm.slane %v1013, %v1016
        %v1018 = vrot.slane %v986, 4
        %v1019 = vsel %vm796, %v1018, %v984
        %v1021 = vunpack.c.l.s4 1983009808
        %v1022 = vunpack.c.0.s8 %v1021
        %v1023 = vperm.slane %v1019, %v1022
        %v1024 = vrot.slane %v1023, 4
        %v1025 = vsel %vm796, %v1024, %v1017
        %v1027 = vunpack.c.l.s4 1934713408
        %v1028 = vunpack.c.0.s8 %v1027
        %v1029 = vperm.slane %v1025, %v1028
        %v1030 = vrot.slane %v1029, 4
        %v1031 = vsel %vm796, 0, %v1030
        %v1032 = vsel %vm796, %v1011, %v1004
        %v1034 = vunpack.c.l.s4 1983009808
        %v1035 = vunpack.c.0.s8 %v1034
        %v1036 = vperm.slane %v1032, %v1035
        %v1037 = vrot.slane %v1012, 4
        %v1038 = vsel %vm796, %v1037, %v1010
        %v1040 = vunpack.c.l.s4 1983009808
        %v1041 = vunpack.c.0.s8 %v1040
        %v1042 = vperm.slane %v1038, %v1041
        %v1043 = vrot.slane %v1042, 4
        %v1044 = vsel %vm796, %v1043, %v1036
        %v1046 = vunpack.c.l.s4 1934713408
        %v1047 = vunpack.c.0.s8 %v1046
        %v1048 = vperm.slane %v1044, %v1047
        %v1049 = vrot.slane %v1048, 4
        %v1050 = vsel %vm796, 0, %v1049
        %v1053 = vpack.i.b16 %v1048, %v1029
        %v1054 = vshrl.u32 %v1029, 16
        %v1055 = vshrl.u32 %v1048, 16
        %v1056 = vpack.i.b16 %v1055, %v1054
        %v1059 = vpack.i.b16 %v1050, %v1031
        %v1060 = vshrl.u32 %v1031, 16
        %v1061 = vshrl.u32 %v1050, 16
        %v1062 = vpack.i.b16 %v1061, %v1060
        %v1063 = vld [vmem:[#allocation2] sm:$0xf]
        %v1064 = vld [vmem:[#allocation2 + $0x4] sm:$0xf]
        %v1065 = vld [vmem:[#allocation2 + $0x8] sm:$0xf]
        %v1066 = vld [vmem:[#allocation2 + $0xc] sm:$0xf]
        %vm1067 = vcmask 64512
        %v1069 = vsel %vm1067, %v1063, 0
        %v1072 = vsel %vm1067, %v878, 0
        %1074 = vmatpush.bf16.xpose.msra.mxu0 0
        %1075 = vmatpush.bf16.xpose.msra.mxu0 0
        %1076 = vmatpush.bf16.xpose.msra.mxu0 0
        %1077 = vmatpush.bf16.xpose.msra.mxu0 0
        %1078 = vmatpush.bf16.xpose.msra.mxu0 0
        %1079 = vmatpush.bf16.xpose.msra.mxu0 0
        %1080 = vmatpush.bf16.xpose.msra.mxu0 0
        %1081 = vmatpush.bf16.xpose.msra.mxu0 %v1072
        %1082 = vmatmul.bf16.gmra.mxu0 %v1069
        %v1083 = vpop.f32.mrf.mxu0
        %v1084 = vadd.f32 0.0, %v1083
        %v1085 = vpop.f32.mrf.mxu0
        %1086 = vdwg.mxu0
        %v1088 = vsel %vm1067, %v1064, 0
        %v1091 = vsel %vm1067, %v881, 0
        %1093 = vmatpush.bf16.xpose.msra.mxu0 0
        %1094 = vmatpush.bf16.xpose.msra.mxu0 0
        %1095 = vmatpush.bf16.xpose.msra.mxu0 0
        %1096 = vmatpush.bf16.xpose.msra.mxu0 0
        %1097 = vmatpush.bf16.xpose.msra.mxu0 0
        %1098 = vmatpush.bf16.xpose.msra.mxu0 0
        %1099 = vmatpush.bf16.xpose.msra.mxu0 0
        %1100 = vmatpush.bf16.xpose.msra.mxu0 %v1091
        %1101 = vmatmul.bf16.gmra.mxu0 %v1088
        %v1102 = vpop.f32.mrf.mxu0
        %v1103 = vadd.f32 0.0, %v1102
        %v1104 = vpop.f32.mrf.mxu0
        %1105 = vdwg.mxu0
        %v1107 = vsel %vm1067, %v1065, 0
        %v1110 = vsel %vm1067, %v884, 0
        %1112 = vmatpush.bf16.xpose.msra.mxu0 0
        %1113 = vmatpush.bf16.xpose.msra.mxu0 0
        %1114 = vmatpush.bf16.xpose.msra.mxu0 0
        %1115 = vmatpush.bf16.xpose.msra.mxu0 0
        %1116 = vmatpush.bf16.xpose.msra.mxu0 0
        %1117 = vmatpush.bf16.xpose.msra.mxu0 0
        %1118 = vmatpush.bf16.xpose.msra.mxu0 0
        %1119 = vmatpush.bf16.xpose.msra.mxu0 %v1110
        %1120 = vmatmul.bf16.gmra.mxu0 %v1107
        %v1121 = vpop.f32.mrf.mxu0
        %v1122 = vadd.f32 0.0, %v1121
        %v1123 = vpop.f32.mrf.mxu0
        %1124 = vdwg.mxu0
        %v1126 = vsel %vm1067, %v1066, 0
        %v1129 = vsel %vm1067, %v887, 0
        %1131 = vmatpush.bf16.xpose.msra.mxu0 0
        %1132 = vmatpush.bf16.xpose.msra.mxu0 0
        %1133 = vmatpush.bf16.xpose.msra.mxu0 0
        %1134 = vmatpush.bf16.xpose.msra.mxu0 0
        %1135 = vmatpush.bf16.xpose.msra.mxu0 0
        %1136 = vmatpush.bf16.xpose.msra.mxu0 0
        %1137 = vmatpush.bf16.xpose.msra.mxu0 0
        %1138 = vmatpush.bf16.xpose.msra.mxu0 %v1129
        %1139 = vmatmul.bf16.gmra.mxu0 %v1126
        %v1140 = vpop.f32.mrf.mxu0
        %v1141 = vadd.f32 0.0, %v1140
        %v1142 = vpop.f32.mrf.mxu0
        %1143 = vdwg.mxu0
        %v1144 = vld [vmem:[#allocation3] sm:$0xff]
        %v1145 = vld [vmem:[#allocation3 + $0x8] sm:$0xff]
        %v1146 = vld [vmem:[#allocation3 + $0x10] sm:$0xff]
        %v1147 = vld [vmem:[#allocation3 + $0x18] sm:$0xff]
        %v1148 = vsel %vm1067, %v1084, -inf
        %1149 = vmax.xlane.f32.xlu0 %v1148
        %v1150 = vpop.xlane.xlu0 %1149
        %v1151 = vsel %vm1067, %v1103, -inf
        %1152 = vmax.xlane.f32.xlu0 %v1151
        %v1153 = vpop.xlane.xlu0 %1152
        %v1154 = vsel %vm1067, %v1122, -inf
        %1155 = vmax.xlane.f32.xlu0 %v1154
        %v1156 = vpop.xlane.xlu0 %1155
        %v1157 = vsel %vm1067, %v1141, -inf
        %1158 = vmax.xlane.f32.xlu0 %v1157
        %v1159 = vpop.xlane.xlu0 %1158
        %v1160 = vmax.f32 %v1144, %v1150
        %v1161 = vmax.f32 %v1145, %v1153
        %v1162 = vmax.f32 %v1146, %v1156
        %v1163 = vmax.f32 %v1147, %v1159
        %v1164 = vsub.f32 %v1144, %v1160
        %v1165 = vsub.f32 %v1145, %v1161
        %v1166 = vsub.f32 %v1146, %v1162
        %v1167 = vsub.f32 %v1147, %v1163
        %v1168 = vmul.f32 %v1164, 1.442695
        %v1169 = vpow.pop %v1168
        %v1170 = vmul.f32 %v1165, 1.442695
        %v1171 = vpow.pop %v1170
        %v1172 = vmul.f32 %v1166, 1.442695
        %v1173 = vpow.pop %v1172
        %v1174 = vmul.f32 %v1167, 1.442695
        %v1175 = vpow.pop %v1174
        %1177 = vset.pattern.permute.xlu0 0
        %1178 = vperm.xlu0 %1177, %v1160
        %v1179 = vpop.permute.xlu0 %1178
        %1182 = vset.pattern.permute.xlu0 0
        %1183 = vperm.xlu0 %1182, %v1161
        %v1184 = vpop.permute.xlu0 %1183
        %1187 = vset.pattern.permute.xlu0 0
        %1188 = vperm.xlu0 %1187, %v1162
        %v1189 = vpop.permute.xlu0 %1188
        %1192 = vset.pattern.permute.xlu0 0
        %1193 = vperm.xlu0 %1192, %v1163
        %v1194 = vpop.permute.xlu0 %1193
        %v1196 = vsub.f32 %v1084, %v1179
        %v1197 = vsub.f32 %v1103, %v1184
        %v1198 = vsub.f32 %v1122, %v1189
        %v1199 = vsub.f32 %v1141, %v1194
        %v1200 = vmul.f32 %v1196, 1.442695
        %v1201 = vpow.pop %v1200
        %v1202 = vmul.f32 %v1197, 1.442695
        %v1203 = vpow.pop %v1202
        %v1204 = vmul.f32 %v1198, 1.442695
        %v1205 = vpow.pop %v1204
        %v1206 = vmul.f32 %v1199, 1.442695
        %v1207 = vpow.pop %v1206
        %v1208 = vld [vmem:[#allocation4] sm:$0xff]
        %v1209 = vld [vmem:[#allocation4 + $0x8] sm:$0xff]
        %v1210 = vld [vmem:[#allocation4 + $0x10] sm:$0xff]
        %v1211 = vld [vmem:[#allocation4 + $0x18] sm:$0xff]
        %v1212 = vmul.f32 %v1169, %v1208
        %v1213 = vmul.f32 %v1171, %v1209
        %v1214 = vmul.f32 %v1173, %v1210
        %v1215 = vmul.f32 %v1175, %v1211
        %v1216 = vsel %vm1067, %v1201, 0.0
        %1217 = vadd.xlane.f32.xlu0 %v1216
        %v1218 = vpop.xlane.xlu0 %1217
        %v1219 = vsel %vm1067, %v1203, 0.0
        %1220 = vadd.xlane.f32.xlu0 %v1219
        %v1221 = vpop.xlane.xlu0 %1220
        %v1222 = vsel %vm1067, %v1205, 0.0
        %1223 = vadd.xlane.f32.xlu0 %v1222
        %v1224 = vpop.xlane.xlu0 %1223
        %v1225 = vsel %vm1067, %v1207, 0.0
        %1226 = vadd.xlane.f32.xlu0 %v1225
        %v1227 = vpop.xlane.xlu0 %1226
        %v1228 = vadd.f32 %v1212, %v1218
        %v1229 = vadd.f32 %v1213, %v1221
        %v1230 = vadd.f32 %v1214, %v1224
        %v1231 = vadd.f32 %v1215, %v1227
        %vm1232 = vcmask 7168
        %1233 = vst.msk [vmem:[#allocation4] sm:$0xff] %vm1232, %v1228
        %1234 = vst.msk [vmem:[#allocation4 + $0x8] sm:$0xff] %vm1232, %v1229
        %1235 = vst.msk [vmem:[#allocation4 + $0x10] sm:$0xff] %vm1232, %v1230
        %1236 = vst.msk [vmem:[#allocation4 + $0x18] sm:$0xff] %vm1232, %v1231
        %v1237 = vld [vmem:[#allocation5] sm:$0xff]
        %v1238 = vld [vmem:[#allocation5 + $0x8] sm:$0xff]
        %v1239 = vld [vmem:[#allocation5 + $0x10] sm:$0xff]
        %v1240 = vld [vmem:[#allocation5 + $0x18] sm:$0xff]
        %1242 = vset.pattern.permute.xlu0 0
        %1243 = vperm.xlu0 %1242, %v1169
        %v1244 = vpop.permute.xlu0 %1243
        %1247 = vset.pattern.permute.xlu0 0
        %1248 = vperm.xlu0 %1247, %v1171
        %v1249 = vpop.permute.xlu0 %1248
        %1252 = vset.pattern.permute.xlu0 0
        %1253 = vperm.xlu0 %1252, %v1173
        %v1254 = vpop.permute.xlu0 %1253
        %1257 = vset.pattern.permute.xlu0 0
        %1258 = vperm.xlu0 %1257, %v1175
        %v1259 = vpop.permute.xlu0 %1258
        %v1261 = vmul.f32 %v1244, %v1237
        %v1262 = vmul.f32 %v1249, %v1238
        %v1263 = vmul.f32 %v1254, %v1239
        %v1264 = vmul.f32 %v1259, %v1240
        %v1265 = vpack.c.bf16 %v1201, %v1201
        %v1266 = vpack.c.bf16 %v1203, %v1203
        %v1267 = vpack.c.bf16 %v1205, %v1205
        %v1268 = vpack.c.bf16 %v1207, %v1207
        %v1270 = vsel %vm1067, %v1265, 0
        %vm1272 = vcmask 1043456
        %v1274 = vsel %vm1272, %v1053, 0
        %1276 = vmatpush.bf16.msra.mxu0 0
        %1277 = vmatpush.bf16.msra.mxu0 0
        %1278 = vmatpush.bf16.msra.mxu0 0
        %1279 = vmatpush.bf16.msra.mxu0 0
        %1280 = vmatpush.bf16.msra.mxu0 0
        %1281 = vmatpush.bf16.msra.mxu0 0
        %1282 = vmatpush.bf16.msra.mxu0 0
        %1283 = vmatpush.bf16.msra.mxu0 %v1274
        %1284 = vmatmul.bf16.gmra.mxu0 %v1270
        %v1285 = vpop.f32.mrf.mxu0
        %v1286 = vadd.f32 0.0, %v1285
        %v1287 = vpop.f32.mrf.mxu0
        %1288 = vdwg.mxu0
        %v1290 = vsel %vm1067, %v1266, 0
        %v1293 = vsel %vm1272, %v1056, 0
        %1295 = vmatpush.bf16.msra.mxu0 0
        %1296 = vmatpush.bf16.msra.mxu0 0
        %1297 = vmatpush.bf16.msra.mxu0 0
        %1298 = vmatpush.bf16.msra.mxu0 0
        %1299 = vmatpush.bf16.msra.mxu0 0
        %1300 = vmatpush.bf16.msra.mxu0 0
        %1301 = vmatpush.bf16.msra.mxu0 0
        %1302 = vmatpush.bf16.msra.mxu0 %v1293
        %1303 = vmatmul.bf16.gmra.mxu0 %v1290
        %v1304 = vpop.f32.mrf.mxu0
        %v1305 = vadd.f32 0.0, %v1304
        %v1306 = vpop.f32.mrf.mxu0
        %1307 = vdwg.mxu0
        %v1309 = vsel %vm1067, %v1267, 0
        %v1312 = vsel %vm1272, %v1059, 0
        %1314 = vmatpush.bf16.msra.mxu0 0
        %1315 = vmatpush.bf16.msra.mxu0 0
        %1316 = vmatpush.bf16.msra.mxu0 0
        %1317 = vmatpush.bf16.msra.mxu0 0
        %1318 = vmatpush.bf16.msra.mxu0 0
        %1319 = vmatpush.bf16.msra.mxu0 0
        %1320 = vmatpush.bf16.msra.mxu0 0
        %1321 = vmatpush.bf16.msra.mxu0 %v1312
        %1322 = vmatmul.bf16.gmra.mxu0 %v1309
        %v1323 = vpop.f32.mrf.mxu0
        %v1324 = vadd.f32 0.0, %v1323
        %v1325 = vpop.f32.mrf.mxu0
        %1326 = vdwg.mxu0
        %v1328 = vsel %vm1067, %v1268, 0
        %v1331 = vsel %vm1272, %v1062, 0
        %1333 = vmatpush.bf16.msra.mxu0 0
        %1334 = vmatpush.bf16.msra.mxu0 0
        %1335 = vmatpush.bf16.msra.mxu0 0
        %1336 = vmatpush.bf16.msra.mxu0 0
        %1337 = vmatpush.bf16.msra.mxu0 0
        %1338 = vmatpush.bf16.msra.mxu0 0
        %1339 = vmatpush.bf16.msra.mxu0 0
        %1340 = vmatpush.bf16.msra.mxu0 %v1331
        %1341 = vmatmul.bf16.gmra.mxu0 %v1328
        %v1342 = vpop.f32.mrf.mxu0
        %v1343 = vadd.f32 0.0, %v1342
        %v1344 = vpop.f32.mrf.mxu0
        %1345 = vdwg.mxu0
        %v1346 = vadd.f32 %v1261, %v1286
        %v1347 = vadd.f32 %v1262, %v1305
        %v1348 = vadd.f32 %v1263, %v1324
        %v1349 = vadd.f32 %v1264, %v1343
        %1350 = vst.msk [vmem:[#allocation5] sm:$0xff] %vm1067, %v1346
        %1351 = vst.msk [vmem:[#allocation5 + $0x8] sm:$0xff] %vm1067, %v1347
        %1352 = vst.msk [vmem:[#allocation5 + $0x10] sm:$0xff] %vm1067, %v1348
        %1353 = vst.msk [vmem:[#allocation5 + $0x18] sm:$0xff] %vm1067, %v1349
        %1354 = vst.msk [vmem:[#allocation3] sm:$0xff] %vm1232, %v1160
        %1355 = vst.msk [vmem:[#allocation3 + $0x8] sm:$0xff] %vm1232, %v1161
        %1356 = vst.msk [vmem:[#allocation3 + $0x10] sm:$0xff] %vm1232, %v1162
        %1357 = vst.msk [vmem:[#allocation3 + $0x18] sm:$0xff] %vm1232, %v1163
        // Predicated region
        $region89: #{tpu_custom_call.1} parent=59 // pred_check
          %p1358 = pneg %p498
        $region90: #{tpu_custom_call.1} parent=59 // pred_check_branch
          %1360 = sbr.rel (%p1358) target = $region92
        $region91: #{tpu_custom_call.1} parent=59 // pred_region
          %v1361 = vld [vmem:[#allocation5] sm:$0xff]
          %v1362 = vld [vmem:[#allocation5 + $0x8] sm:$0xff]
          %v1363 = vld [vmem:[#allocation5 + $0x10] sm:$0xff]
          %v1364 = vld [vmem:[#allocation5 + $0x18] sm:$0xff]
          %v1365 = vld [vmem:[#allocation4] sm:$0xff]
          %v1366 = vld [vmem:[#allocation4 + $0x8] sm:$0xff]
          %v1367 = vld [vmem:[#allocation4 + $0x10] sm:$0xff]
          %v1368 = vld [vmem:[#allocation4 + $0x18] sm:$0xff]
          %v1369 = vrcp.pop %v1365
          %v1370 = vrcp.pop %v1366
          %v1371 = vrcp.pop %v1367
          %v1372 = vrcp.pop %v1368
          %1374 = vset.pattern.permute.xlu0 0
          %1375 = vperm.xlu0 %1374, %v1369
          %v1376 = vpop.permute.xlu0 %1375
          %1379 = vset.pattern.permute.xlu0 0
          %1380 = vperm.xlu0 %1379, %v1370
          %v1381 = vpop.permute.xlu0 %1380
          %1384 = vset.pattern.permute.xlu0 0
          %1385 = vperm.xlu0 %1384, %v1371
          %v1386 = vpop.permute.xlu0 %1385
          %1389 = vset.pattern.permute.xlu0 0
          %1390 = vperm.xlu0 %1389, %v1372
          %v1391 = vpop.permute.xlu0 %1390
          %v1393 = vmul.f32 %v1361, %v1376
          %v1394 = vmul.f32 %v1362, %v1381
          %v1395 = vmul.f32 %v1363, %v1386
          %v1396 = vmul.f32 %v1364, %v1391
          %v1397 = vpack.c.bf16 %v1393, %v1393
          %v1398 = vpack.c.bf16 %v1394, %v1394
          %v1399 = vpack.c.bf16 %v1395, %v1395
          %v1400 = vpack.c.bf16 %v1396, %v1396
          %v1403 = vpack.i.b16 %v1398, %v1397
          %v1404 = vshrl.u32 %v1397, 16
          %v1405 = vshrl.u32 %v1398, 16
          %v1406 = vpack.i.b16 %v1405, %v1404
          %v1409 = vpack.i.b16 %v1400, %v1399
          %v1410 = vshrl.u32 %v1399, 16
          %v1411 = vshrl.u32 %v1400, 16
          %v1412 = vpack.i.b16 %v1411, %v1410
          %v1415 = vunpack.c.l.s4 1983009808
          %v1416 = vunpack.c.0.s8 %v1415
          %v1417 = vperm.slane %v1403, %v1416
          %v1420 = vunpack.c.l.s4 1983009808
          %v1421 = vunpack.c.0.s8 %v1420
          %v1422 = vperm.slane %v1409, %v1421
          %v1423 = vrot.slane %v1422, 4
          %v1424 = vsel %vm796, %v1423, %v1417
          %v1425 = vrot.slane %v1417, 4
          %v1426 = vsel %vm796, %v1422, %v1425
          %v1428 = vunpack.c.l.s4 1934713408
          %v1429 = vunpack.c.0.s8 %v1428
          %v1430 = vperm.slane %v1424, %v1429
          %v1432 = vunpack.c.l.s4 1934713408
          %v1433 = vunpack.c.0.s8 %v1432
          %v1434 = vperm.slane %v1426, %v1433
          %v1435 = vrot.slane %v1430, 4
          %v1436 = vsel %vm796, 0, %v1435
          %v1437 = vrot.slane %v1434, 4
          %v1438 = vsel %vm796, 0, %v1437
          %v1441 = vunpack.c.l.s4 1983009808
          %v1442 = vunpack.c.0.s8 %v1441
          %v1443 = vperm.slane %v1406, %v1442
          %v1446 = vunpack.c.l.s4 1983009808
          %v1447 = vunpack.c.0.s8 %v1446
          %v1448 = vperm.slane %v1412, %v1447
          %v1449 = vrot.slane %v1448, 4
          %v1450 = vsel %vm796, %v1449, %v1443
          %v1451 = vrot.slane %v1443, 4
          %v1452 = vsel %vm796, %v1448, %v1451
          %v1454 = vunpack.c.l.s4 1934713408
          %v1455 = vunpack.c.0.s8 %v1454
          %v1456 = vperm.slane %v1450, %v1455
          %v1458 = vunpack.c.l.s4 1934713408
          %v1459 = vunpack.c.0.s8 %v1458
          %v1460 = vperm.slane %v1452, %v1459
          %v1461 = vrot.slane %v1456, 4
          %v1462 = vsel %vm796, 0, %v1461
          %v1463 = vrot.slane %v1460, 4
          %v1464 = vsel %vm796, 0, %v1463
          %v1465 = vsel %vm796, %v1437, %v1430
          %v1467 = vunpack.c.l.s4 1983009808
          %v1468 = vunpack.c.0.s8 %v1467
          %v1469 = vperm.slane %v1465, %v1468
          %v1470 = vrot.slane %v1438, 4
          %v1471 = vsel %vm796, %v1470, %v1436
          %v1473 = vunpack.c.l.s4 1983009808
          %v1474 = vunpack.c.0.s8 %v1473
          %v1475 = vperm.slane %v1471, %v1474
          %v1476 = vrot.slane %v1475, 4
          %v1477 = vsel %vm796, %v1476, %v1469
          %v1479 = vunpack.c.l.s4 1934713408
          %v1480 = vunpack.c.0.s8 %v1479
          %v1481 = vperm.slane %v1477, %v1480
          %v1482 = vrot.slane %v1481, 4
          %v1483 = vsel %vm796, 0, %v1482
          %v1484 = vsel %vm796, %v1463, %v1456
          %v1486 = vunpack.c.l.s4 1983009808
          %v1487 = vunpack.c.0.s8 %v1486
          %v1488 = vperm.slane %v1484, %v1487
          %v1489 = vrot.slane %v1464, 4
          %v1490 = vsel %vm796, %v1489, %v1462
          %v1492 = vunpack.c.l.s4 1983009808
          %v1493 = vunpack.c.0.s8 %v1492
          %v1494 = vperm.slane %v1490, %v1493
          %v1495 = vrot.slane %v1494, 4
          %v1496 = vsel %vm796, %v1495, %v1488
          %v1498 = vunpack.c.l.s4 1934713408
          %v1499 = vunpack.c.0.s8 %v1498
          %v1500 = vperm.slane %v1496, %v1499
          %v1501 = vrot.slane %v1500, 4
          %v1502 = vsel %vm796, 0, %v1501
          %v1505 = vpack.i.b16 %v1500, %v1481
          %v1506 = vshrl.u32 %v1481, 16
          %v1507 = vshrl.u32 %v1500, 16
          %v1508 = vpack.i.b16 %v1507, %v1506
          %v1511 = vpack.i.b16 %v1502, %v1483
          %v1512 = vshrl.u32 %v1483, 16
          %v1513 = vshrl.u32 %v1502, 16
          %v1514 = vpack.i.b16 %v1513, %v1512
          %v1515 = vunpack.c.l.b16 %v1508
          %v1516 = vpack.c.b16 %v1515, %v1515
          %1517 = vrot.lane.b32.xlu0 %v1516, 8
          %v1518 = vpop.permute.xlu0 %1517
          %v1519 = vunpack.c.l.b16 %v1511
          %v1520 = vpack.c.b16 %v1519, %v1519
          %1521 = vrot.lane.b32.xlu0 %v1520, 16
          %v1522 = vpop.permute.xlu0 %1521
          %v1523 = vunpack.c.l.b16 %v1514
          %v1524 = vpack.c.b16 %v1523, %v1523
          %1525 = vrot.lane.b32.xlu0 %v1524, 24
          %v1526 = vpop.permute.xlu0 %1525
          %v1529 = vsel %vm1067, %v1505, %v1518
          %vm1530 = vcmask 130048
          %v1532 = vsel %vm1530, %v1529, %v1522
          %vm1533 = vcmask 195584
          %v1535 = vsel %vm1533, %v1532, %v1526
          %v1536 = vld [vmem:[#allocation15] sm:$0xf]
          %v1537 = vld [vmem:[#allocation15 + $0x4] sm:$0xf]
          %v1538 = vld [vmem:[#allocation15 + $0x8] sm:$0xf]
          %v1539 = vld [vmem:[#allocation15 + $0xc] sm:$0xf]
          %v1540 = vld [vmem:[%s9] sm:$0x1]
          %v1542 = vperm.slane %v1540, 0
          %v1548 = vunpack.c.l.b16 %v1536
          %v1549 = vunpack.c.l.b16 %v1537
          %v1550 = vunpack.c.l.b16 %v1538
          %v1551 = vunpack.c.l.b16 %v1539
          %v1552 = vpack.c.b16 %v1549, %v1548
          %v1553 = vpack.c.b16 %v1551, %v1550
          %v1556 = vsel %vm728, %v1535, 0
          %1558 = vmatpush.bf16.msra.mxu0 0
          %1559 = vmatpush.bf16.msra.mxu0 0
          %1560 = vmatpush.bf16.msra.mxu0 0
          %1561 = vmatpush.bf16.msra.mxu0 0
          %1562 = vmatpush.bf16.msra.mxu0 0
          %1563 = vmatpush.bf16.msra.mxu0 0
          %1564 = vmatpush.bf16.msra.mxu0 %v1553
          %1565 = vmatpush.bf16.msra.mxu0 %v1552
          %1566 = vmatmul.bf16.gmra.mxu0 %v1556
          %v1567 = vpop.f32.mrf.mxu0
          %v1568 = vadd.f32 %v1542, %v1567
          %v1569 = vpop.f32.mrf.mxu0
          %1570 = vdwg.mxu0
          %1571 = vst.msk [vmem:[%s496] sm:$0xff] %vm728, %v1568
        $region92: #{tpu_custom_call.1} parent=59 // pred_fallthru
          _
        %s1572 = sand.u32 %s274, 1
        %s1573 = scalar_lea.sflag [#allocation8], %s1572
        %s1574 = sand.u32 %s274, 1
        %s1575 = smul.addr %s1574, 8
        %s1576 = scalar_lea.vmem [#allocation17], %s1575
        // Predicated region
        $region93: #{tpu_custom_call.1} parent=59 // pred_check
          %p1577 = pneg %p284
        $region94: #{tpu_custom_call.1} parent=59 // pred_check_branch
          %1579 = sbr.rel (%p1577) target = $region96
        $region95: #{tpu_custom_call.1} parent=59 // pred_region
          %1581 = vsyncadd %s1573, 0
          %s1582 = smul.addr %s36, 8
          %s1583 = scalar_lea.hbm %s10, %s1582
          %s1585 = sshll.u32 %s1576, 4
          %s1586 = int_to_ptr.vmem [resolvable:$true] %s1585
          %s1587 = sshll.u32 %s1583, 4
          %s1588 = int_to_ptr.hbm [resolvable:$true] %s1587
          %1590 = dma.vmem_to_hbm [thread:$0]  %s1586, 128, %s1588, %s1573
        $region96: #{tpu_custom_call.1} parent=59 // pred_fallthru
          _
      $region60: #{tpu_custom_call.1} parent=5 // pred_fallthru
        _
      %p1591 = scmp.le.s32.totalorder 2, %s27
      // Predicated region
      $region97: #{tpu_custom_call.1} parent=5 // pred_check
        %p1592 = pneg %p1591
      $region98: #{tpu_custom_call.1} parent=5 // pred_check_branch
        %1594 = sbr.rel (%p1592) target = $region100
      $region99: #{tpu_custom_call.1} parent=5 // pred_region
        %s1595 = ssub.s32 %s27, 2
        // Predicated region
        $region101: #{tpu_custom_call.1} parent=99 // pred_check
          %p1596 = pneg %p290
        $region102: #{tpu_custom_call.1} parent=99 // pred_check_branch
          %1598 = sbr.rel (%p1596) target = $region104
        $region103: #{tpu_custom_call.1} parent=99 // pred_region
          %s1599 = sand.u32 %s275, 1
          %s1600 = scalar_lea.sflag [#allocation8], %s1599
          %s1601 = sand.u32 %s275, 1
          %s1602 = smul.addr %s1601, 8
          %s1603 = scalar_lea.vmem [#allocation17], %s1602
          %1605 = dma.done %s1600, 128
        $region104: #{tpu_custom_call.1} parent=99 // pred_fallthru
          _
      $region100: #{tpu_custom_call.1} parent=5 // pred_fallthru
        _
    $region6: #{tpu_custom_call.1} parent=1 // loop_footer
      %s31 = sadd.s32 1, %s27
    $region7: #{tpu_custom_call.1} parent=1 // loop_footer_branch
      %26 = sbr.rel target = $region3
    $region8: #{tpu_custom_call.1} parent=1 // loop_exit
      _
    %1606 = vsyncpa [#allocation7], 1
    %s1607 = scalar_lea.sflag [#allocation7], 1
    %1608 = vsyncpa %s1607, 1
    %1609 = vsyncpa [#allocation10], 1
    %s1610 = scalar_lea.sflag [#allocation10], 1
    %1611 = vsyncpa %s1610, 1
    %1612 = vsyncpa [#allocation13], 1
    %1613 = vsyncpa [#allocation16], 1
    %1614 = vsyncpa [#allocation8], 1
    %s1615 = scalar_lea.sflag [#allocation8], 1
    %1616 = vsyncpa %s1615, 1

</llo_original>
